<compile_context>
chip_gen: v5e
topology: v5e:2x2
jax: 0.10.0
libtpu: 0.0.40
codegen_flags: <defaults>
</compile_context>

<pallas_src>
import functools

import jax
import jax.numpy as jnp
import numpy as np
from jax.experimental import pallas as pl
from jax.experimental.pallas import tpu as pltpu


# --------------------------------------------------------------------------
# Fused CBAM kernel (one grid step = one batch tile of Bt images)
# --------------------------------------------------------------------------
def _cbam_kernel(x_ref, w1t_ref, w2_ref, col_ref, dwpw_ref, o_ref, pad_ref,
                 *, K, H, W, c_chunk, pad_alloc):
    P = (K - 1) // 2
    PAD = P * W + P                      # max |flat shift| of any conv tap
    HW = H * W
    KK = K * K
    Bt, C, _ = x_ref.shape
    n_chunks = C // c_chunk

    def x_chunk(ci):
        if n_chunks == 1:
            return x_ref[...].astype(jnp.float32)
        return x_ref[:, ci * c_chunk:(ci + 1) * c_chunk, :].astype(jnp.float32)

    # ---------------- channel attention (pools read chunk-wise) --------------
    avg_parts, max_parts = [], []
    for ci in range(n_chunks):
        xc = x_chunk(ci)                                       # (Bt, cc, HW) f32
        avg_parts.append(jnp.mean(xc, axis=2, keepdims=True))  # (Bt, cc, 1)
        max_parts.append(jnp.max(xc, axis=2, keepdims=True))
    avg_p = avg_parts[0] if n_chunks == 1 else jnp.concatenate(avg_parts, axis=1)
    max_p = max_parts[0] if n_chunks == 1 else jnp.concatenate(max_parts, axis=1)

    w1t = w1t_ref[...]                                         # (C, Cr) = conv1.weight.T
    w2m = w2_ref[...]                                          # (C, Cr) = conv2.weight

    # TODO(synk): for production channel counts (C >= 256) move this shared MLP
    # onto the MXU (stack avg/max as a (2*Bt, C) matrix and use jnp.dot); kept
    # as a VPU broadcast-reduce here because it keeps channels in the sublane
    # layout used everywhere else and is noise at small C.
    def shared_mlp(p):                                         # (Bt, C, 1) -> (Bt, C, 1)
        h = jnp.sum(p * w1t[None, :, :], axis=1, keepdims=True)     # (Bt, 1, Cr)
        h = jnp.maximum(h, 0.0)                                      # ReLU
        return jnp.sum(h * w2m[None, :, :], axis=2, keepdims=True)   # (Bt, C, 1)

    ch_att = jax.nn.sigmoid(shared_mlp(avg_p) + shared_mlp(max_p))   # (Bt, C, 1)

    def att_chunk(ci):
        if n_chunks == 1:
            return ch_att
        return ch_att[:, ci * c_chunk:(ci + 1) * c_chunk, :]

    # ------- cross-channel avg/max maps of the channel-scaled x (chunked) -----
    sum_map = jnp.zeros((Bt, 1, HW), jnp.float32)
    max_map = jnp.full((Bt, 1, HW), -jnp.inf, jnp.float32)
    for ci in range(n_chunks):
        xca = x_chunk(ci) * att_chunk(ci)                      # (Bt, cc, HW), never full C
        sum_map = sum_map + jnp.sum(xca, axis=1, keepdims=True)
        max_map = jnp.maximum(max_map, jnp.max(xca, axis=1, keepdims=True))
    avg_map = sum_map * (1.0 / C)

    # ------------- write pooled maps into the flat zero-haloed scratch --------
    # Halos are re-zeroed every step: with dimension_semantics=("parallel",)
    # each TensorCore owns a private scratch and may never see program_id==0,
    # so first-step-only zeroing would be unsafe.  Two PAD-wide stores ~ free.
    pad_ref[:, :, pad_alloc - PAD:pad_alloc] = jnp.zeros((Bt, 2, PAD), jnp.float32)
    pad_ref[:, :, pad_alloc + HW:pad_alloc + HW + PAD] = jnp.zeros((Bt, 2, PAD), jnp.float32)

    # avg map in sublane 0, max map in sublane 1; interior store is 128-aligned.
    pad_ref[:, :, pad_alloc:pad_alloc + HW] = jnp.concatenate([avg_map, max_map], axis=1)

    # ---- 7x7 depthwise + 1x1 pointwise conv (flat, masked, fused weights) -----
    col = col_ref[...]                                         # (1, HW) int32, x coordinate
    chan = jax.lax.broadcasted_iota(jnp.int32, (1, 2, 1), 1).astype(jnp.float32)

    acc = jnp.zeros((Bt, 2, HW), jnp.float32)
    for kx in range(K):                                        # kx outer: mask hoisted
        dx = kx - P
        inner = jnp.zeros((Bt, 2, HW), jnp.float32)
        for ky in range(K):
            dy = ky - P
            start = pad_alloc + dy * W + dx                    # static lane offset
            w_a = dwpw_ref[ky * K + kx]                        # fused pw*dw tap (avg chan)
            w_m = dwpw_ref[KK + ky * K + kx]                   # fused pw*dw tap (max chan)
            w = w_a + (w_m - w_a) * chan                       # (1, 2, 1) per-sublane weight
            inner = inner + w * pad_ref[:, :, start:start + HW]    # ONE lane slice / tap
        xmask = (col + dx >= 0) & (col + dx < W)               # one select per column offset
        acc = acc + jnp.where(xmask, inner, 0.0)

    sp_att = jax.nn.sigmoid(jnp.sum(acc, axis=1, keepdims=True))   # (Bt, 1, HW)

    # ---------------- final application: chunk-wise dense stores --------------
    for ci in range(n_chunks):
        res = (x_chunk(ci) * att_chunk(ci) * sp_att).astype(o_ref.dtype)
        if n_chunks == 1:
            o_ref[...] = res
        else:
            o_ref[:, ci * c_chunk:(ci + 1) * c_chunk, :] = res


# --------------------------------------------------------------------------
# Wrapper
# --------------------------------------------------------------------------
def _pick_c_chunk(C, HW):
    """Largest channel chunk whose f32 footprint stays ~<=1 MiB per batch row."""
    target = max(1, min(C, (1 << 20) // max(1, HW * 4)))
    if target >= C:
        return C
    best = 1
    for cand in range(target, 0, -1):
        if C % cand == 0:
            if cand % 8 == 0:           # prefer sublane-aligned chunks
                return cand
            best = max(best, cand)
    return best


def cbam_pallas(x, w1, w2, dw, pw, *, spatial_kernel_size=7):
    """x: (B, C, H, W); w1: (Cr, C); w2: (C, Cr); dw: (2,1,K,K); pw: (1,2,1,1).

    I/O dtype follows x (f32 or bf16); internal math is always f32.
    """
    B, C, H, W = x.shape
    K = spatial_kernel_size
    P = (K - 1) // 2
    Cr = w1.shape[0]
    HW = H * W
    PAD = P * W + P
    pad_alloc = ((PAD + 127) // 128) * 128      # 128-aligned interior lane offset
    L = pad_alloc + HW + PAD

    io_dtype = x.dtype
    io_bytes = jnp.dtype(io_dtype).itemsize

    # Lane-dense flattened views / pre-fused parameters (free XLA reshapes).
    x2 = x.reshape(B, C, HW)
    w1t = jnp.transpose(w1).astype(jnp.float32)                 # (C, Cr)
    w2m = w2.astype(jnp.float32)                                # (C, Cr)
    dwpw = (pw.reshape(2).astype(jnp.float32)[:, None, None]
            * dw.reshape(2, K, K).astype(jnp.float32)).reshape(-1)   # (2*K*K,)
    col = (jnp.arange(HW, dtype=jnp.int32) % W).reshape(1, HW)

    c_chunk = _pick_c_chunk(C, HW)

    # ---- VMEM-driven batch-tile sizing ----
    try:
        vmem_cap = int(pltpu.get_tpu_info().vmem_capacity_bytes)
    except Exception:
        vmem_cap = 0
    if vmem_cap <= 0:
        vmem_cap = 64 << 20                                     # conservative (v7x) fallback
    vmem_limit = max(32 << 20, min(int(vmem_cap * 0.8), 120 << 20))
    budget = int(vmem_limit * 0.55)                             # headroom for compiler temps

    per_batch = (4 * C * HW * io_bytes                          # in+out blocks, double-buffered
                 + 8 * L * 4                                    # halo scratch (sublane-padded)
                 + (3 * c_chunk + 48) * HW * 4)                 # chunk + conv temporaries (f32)
    bt = max(1, min(B, budget // max(1, per_batch)))
    if B > 1:
        bt = min(bt, (B + 1) // 2)      # >= 2 grid steps so v7x uses both TensorCores
    while B % bt:
        bt -= 1

    # TODO(synk): for very large C*HW (e.g. C=1024, HW=3136) add a second grid
    # axis over HW with PAD-wide halo overlap so one batch block never has to
    # fit whole in VMEM (matters on v7x's 64 MiB).
    cost = pl.CostEstimate(
        flops=int(B * (6 * C * HW + 4 * K * K * HW)),
        transcendentals=int(B * (HW + 2 * C)),
        bytes_accessed=int(2 * B * C * HW * io_bytes))

    out2 = pl.pallas_call(
        functools.partial(_cbam_kernel, K=K, H=H, W=W,
                          c_chunk=c_chunk, pad_alloc=pad_alloc),
        out_shape=jax.ShapeDtypeStruct((B, C, HW), io_dtype),
        grid=(B // bt,),
        in_specs=[
            # TODO(synk): sweep pipeline_mode=pl.Buffered(3) on this input once
            # production tile sizes are in place (verify with xprof).
            pl.BlockSpec((bt, C, HW), lambda b: (b, 0, 0)),
            pl.BlockSpec((C, Cr), lambda b: (0, 0)),
            pl.BlockSpec((C, Cr), lambda b: (0, 0)),
            pl.BlockSpec((1, HW), lambda b: (0, 0)),
            pl.BlockSpec(memory_space=pltpu.MemorySpace.SMEM),
        ],
        out_specs=pl.BlockSpec((bt, C, HW), lambda b: (b, 0, 0)),
        scratch_shapes=[pltpu.VMEM((bt, 2, L), jnp.float32)],
        compiler_params=pltpu.CompilerParams(
            dimension_semantics=("parallel",),
            vmem_limit_bytes=vmem_limit),
        cost_estimate=cost,
    )(x2, w1t, w2m, col, dwpw)
    return out2.reshape(B, C, H, W)


# --------------------------------------------------------------------------
# Pure-JAX reference (mirrors the PyTorch forward exactly)
# --------------------------------------------------------------------------
def cbam_ref(x, w1, w2, dw, pw):
    x = x.astype(jnp.float32)
    avg_p = jnp.mean(x, axis=(2, 3), keepdims=True)
    max_p = jnp.max(x, axis=(2, 3), keepdims=True)

    def mlp(p):
        h = jnp.einsum('rc,bcij->brij', w1, p)
        h = jnp.maximum(h, 0.0)
        return jnp.einsum('cr,brij->bcij', w2, h)

    ch_att = jax.nn.sigmoid(mlp(avg_p) + mlp(max_p))
    x_ca = x * ch_att
    avg_s = jnp.mean(x_ca, axis=1, keepdims=True)
    max_s = jnp.max(x_ca, axis=1, keepdims=True)
    maps = jnp.concatenate([avg_s, max_s], axis=1)
    dw_out = jax.lax.conv_general_dilated(
        maps, dw, window_strides=(1, 1), padding='SAME',
        dimension_numbers=('NCHW', 'OIHW', 'NCHW'), feature_group_count=2)
    pw_out = jax.lax.conv_general_dilated(
        dw_out, pw, window_strides=(1, 1), padding='VALID',
        dimension_numbers=('NCHW', 'OIHW', 'NCHW'))
    sp_att = jax.nn.sigmoid(pw_out)
    return x_ca * sp_att


if __name__ == "__main__":
    key = jax.random.PRNGKey(0)
    k1, k2, k3, k4, k5 = jax.random.split(key, 5)

    B, C, H, W = 2, 4, 16, 16
    reduction_ratio = 16
    Cr = max(1, C // reduction_ratio)
    K = 7

    x = jax.random.normal(k1, (B, C, H, W), dtype=jnp.float32)
    # Deterministic synthetic parameters (shapes per the module's __init__)
    w1 = jax.random.normal(k2, (Cr, C), dtype=jnp.float32) * 0.5       # Conv2d(C, Cr, 1, bias=False)
    w2 = jax.random.normal(k3, (C, Cr), dtype=jnp.float32) * 0.5       # Conv2d(Cr, C, 1, bias=False)
    dw = jax.random.normal(k4, (2, 1, K, K), dtype=jnp.float32) * 0.2  # depthwise 7x7, groups=2
    pw = jax.random.normal(k5, (1, 2, 1, 1), dtype=jnp.float32) * 0.5  # pointwise 1x1, 2->1

    out = cbam_pallas(x, w1, w2, dw, pw, spatial_kernel_size=K)
    out = jax.block_until_ready(out)

    ref = cbam_ref(x, w1, w2, dw, pw)
    if not np.allclose(np.asarray(out), np.asarray(ref), atol=1e-5, rtol=1e-4):
        raise AssertionError("Pallas CBAM output mismatch vs JAX reference")
    print("KERNEL_OK")
</pallas_src>

<mosaic_0001>
module attributes {stable_mosaic.version = 11 : i64} {
  func.func @_cbam_kernel(%arg0: i32, %arg1: memref<1x4x256xf32, #tpu.memory_space<vmem>>, %arg2: memref<4x1xf32, #tpu.memory_space<vmem>>, %arg3: memref<4x1xf32, #tpu.memory_space<vmem>>, %arg4: memref<1x256xi32, #tpu.memory_space<vmem>>, %arg5: memref<98xf32, #tpu.memory_space<smem>>, %arg6: memref<1x4x256xf32, #tpu.memory_space<vmem>>, %arg7: memref<1x2x435xf32, #tpu.memory_space<vmem>>) attributes {dimension_semantics = [#tpu.dimension_semantics<parallel>], iteration_bounds = array<i64: 2>, scalar_prefetch = 0 : i64, scratch_operands = 1 : i64, tpu.core_type = #tpu.core_type<tc>, window_params = [{transform_indices = @transform_0, window_bounds = array<i64: 1, 4, 256>}, {pipeline_mode = #tpu.pipeline_mode<synchronous>, transform_indices = @transform_1, window_bounds = array<i64: 4, 1>}, {pipeline_mode = #tpu.pipeline_mode<synchronous>, transform_indices = @transform_2, window_bounds = array<i64: 4, 1>}, {pipeline_mode = #tpu.pipeline_mode<synchronous>, transform_indices = @transform_3, window_bounds = array<i64: 1, 256>}, {transform_indices = @transform_4, window_bounds = array<i64: 98>}, {transform_indices = @transform_5, window_bounds = array<i64: 1, 4, 256>}]} {
    %c0 = arith.constant 0 : index
    %c0_0 = arith.constant 0 : index
    %c0_1 = arith.constant 0 : index
    %0 = vector.load %arg1[%c0, %c0_0, %c0_1] : memref<1x4x256xf32, #tpu.memory_space<vmem>>, vector<1x4x256xf32>
    %cst = arith.constant dense<0.000000e+00> : vector<1x4xf32>
    %1 = vector.multi_reduction <add>, %0, %cst [2] : vector<1x4x256xf32> to vector<1x4xf32>
    %2 = vector.shape_cast %1 : vector<1x4xf32> to vector<1x4x1xf32>
    %cst_2 = arith.constant 2.560000e+02 : f32
    %3 = vector.broadcast %cst_2 : f32 to vector<1x4x1xf32>
    %4 = arith.divf %2, %3 : vector<1x4x1xf32>
    %cst_3 = arith.constant dense<0xFF800000> : vector<1x4xf32>
    %5 = vector.multi_reduction <maximumf>, %0, %cst_3 [2] : vector<1x4x256xf32> to vector<1x4xf32>
    %6 = vector.shape_cast %5 : vector<1x4xf32> to vector<1x4x1xf32>
    %c0_4 = arith.constant 0 : index
    %c0_5 = arith.constant 0 : index
    %7 = vector.load %arg2[%c0_4, %c0_5] : memref<4x1xf32, #tpu.memory_space<vmem>>, vector<4x1xf32>
    %c0_6 = arith.constant 0 : index
    %c0_7 = arith.constant 0 : index
    %8 = vector.load %arg3[%c0_6, %c0_7] : memref<4x1xf32, #tpu.memory_space<vmem>>, vector<4x1xf32>
    %9 = vector.shape_cast %7 : vector<4x1xf32> to vector<1x4x1xf32>
    %10 = arith.mulf %4, %9 : vector<1x4x1xf32>
    %cst_8 = arith.constant dense<0.000000e+00> : vector<1x1xf32>
    %11 = vector.multi_reduction <add>, %10, %cst_8 [1] : vector<1x4x1xf32> to vector<1x1xf32>
    %12 = vector.shape_cast %11 : vector<1x1xf32> to vector<1x1x1xf32>
    %cst_9 = arith.constant 0.000000e+00 : f32
    %13 = vector.broadcast %cst_9 : f32 to vector<1x1x1xf32>
    %14 = arith.maximumf %12, %13 : vector<1x1x1xf32>
    %15 = vector.shape_cast %8 : vector<4x1xf32> to vector<1x4x1xf32>
    %16 = vector.broadcast %14 : vector<1x1x1xf32> to vector<1x4x1xf32>
    %17 = arith.mulf %16, %15 : vector<1x4x1xf32>
    %cst_10 = arith.constant dense<0.000000e+00> : vector<1x4xf32>
    %18 = vector.multi_reduction <add>, %17, %cst_10 [2] : vector<1x4x1xf32> to vector<1x4xf32>
    %19 = vector.shape_cast %18 : vector<1x4xf32> to vector<1x4x1xf32>
    %20 = vector.shape_cast %7 : vector<4x1xf32> to vector<1x4x1xf32>
    %21 = arith.mulf %6, %20 : vector<1x4x1xf32>
    %cst_11 = arith.constant dense<0.000000e+00> : vector<1x1xf32>
    %22 = vector.multi_reduction <add>, %21, %cst_11 [1] : vector<1x4x1xf32> to vector<1x1xf32>
    %23 = vector.shape_cast %22 : vector<1x1xf32> to vector<1x1x1xf32>
    %cst_12 = arith.constant 0.000000e+00 : f32
    %24 = vector.broadcast %cst_12 : f32 to vector<1x1x1xf32>
    %25 = arith.maximumf %23, %24 : vector<1x1x1xf32>
    %26 = vector.shape_cast %8 : vector<4x1xf32> to vector<1x4x1xf32>
    %27 = vector.broadcast %25 : vector<1x1x1xf32> to vector<1x4x1xf32>
    %28 = arith.mulf %27, %26 : vector<1x4x1xf32>
    %cst_13 = arith.constant dense<0.000000e+00> : vector<1x4xf32>
    %29 = vector.multi_reduction <add>, %28, %cst_13 [2] : vector<1x4x1xf32> to vector<1x4xf32>
    %30 = vector.shape_cast %29 : vector<1x4xf32> to vector<1x4x1xf32>
    %31 = arith.addf %19, %30 : vector<1x4x1xf32>
    %32 = arith.negf %31 : vector<1x4x1xf32>
    %33 = math.exp %32 : vector<1x4x1xf32>
    %cst_14 = arith.constant 1.000000e+00 : f32
    %34 = vector.broadcast %cst_14 : f32 to vector<1x4x1xf32>
    %35 = arith.addf %34, %33 : vector<1x4x1xf32>
    %36 = arith.divf %34, %35 : vector<1x4x1xf32>
    %cst_15 = arith.constant 0.000000e+00 : f32
    %37 = vector.broadcast %cst_15 : f32 to vector<1x1x256xf32>
    %cst_16 = arith.constant 0xFF800000 : f32
    %38 = vector.broadcast %cst_16 : f32 to vector<1x1x256xf32>
    %c0_17 = arith.constant 0 : index
    %c0_18 = arith.constant 0 : index
    %c0_19 = arith.constant 0 : index
    %39 = vector.load %arg1[%c0_17, %c0_18, %c0_19] : memref<1x4x256xf32, #tpu.memory_space<vmem>>, vector<1x4x256xf32>
    %40 = vector.broadcast %36 : vector<1x4x1xf32> to vector<1x4x256xf32>
    %41 = arith.mulf %39, %40 : vector<1x4x256xf32>
    %cst_20 = arith.constant dense<0.000000e+00> : vector<1x256xf32>
    %42 = vector.multi_reduction <add>, %41, %cst_20 [1] : vector<1x4x256xf32> to vector<1x256xf32>
    %43 = vector.shape_cast %42 : vector<1x256xf32> to vector<1x1x256xf32>
    %44 = arith.addf %37, %43 : vector<1x1x256xf32>
    %cst_21 = arith.constant dense<0xFF800000> : vector<1x256xf32>
    %45 = vector.multi_reduction <maximumf>, %41, %cst_21 [1] : vector<1x4x256xf32> to vector<1x256xf32>
    %46 = vector.shape_cast %45 : vector<1x256xf32> to vector<1x1x256xf32>
    %47 = arith.maximumf %38, %46 : vector<1x1x256xf32>
    %cst_22 = arith.constant 2.500000e-01 : f32
    %48 = vector.broadcast %cst_22 : f32 to vector<1x1x256xf32>
    %49 = arith.mulf %44, %48 : vector<1x1x256xf32>
    %cst_23 = arith.constant 0.000000e+00 : f32
    %50 = vector.broadcast %cst_23 : f32 to vector<1x2x51xf32>
    %c0_24 = arith.constant 0 : index
    %c0_25 = arith.constant 0 : index
    %c77 = arith.constant 77 : index
    %51 = vector.load %arg7[%c0_24, %c0_25, %c77] : memref<1x2x435xf32, #tpu.memory_space<vmem>>, vector<1x2x51xf32>
    tpu.vector_store %arg7[%c0_24, %c0_25, %c77], %50 {strides = array<i32>} : memref<1x2x435xf32, #tpu.memory_space<vmem>>, vector<1x2x51xf32>,
    %cst_26 = arith.constant 0.000000e+00 : f32
    %52 = vector.broadcast %cst_26 : f32 to vector<1x2x51xf32>
    %c0_27 = arith.constant 0 : index
    %c0_28 = arith.constant 0 : index
    %c384 = arith.constant 384 : index
    %53 = vector.load %arg7[%c0_27, %c0_28, %c384] : memref<1x2x435xf32, #tpu.memory_space<vmem>>, vector<1x2x51xf32>
    tpu.vector_store %arg7[%c0_27, %c0_28, %c384], %52 {strides = array<i32>} : memref<1x2x435xf32, #tpu.memory_space<vmem>>, vector<1x2x51xf32>,
    %54 = tpu.concatenate %49, %47 in 1 : vector<1x1x256xf32>, vector<1x1x256xf32> -> vector<1x2x256xf32>
    %c0_29 = arith.constant 0 : index
    %c0_30 = arith.constant 0 : index
    %c128 = arith.constant 128 : index
    %55 = vector.load %arg7[%c0_29, %c0_30, %c128] : memref<1x2x435xf32, #tpu.memory_space<vmem>>, vector<1x2x256xf32>
    tpu.vector_store %arg7[%c0_29, %c0_30, %c128], %54 {strides = array<i32>} : memref<1x2x435xf32, #tpu.memory_space<vmem>>, vector<1x2x256xf32>,
    %c0_31 = arith.constant 0 : index
    %c0_32 = arith.constant 0 : index
    %56 = vector.load %arg4[%c0_31, %c0_32] : memref<1x256xi32, #tpu.memory_space<vmem>>, vector<1x256xi32>
    %57 = tpu.iota {dimensions = array<i32: 1>} : vector<1x2x1xi32>
    %58 = arith.sitofp %57 : vector<1x2x1xi32> to vector<1x2x1xf32>
    %cst_33 = arith.constant 0.000000e+00 : f32
    %59 = vector.broadcast %cst_33 : f32 to vector<1x2x256xf32>
    %cst_34 = arith.constant 0.000000e+00 : f32
    %60 = vector.broadcast %cst_34 : f32 to vector<1x2x256xf32>
    %c0_35 = arith.constant 0 : index
    %61 = memref.load %arg5[%c0_35] : memref<98xf32, #tpu.memory_space<smem>>
    %c49 = arith.constant 49 : index
    %62 = memref.load %arg5[%c49] : memref<98xf32, #tpu.memory_space<smem>>
    %63 = arith.subf %62, %61 : f32
    %64 = vector.broadcast %63 : f32 to vector<1x2x1xf32>
    %65 = arith.mulf %64, %58 : vector<1x2x1xf32>
    %66 = vector.broadcast %61 : f32 to vector<1x2x1xf32>
    %67 = arith.addf %66, %65 : vector<1x2x1xf32>
    %c0_36 = arith.constant 0 : index
    %c0_37 = arith.constant 0 : index
    %c77_38 = arith.constant 77 : index
    %68 = vector.load %arg7[%c0_36, %c0_37, %c77_38] : memref<1x2x435xf32, #tpu.memory_space<vmem>>, vector<1x2x256xf32>
    %69 = vector.broadcast %67 : vector<1x2x1xf32> to vector<1x2x256xf32>
    %70 = arith.mulf %69, %68 : vector<1x2x256xf32>
    %71 = arith.addf %60, %70 : vector<1x2x256xf32>
    %c7 = arith.constant 7 : index
    %72 = memref.load %arg5[%c7] : memref<98xf32, #tpu.memory_space<smem>>
    %c56 = arith.constant 56 : index
    %73 = memref.load %arg5[%c56] : memref<98xf32, #tpu.memory_space<smem>>
    %74 = arith.subf %73, %72 : f32
    %75 = vector.broadcast %74 : f32 to vector<1x2x1xf32>
    %76 = arith.mulf %75, %58 : vector<1x2x1xf32>
    %77 = vector.broadcast %72 : f32 to vector<1x2x1xf32>
    %78 = arith.addf %77, %76 : vector<1x2x1xf32>
    %c0_39 = arith.constant 0 : index
    %c0_40 = arith.constant 0 : index
    %c93 = arith.constant 93 : index
    %79 = vector.load %arg7[%c0_39, %c0_40, %c93] : memref<1x2x435xf32, #tpu.memory_space<vmem>>, vector<1x2x256xf32>
    %80 = vector.broadcast %78 : vector<1x2x1xf32> to vector<1x2x256xf32>
    %81 = arith.mulf %80, %79 : vector<1x2x256xf32>
    %82 = arith.addf %71, %81 : vector<1x2x256xf32>
    %c14 = arith.constant 14 : index
    %83 = memref.load %arg5[%c14] : memref<98xf32, #tpu.memory_space<smem>>
    %c63 = arith.constant 63 : index
    %84 = memref.load %arg5[%c63] : memref<98xf32, #tpu.memory_space<smem>>
    %85 = arith.subf %84, %83 : f32
    %86 = vector.broadcast %85 : f32 to vector<1x2x1xf32>
    %87 = arith.mulf %86, %58 : vector<1x2x1xf32>
    %88 = vector.broadcast %83 : f32 to vector<1x2x1xf32>
    %89 = arith.addf %88, %87 : vector<1x2x1xf32>
    %c0_41 = arith.constant 0 : index
    %c0_42 = arith.constant 0 : index
    %c109 = arith.constant 109 : index
    %90 = vector.load %arg7[%c0_41, %c0_42, %c109] : memref<1x2x435xf32, #tpu.memory_space<vmem>>, vector<1x2x256xf32>
    %91 = vector.broadcast %89 : vector<1x2x1xf32> to vector<1x2x256xf32>
    %92 = arith.mulf %91, %90 : vector<1x2x256xf32>
    %93 = arith.addf %82, %92 : vector<1x2x256xf32>
    %c21 = arith.constant 21 : index
    %94 = memref.load %arg5[%c21] : memref<98xf32, #tpu.memory_space<smem>>
    %c70 = arith.constant 70 : index
    %95 = memref.load %arg5[%c70] : memref<98xf32, #tpu.memory_space<smem>>
    %96 = arith.subf %95, %94 : f32
    %97 = vector.broadcast %96 : f32 to vector<1x2x1xf32>
    %98 = arith.mulf %97, %58 : vector<1x2x1xf32>
    %99 = vector.broadcast %94 : f32 to vector<1x2x1xf32>
    %100 = arith.addf %99, %98 : vector<1x2x1xf32>
    %c0_43 = arith.constant 0 : index
    %c0_44 = arith.constant 0 : index
    %c125 = arith.constant 125 : index
    %101 = vector.load %arg7[%c0_43, %c0_44, %c125] : memref<1x2x435xf32, #tpu.memory_space<vmem>>, vector<1x2x256xf32>
    %102 = vector.broadcast %100 : vector<1x2x1xf32> to vector<1x2x256xf32>
    %103 = arith.mulf %102, %101 : vector<1x2x256xf32>
    %104 = arith.addf %93, %103 : vector<1x2x256xf32>
    %c28 = arith.constant 28 : index
    %105 = memref.load %arg5[%c28] : memref<98xf32, #tpu.memory_space<smem>>
    %c77_45 = arith.constant 77 : index
    %106 = memref.load %arg5[%c77_45] : memref<98xf32, #tpu.memory_space<smem>>
    %107 = arith.subf %106, %105 : f32
    %108 = vector.broadcast %107 : f32 to vector<1x2x1xf32>
    %109 = arith.mulf %108, %58 : vector<1x2x1xf32>
    %110 = vector.broadcast %105 : f32 to vector<1x2x1xf32>
    %111 = arith.addf %110, %109 : vector<1x2x1xf32>
    %c0_46 = arith.constant 0 : index
    %c0_47 = arith.constant 0 : index
    %c141 = arith.constant 141 : index
    %112 = vector.load %arg7[%c0_46, %c0_47, %c141] : memref<1x2x435xf32, #tpu.memory_space<vmem>>, vector<1x2x256xf32>
    %113 = vector.broadcast %111 : vector<1x2x1xf32> to vector<1x2x256xf32>
    %114 = arith.mulf %113, %112 : vector<1x2x256xf32>
    %115 = arith.addf %104, %114 : vector<1x2x256xf32>
    %c35 = arith.constant 35 : index
    %116 = memref.load %arg5[%c35] : memref<98xf32, #tpu.memory_space<smem>>
    %c84 = arith.constant 84 : index
    %117 = memref.load %arg5[%c84] : memref<98xf32, #tpu.memory_space<smem>>
    %118 = arith.subf %117, %116 : f32
    %119 = vector.broadcast %118 : f32 to vector<1x2x1xf32>
    %120 = arith.mulf %119, %58 : vector<1x2x1xf32>
    %121 = vector.broadcast %116 : f32 to vector<1x2x1xf32>
    %122 = arith.addf %121, %120 : vector<1x2x1xf32>
    %c0_48 = arith.constant 0 : index
    %c0_49 = arith.constant 0 : index
    %c157 = arith.constant 157 : index
    %123 = vector.load %arg7[%c0_48, %c0_49, %c157] : memref<1x2x435xf32, #tpu.memory_space<vmem>>, vector<1x2x256xf32>
    %124 = vector.broadcast %122 : vector<1x2x1xf32> to vector<1x2x256xf32>
    %125 = arith.mulf %124, %123 : vector<1x2x256xf32>
    %126 = arith.addf %115, %125 : vector<1x2x256xf32>
    %c42 = arith.constant 42 : index
    %127 = memref.load %arg5[%c42] : memref<98xf32, #tpu.memory_space<smem>>
    %c91 = arith.constant 91 : index
    %128 = memref.load %arg5[%c91] : memref<98xf32, #tpu.memory_space<smem>>
    %129 = arith.subf %128, %127 : f32
    %130 = vector.broadcast %129 : f32 to vector<1x2x1xf32>
    %131 = arith.mulf %130, %58 : vector<1x2x1xf32>
    %132 = vector.broadcast %127 : f32 to vector<1x2x1xf32>
    %133 = arith.addf %132, %131 : vector<1x2x1xf32>
    %c0_50 = arith.constant 0 : index
    %c0_51 = arith.constant 0 : index
    %c173 = arith.constant 173 : index
    %134 = vector.load %arg7[%c0_50, %c0_51, %c173] : memref<1x2x435xf32, #tpu.memory_space<vmem>>, vector<1x2x256xf32>
    %135 = vector.broadcast %133 : vector<1x2x1xf32> to vector<1x2x256xf32>
    %136 = arith.mulf %135, %134 : vector<1x2x256xf32>
    %137 = arith.addf %126, %136 : vector<1x2x256xf32>
    %c-3_i32 = arith.constant -3 : i32
    %138 = vector.broadcast %c-3_i32 : i32 to vector<1x256xi32>
    %139 = arith.addi %56, %138 : vector<1x256xi32>
    %c0_i32 = arith.constant 0 : i32
    %140 = vector.broadcast %c0_i32 : i32 to vector<1x256xi32>
    %141 = arith.cmpi sge, %139, %140 : vector<1x256xi32>
    %c-3_i32_52 = arith.constant -3 : i32
    %142 = vector.broadcast %c-3_i32_52 : i32 to vector<1x256xi32>
    %143 = arith.addi %56, %142 : vector<1x256xi32>
    %c16_i32 = arith.constant 16 : i32
    %144 = vector.broadcast %c16_i32 : i32 to vector<1x256xi32>
    %145 = arith.cmpi slt, %143, %144 : vector<1x256xi32>
    %146 = arith.andi %141, %145 : vector<1x256xi1>
    %cst_53 = arith.constant 0.000000e+00 : f32
    %147 = vector.shape_cast %146 : vector<1x256xi1> to vector<1x1x256xi1>
    %148 = vector.broadcast %147 : vector<1x1x256xi1> to vector<1x2x256xi1>
    %149 = vector.broadcast %cst_53 : f32 to vector<1x2x256xf32>
    %150 = arith.select %148, %137, %149 : vector<1x2x256xi1>, vector<1x2x256xf32>
    %151 = arith.addf %59, %150 : vector<1x2x256xf32>
    %cst_54 = arith.constant 0.000000e+00 : f32
    %152 = vector.broadcast %cst_54 : f32 to vector<1x2x256xf32>
    %c1 = arith.constant 1 : index
    %153 = memref.load %arg5[%c1] : memref<98xf32, #tpu.memory_space<smem>>
    %c50 = arith.constant 50 : index
    %154 = memref.load %arg5[%c50] : memref<98xf32, #tpu.memory_space<smem>>
    %155 = arith.subf %154, %153 : f32
    %156 = vector.broadcast %155 : f32 to vector<1x2x1xf32>
    %157 = arith.mulf %156, %58 : vector<1x2x1xf32>
    %158 = vector.broadcast %153 : f32 to vector<1x2x1xf32>
    %159 = arith.addf %158, %157 : vector<1x2x1xf32>
    %c0_55 = arith.constant 0 : index
    %c0_56 = arith.constant 0 : index
    %c78 = arith.constant 78 : index
    %160 = vector.load %arg7[%c0_55, %c0_56, %c78] : memref<1x2x435xf32, #tpu.memory_space<vmem>>, vector<1x2x256xf32>
    %161 = vector.broadcast %159 : vector<1x2x1xf32> to vector<1x2x256xf32>
    %162 = arith.mulf %161, %160 : vector<1x2x256xf32>
    %163 = arith.addf %152, %162 : vector<1x2x256xf32>
    %c8 = arith.constant 8 : index
    %164 = memref.load %arg5[%c8] : memref<98xf32, #tpu.memory_space<smem>>
    %c57 = arith.constant 57 : index
    %165 = memref.load %arg5[%c57] : memref<98xf32, #tpu.memory_space<smem>>
    %166 = arith.subf %165, %164 : f32
    %167 = vector.broadcast %166 : f32 to vector<1x2x1xf32>
    %168 = arith.mulf %167, %58 : vector<1x2x1xf32>
    %169 = vector.broadcast %164 : f32 to vector<1x2x1xf32>
    %170 = arith.addf %169, %168 : vector<1x2x1xf32>
    %c0_57 = arith.constant 0 : index
    %c0_58 = arith.constant 0 : index
    %c94 = arith.constant 94 : index
    %171 = vector.load %arg7[%c0_57, %c0_58, %c94] : memref<1x2x435xf32, #tpu.memory_space<vmem>>, vector<1x2x256xf32>
    %172 = vector.broadcast %170 : vector<1x2x1xf32> to vector<1x2x256xf32>
    %173 = arith.mulf %172, %171 : vector<1x2x256xf32>
    %174 = arith.addf %163, %173 : vector<1x2x256xf32>
    %c15 = arith.constant 15 : index
    %175 = memref.load %arg5[%c15] : memref<98xf32, #tpu.memory_space<smem>>
    %c64 = arith.constant 64 : index
    %176 = memref.load %arg5[%c64] : memref<98xf32, #tpu.memory_space<smem>>
    %177 = arith.subf %176, %175 : f32
    %178 = vector.broadcast %177 : f32 to vector<1x2x1xf32>
    %179 = arith.mulf %178, %58 : vector<1x2x1xf32>
    %180 = vector.broadcast %175 : f32 to vector<1x2x1xf32>
    %181 = arith.addf %180, %179 : vector<1x2x1xf32>
    %c0_59 = arith.constant 0 : index
    %c0_60 = arith.constant 0 : index
    %c110 = arith.constant 110 : index
    %182 = vector.load %arg7[%c0_59, %c0_60, %c110] : memref<1x2x435xf32, #tpu.memory_space<vmem>>, vector<1x2x256xf32>
    %183 = vector.broadcast %181 : vector<1x2x1xf32> to vector<1x2x256xf32>
    %184 = arith.mulf %183, %182 : vector<1x2x256xf32>
    %185 = arith.addf %174, %184 : vector<1x2x256xf32>
    %c22 = arith.constant 22 : index
    %186 = memref.load %arg5[%c22] : memref<98xf32, #tpu.memory_space<smem>>
    %c71 = arith.constant 71 : index
    %187 = memref.load %arg5[%c71] : memref<98xf32, #tpu.memory_space<smem>>
    %188 = arith.subf %187, %186 : f32
    %189 = vector.broadcast %188 : f32 to vector<1x2x1xf32>
    %190 = arith.mulf %189, %58 : vector<1x2x1xf32>
    %191 = vector.broadcast %186 : f32 to vector<1x2x1xf32>
    %192 = arith.addf %191, %190 : vector<1x2x1xf32>
    %c0_61 = arith.constant 0 : index
    %c0_62 = arith.constant 0 : index
    %c126 = arith.constant 126 : index
    %193 = vector.load %arg7[%c0_61, %c0_62, %c126] : memref<1x2x435xf32, #tpu.memory_space<vmem>>, vector<1x2x256xf32>
    %194 = vector.broadcast %192 : vector<1x2x1xf32> to vector<1x2x256xf32>
    %195 = arith.mulf %194, %193 : vector<1x2x256xf32>
    %196 = arith.addf %185, %195 : vector<1x2x256xf32>
    %c29 = arith.constant 29 : index
    %197 = memref.load %arg5[%c29] : memref<98xf32, #tpu.memory_space<smem>>
    %c78_63 = arith.constant 78 : index
    %198 = memref.load %arg5[%c78_63] : memref<98xf32, #tpu.memory_space<smem>>
    %199 = arith.subf %198, %197 : f32
    %200 = vector.broadcast %199 : f32 to vector<1x2x1xf32>
    %201 = arith.mulf %200, %58 : vector<1x2x1xf32>
    %202 = vector.broadcast %197 : f32 to vector<1x2x1xf32>
    %203 = arith.addf %202, %201 : vector<1x2x1xf32>
    %c0_64 = arith.constant 0 : index
    %c0_65 = arith.constant 0 : index
    %c142 = arith.constant 142 : index
    %204 = vector.load %arg7[%c0_64, %c0_65, %c142] : memref<1x2x435xf32, #tpu.memory_space<vmem>>, vector<1x2x256xf32>
    %205 = vector.broadcast %203 : vector<1x2x1xf32> to vector<1x2x256xf32>
    %206 = arith.mulf %205, %204 : vector<1x2x256xf32>
    %207 = arith.addf %196, %206 : vector<1x2x256xf32>
    %c36 = arith.constant 36 : index
    %208 = memref.load %arg5[%c36] : memref<98xf32, #tpu.memory_space<smem>>
    %c85 = arith.constant 85 : index
    %209 = memref.load %arg5[%c85] : memref<98xf32, #tpu.memory_space<smem>>
    %210 = arith.subf %209, %208 : f32
    %211 = vector.broadcast %210 : f32 to vector<1x2x1xf32>
    %212 = arith.mulf %211, %58 : vector<1x2x1xf32>
    %213 = vector.broadcast %208 : f32 to vector<1x2x1xf32>
    %214 = arith.addf %213, %212 : vector<1x2x1xf32>
    %c0_66 = arith.constant 0 : index
    %c0_67 = arith.constant 0 : index
    %c158 = arith.constant 158 : index
    %215 = vector.load %arg7[%c0_66, %c0_67, %c158] : memref<1x2x435xf32, #tpu.memory_space<vmem>>, vector<1x2x256xf32>
    %216 = vector.broadcast %214 : vector<1x2x1xf32> to vector<1x2x256xf32>
    %217 = arith.mulf %216, %215 : vector<1x2x256xf32>
    %218 = arith.addf %207, %217 : vector<1x2x256xf32>
    %c43 = arith.constant 43 : index
    %219 = memref.load %arg5[%c43] : memref<98xf32, #tpu.memory_space<smem>>
    %c92 = arith.constant 92 : index
    %220 = memref.load %arg5[%c92] : memref<98xf32, #tpu.memory_space<smem>>
    %221 = arith.subf %220, %219 : f32
    %222 = vector.broadcast %221 : f32 to vector<1x2x1xf32>
    %223 = arith.mulf %222, %58 : vector<1x2x1xf32>
    %224 = vector.broadcast %219 : f32 to vector<1x2x1xf32>
    %225 = arith.addf %224, %223 : vector<1x2x1xf32>
    %c0_68 = arith.constant 0 : index
    %c0_69 = arith.constant 0 : index
    %c174 = arith.constant 174 : index
    %226 = vector.load %arg7[%c0_68, %c0_69, %c174] : memref<1x2x435xf32, #tpu.memory_space<vmem>>, vector<1x2x256xf32>
    %227 = vector.broadcast %225 : vector<1x2x1xf32> to vector<1x2x256xf32>
    %228 = arith.mulf %227, %226 : vector<1x2x256xf32>
    %229 = arith.addf %218, %228 : vector<1x2x256xf32>
    %c-2_i32 = arith.constant -2 : i32
    %230 = vector.broadcast %c-2_i32 : i32 to vector<1x256xi32>
    %231 = arith.addi %56, %230 : vector<1x256xi32>
    %c0_i32_70 = arith.constant 0 : i32
    %232 = vector.broadcast %c0_i32_70 : i32 to vector<1x256xi32>
    %233 = arith.cmpi sge, %231, %232 : vector<1x256xi32>
    %c-2_i32_71 = arith.constant -2 : i32
    %234 = vector.broadcast %c-2_i32_71 : i32 to vector<1x256xi32>
    %235 = arith.addi %56, %234 : vector<1x256xi32>
    %c16_i32_72 = arith.constant 16 : i32
    %236 = vector.broadcast %c16_i32_72 : i32 to vector<1x256xi32>
    %237 = arith.cmpi slt, %235, %236 : vector<1x256xi32>
    %238 = arith.andi %233, %237 : vector<1x256xi1>
    %cst_73 = arith.constant 0.000000e+00 : f32
    %239 = vector.shape_cast %238 : vector<1x256xi1> to vector<1x1x256xi1>
    %240 = vector.broadcast %239 : vector<1x1x256xi1> to vector<1x2x256xi1>
    %241 = vector.broadcast %cst_73 : f32 to vector<1x2x256xf32>
    %242 = arith.select %240, %229, %241 : vector<1x2x256xi1>, vector<1x2x256xf32>
    %243 = arith.addf %151, %242 : vector<1x2x256xf32>
    %cst_74 = arith.constant 0.000000e+00 : f32
    %244 = vector.broadcast %cst_74 : f32 to vector<1x2x256xf32>
    %c2 = arith.constant 2 : index
    %245 = memref.load %arg5[%c2] : memref<98xf32, #tpu.memory_space<smem>>
    %c51 = arith.constant 51 : index
    %246 = memref.load %arg5[%c51] : memref<98xf32, #tpu.memory_space<smem>>
    %247 = arith.subf %246, %245 : f32
    %248 = vector.broadcast %247 : f32 to vector<1x2x1xf32>
    %249 = arith.mulf %248, %58 : vector<1x2x1xf32>
    %250 = vector.broadcast %245 : f32 to vector<1x2x1xf32>
    %251 = arith.addf %250, %249 : vector<1x2x1xf32>
    %c0_75 = arith.constant 0 : index
    %c0_76 = arith.constant 0 : index
    %c79 = arith.constant 79 : index
    %252 = vector.load %arg7[%c0_75, %c0_76, %c79] : memref<1x2x435xf32, #tpu.memory_space<vmem>>, vector<1x2x256xf32>
    %253 = vector.broadcast %251 : vector<1x2x1xf32> to vector<1x2x256xf32>
    %254 = arith.mulf %253, %252 : vector<1x2x256xf32>
    %255 = arith.addf %244, %254 : vector<1x2x256xf32>
    %c9 = arith.constant 9 : index
    %256 = memref.load %arg5[%c9] : memref<98xf32, #tpu.memory_space<smem>>
    %c58 = arith.constant 58 : index
    %257 = memref.load %arg5[%c58] : memref<98xf32, #tpu.memory_space<smem>>
    %258 = arith.subf %257, %256 : f32
    %259 = vector.broadcast %258 : f32 to vector<1x2x1xf32>
    %260 = arith.mulf %259, %58 : vector<1x2x1xf32>
    %261 = vector.broadcast %256 : f32 to vector<1x2x1xf32>
    %262 = arith.addf %261, %260 : vector<1x2x1xf32>
    %c0_77 = arith.constant 0 : index
    %c0_78 = arith.constant 0 : index
    %c95 = arith.constant 95 : index
    %263 = vector.load %arg7[%c0_77, %c0_78, %c95] : memref<1x2x435xf32, #tpu.memory_space<vmem>>, vector<1x2x256xf32>
    %264 = vector.broadcast %262 : vector<1x2x1xf32> to vector<1x2x256xf32>
    %265 = arith.mulf %264, %263 : vector<1x2x256xf32>
    %266 = arith.addf %255, %265 : vector<1x2x256xf32>
    %c16 = arith.constant 16 : index
    %267 = memref.load %arg5[%c16] : memref<98xf32, #tpu.memory_space<smem>>
    %c65 = arith.constant 65 : index
    %268 = memref.load %arg5[%c65] : memref<98xf32, #tpu.memory_space<smem>>
    %269 = arith.subf %268, %267 : f32
    %270 = vector.broadcast %269 : f32 to vector<1x2x1xf32>
    %271 = arith.mulf %270, %58 : vector<1x2x1xf32>
    %272 = vector.broadcast %267 : f32 to vector<1x2x1xf32>
    %273 = arith.addf %272, %271 : vector<1x2x1xf32>
    %c0_79 = arith.constant 0 : index
    %c0_80 = arith.constant 0 : index
    %c111 = arith.constant 111 : index
    %274 = vector.load %arg7[%c0_79, %c0_80, %c111] : memref<1x2x435xf32, #tpu.memory_space<vmem>>, vector<1x2x256xf32>
    %275 = vector.broadcast %273 : vector<1x2x1xf32> to vector<1x2x256xf32>
    %276 = arith.mulf %275, %274 : vector<1x2x256xf32>
    %277 = arith.addf %266, %276 : vector<1x2x256xf32>
    %c23 = arith.constant 23 : index
    %278 = memref.load %arg5[%c23] : memref<98xf32, #tpu.memory_space<smem>>
    %c72 = arith.constant 72 : index
    %279 = memref.load %arg5[%c72] : memref<98xf32, #tpu.memory_space<smem>>
    %280 = arith.subf %279, %278 : f32
    %281 = vector.broadcast %280 : f32 to vector<1x2x1xf32>
    %282 = arith.mulf %281, %58 : vector<1x2x1xf32>
    %283 = vector.broadcast %278 : f32 to vector<1x2x1xf32>
    %284 = arith.addf %283, %282 : vector<1x2x1xf32>
    %c0_81 = arith.constant 0 : index
    %c0_82 = arith.constant 0 : index
    %c127 = arith.constant 127 : index
    %285 = vector.load %arg7[%c0_81, %c0_82, %c127] : memref<1x2x435xf32, #tpu.memory_space<vmem>>, vector<1x2x256xf32>
    %286 = vector.broadcast %284 : vector<1x2x1xf32> to vector<1x2x256xf32>
    %287 = arith.mulf %286, %285 : vector<1x2x256xf32>
    %288 = arith.addf %277, %287 : vector<1x2x256xf32>
    %c30 = arith.constant 30 : index
    %289 = memref.load %arg5[%c30] : memref<98xf32, #tpu.memory_space<smem>>
    %c79_83 = arith.constant 79 : index
    %290 = memref.load %arg5[%c79_83] : memref<98xf32, #tpu.memory_space<smem>>
    %291 = arith.subf %290, %289 : f32
    %292 = vector.broadcast %291 : f32 to vector<1x2x1xf32>
    %293 = arith.mulf %292, %58 : vector<1x2x1xf32>
    %294 = vector.broadcast %289 : f32 to vector<1x2x1xf32>
    %295 = arith.addf %294, %293 : vector<1x2x1xf32>
    %c0_84 = arith.constant 0 : index
    %c0_85 = arith.constant 0 : index
    %c143 = arith.constant 143 : index
    %296 = vector.load %arg7[%c0_84, %c0_85, %c143] : memref<1x2x435xf32, #tpu.memory_space<vmem>>, vector<1x2x256xf32>
    %297 = vector.broadcast %295 : vector<1x2x1xf32> to vector<1x2x256xf32>
    %298 = arith.mulf %297, %296 : vector<1x2x256xf32>
    %299 = arith.addf %288, %298 : vector<1x2x256xf32>
    %c37 = arith.constant 37 : index
    %300 = memref.load %arg5[%c37] : memref<98xf32, #tpu.memory_space<smem>>
    %c86 = arith.constant 86 : index
    %301 = memref.load %arg5[%c86] : memref<98xf32, #tpu.memory_space<smem>>
    %302 = arith.subf %301, %300 : f32
    %303 = vector.broadcast %302 : f32 to vector<1x2x1xf32>
    %304 = arith.mulf %303, %58 : vector<1x2x1xf32>
    %305 = vector.broadcast %300 : f32 to vector<1x2x1xf32>
    %306 = arith.addf %305, %304 : vector<1x2x1xf32>
    %c0_86 = arith.constant 0 : index
    %c0_87 = arith.constant 0 : index
    %c159 = arith.constant 159 : index
    %307 = vector.load %arg7[%c0_86, %c0_87, %c159] : memref<1x2x435xf32, #tpu.memory_space<vmem>>, vector<1x2x256xf32>
    %308 = vector.broadcast %306 : vector<1x2x1xf32> to vector<1x2x256xf32>
    %309 = arith.mulf %308, %307 : vector<1x2x256xf32>
    %310 = arith.addf %299, %309 : vector<1x2x256xf32>
    %c44 = arith.constant 44 : index
    %311 = memref.load %arg5[%c44] : memref<98xf32, #tpu.memory_space<smem>>
    %c93_88 = arith.constant 93 : index
    %312 = memref.load %arg5[%c93_88] : memref<98xf32, #tpu.memory_space<smem>>
    %313 = arith.subf %312, %311 : f32
    %314 = vector.broadcast %313 : f32 to vector<1x2x1xf32>
    %315 = arith.mulf %314, %58 : vector<1x2x1xf32>
    %316 = vector.broadcast %311 : f32 to vector<1x2x1xf32>
    %317 = arith.addf %316, %315 : vector<1x2x1xf32>
    %c0_89 = arith.constant 0 : index
    %c0_90 = arith.constant 0 : index
    %c175 = arith.constant 175 : index
    %318 = vector.load %arg7[%c0_89, %c0_90, %c175] : memref<1x2x435xf32, #tpu.memory_space<vmem>>, vector<1x2x256xf32>
    %319 = vector.broadcast %317 : vector<1x2x1xf32> to vector<1x2x256xf32>
    %320 = arith.mulf %319, %318 : vector<1x2x256xf32>
    %321 = arith.addf %310, %320 : vector<1x2x256xf32>
    %c-1_i32 = arith.constant -1 : i32
    %322 = vector.broadcast %c-1_i32 : i32 to vector<1x256xi32>
    %323 = arith.addi %56, %322 : vector<1x256xi32>
    %c0_i32_91 = arith.constant 0 : i32
    %324 = vector.broadcast %c0_i32_91 : i32 to vector<1x256xi32>
    %325 = arith.cmpi sge, %323, %324 : vector<1x256xi32>
    %c-1_i32_92 = arith.constant -1 : i32
    %326 = vector.broadcast %c-1_i32_92 : i32 to vector<1x256xi32>
    %327 = arith.addi %56, %326 : vector<1x256xi32>
    %c16_i32_93 = arith.constant 16 : i32
    %328 = vector.broadcast %c16_i32_93 : i32 to vector<1x256xi32>
    %329 = arith.cmpi slt, %327, %328 : vector<1x256xi32>
    %330 = arith.andi %325, %329 : vector<1x256xi1>
    %cst_94 = arith.constant 0.000000e+00 : f32
    %331 = vector.shape_cast %330 : vector<1x256xi1> to vector<1x1x256xi1>
    %332 = vector.broadcast %331 : vector<1x1x256xi1> to vector<1x2x256xi1>
    %333 = vector.broadcast %cst_94 : f32 to vector<1x2x256xf32>
    %334 = arith.select %332, %321, %333 : vector<1x2x256xi1>, vector<1x2x256xf32>
    %335 = arith.addf %243, %334 : vector<1x2x256xf32>
    %cst_95 = arith.constant 0.000000e+00 : f32
    %336 = vector.broadcast %cst_95 : f32 to vector<1x2x256xf32>
    %c3 = arith.constant 3 : index
    %337 = memref.load %arg5[%c3] : memref<98xf32, #tpu.memory_space<smem>>
    %c52 = arith.constant 52 : index
    %338 = memref.load %arg5[%c52] : memref<98xf32, #tpu.memory_space<smem>>
    %339 = arith.subf %338, %337 : f32
    %340 = vector.broadcast %339 : f32 to vector<1x2x1xf32>
    %341 = arith.mulf %340, %58 : vector<1x2x1xf32>
    %342 = vector.broadcast %337 : f32 to vector<1x2x1xf32>
    %343 = arith.addf %342, %341 : vector<1x2x1xf32>
    %c0_96 = arith.constant 0 : index
    %c0_97 = arith.constant 0 : index
    %c80 = arith.constant 80 : index
    %344 = vector.load %arg7[%c0_96, %c0_97, %c80] : memref<1x2x435xf32, #tpu.memory_space<vmem>>, vector<1x2x256xf32>
    %345 = vector.broadcast %343 : vector<1x2x1xf32> to vector<1x2x256xf32>
    %346 = arith.mulf %345, %344 : vector<1x2x256xf32>
    %347 = arith.addf %336, %346 : vector<1x2x256xf32>
    %c10 = arith.constant 10 : index
    %348 = memref.load %arg5[%c10] : memref<98xf32, #tpu.memory_space<smem>>
    %c59 = arith.constant 59 : index
    %349 = memref.load %arg5[%c59] : memref<98xf32, #tpu.memory_space<smem>>
    %350 = arith.subf %349, %348 : f32
    %351 = vector.broadcast %350 : f32 to vector<1x2x1xf32>
    %352 = arith.mulf %351, %58 : vector<1x2x1xf32>
    %353 = vector.broadcast %348 : f32 to vector<1x2x1xf32>
    %354 = arith.addf %353, %352 : vector<1x2x1xf32>
    %c0_98 = arith.constant 0 : index
    %c0_99 = arith.constant 0 : index
    %c96 = arith.constant 96 : index
    %355 = vector.load %arg7[%c0_98, %c0_99, %c96] : memref<1x2x435xf32, #tpu.memory_space<vmem>>, vector<1x2x256xf32>
    %356 = vector.broadcast %354 : vector<1x2x1xf32> to vector<1x2x256xf32>
    %357 = arith.mulf %356, %355 : vector<1x2x256xf32>
    %358 = arith.addf %347, %357 : vector<1x2x256xf32>
    %c17 = arith.constant 17 : index
    %359 = memref.load %arg5[%c17] : memref<98xf32, #tpu.memory_space<smem>>
    %c66 = arith.constant 66 : index
    %360 = memref.load %arg5[%c66] : memref<98xf32, #tpu.memory_space<smem>>
    %361 = arith.subf %360, %359 : f32
    %362 = vector.broadcast %361 : f32 to vector<1x2x1xf32>
    %363 = arith.mulf %362, %58 : vector<1x2x1xf32>
    %364 = vector.broadcast %359 : f32 to vector<1x2x1xf32>
    %365 = arith.addf %364, %363 : vector<1x2x1xf32>
    %c0_100 = arith.constant 0 : index
    %c0_101 = arith.constant 0 : index
    %c112 = arith.constant 112 : index
    %366 = vector.load %arg7[%c0_100, %c0_101, %c112] : memref<1x2x435xf32, #tpu.memory_space<vmem>>, vector<1x2x256xf32>
    %367 = vector.broadcast %365 : vector<1x2x1xf32> to vector<1x2x256xf32>
    %368 = arith.mulf %367, %366 : vector<1x2x256xf32>
    %369 = arith.addf %358, %368 : vector<1x2x256xf32>
    %c24 = arith.constant 24 : index
    %370 = memref.load %arg5[%c24] : memref<98xf32, #tpu.memory_space<smem>>
    %c73 = arith.constant 73 : index
    %371 = memref.load %arg5[%c73] : memref<98xf32, #tpu.memory_space<smem>>
    %372 = arith.subf %371, %370 : f32
    %373 = vector.broadcast %372 : f32 to vector<1x2x1xf32>
    %374 = arith.mulf %373, %58 : vector<1x2x1xf32>
    %375 = vector.broadcast %370 : f32 to vector<1x2x1xf32>
    %376 = arith.addf %375, %374 : vector<1x2x1xf32>
    %c0_102 = arith.constant 0 : index
    %c0_103 = arith.constant 0 : index
    %c128_104 = arith.constant 128 : index
    %377 = vector.load %arg7[%c0_102, %c0_103, %c128_104] : memref<1x2x435xf32, #tpu.memory_space<vmem>>, vector<1x2x256xf32>
    %378 = vector.broadcast %376 : vector<1x2x1xf32> to vector<1x2x256xf32>
    %379 = arith.mulf %378, %377 : vector<1x2x256xf32>
    %380 = arith.addf %369, %379 : vector<1x2x256xf32>
    %c31 = arith.constant 31 : index
    %381 = memref.load %arg5[%c31] : memref<98xf32, #tpu.memory_space<smem>>
    %c80_105 = arith.constant 80 : index
    %382 = memref.load %arg5[%c80_105] : memref<98xf32, #tpu.memory_space<smem>>
    %383 = arith.subf %382, %381 : f32
    %384 = vector.broadcast %383 : f32 to vector<1x2x1xf32>
    %385 = arith.mulf %384, %58 : vector<1x2x1xf32>
    %386 = vector.broadcast %381 : f32 to vector<1x2x1xf32>
    %387 = arith.addf %386, %385 : vector<1x2x1xf32>
    %c0_106 = arith.constant 0 : index
    %c0_107 = arith.constant 0 : index
    %c144 = arith.constant 144 : index
    %388 = vector.load %arg7[%c0_106, %c0_107, %c144] : memref<1x2x435xf32, #tpu.memory_space<vmem>>, vector<1x2x256xf32>
    %389 = vector.broadcast %387 : vector<1x2x1xf32> to vector<1x2x256xf32>
    %390 = arith.mulf %389, %388 : vector<1x2x256xf32>
    %391 = arith.addf %380, %390 : vector<1x2x256xf32>
    %c38 = arith.constant 38 : index
    %392 = memref.load %arg5[%c38] : memref<98xf32, #tpu.memory_space<smem>>
    %c87 = arith.constant 87 : index
    %393 = memref.load %arg5[%c87] : memref<98xf32, #tpu.memory_space<smem>>
    %394 = arith.subf %393, %392 : f32
    %395 = vector.broadcast %394 : f32 to vector<1x2x1xf32>
    %396 = arith.mulf %395, %58 : vector<1x2x1xf32>
    %397 = vector.broadcast %392 : f32 to vector<1x2x1xf32>
    %398 = arith.addf %397, %396 : vector<1x2x1xf32>
    %c0_108 = arith.constant 0 : index
    %c0_109 = arith.constant 0 : index
    %c160 = arith.constant 160 : index
    %399 = vector.load %arg7[%c0_108, %c0_109, %c160] : memref<1x2x435xf32, #tpu.memory_space<vmem>>, vector<1x2x256xf32>
    %400 = vector.broadcast %398 : vector<1x2x1xf32> to vector<1x2x256xf32>
    %401 = arith.mulf %400, %399 : vector<1x2x256xf32>
    %402 = arith.addf %391, %401 : vector<1x2x256xf32>
    %c45 = arith.constant 45 : index
    %403 = memref.load %arg5[%c45] : memref<98xf32, #tpu.memory_space<smem>>
    %c94_110 = arith.constant 94 : index
    %404 = memref.load %arg5[%c94_110] : memref<98xf32, #tpu.memory_space<smem>>
    %405 = arith.subf %404, %403 : f32
    %406 = vector.broadcast %405 : f32 to vector<1x2x1xf32>
    %407 = arith.mulf %406, %58 : vector<1x2x1xf32>
    %408 = vector.broadcast %403 : f32 to vector<1x2x1xf32>
    %409 = arith.addf %408, %407 : vector<1x2x1xf32>
    %c0_111 = arith.constant 0 : index
    %c0_112 = arith.constant 0 : index
    %c176 = arith.constant 176 : index
    %410 = vector.load %arg7[%c0_111, %c0_112, %c176] : memref<1x2x435xf32, #tpu.memory_space<vmem>>, vector<1x2x256xf32>
    %411 = vector.broadcast %409 : vector<1x2x1xf32> to vector<1x2x256xf32>
    %412 = arith.mulf %411, %410 : vector<1x2x256xf32>
    %413 = arith.addf %402, %412 : vector<1x2x256xf32>
    %c0_i32_113 = arith.constant 0 : i32
    %414 = vector.broadcast %c0_i32_113 : i32 to vector<1x256xi32>
    %415 = arith.addi %56, %414 : vector<1x256xi32>
    %c0_i32_114 = arith.constant 0 : i32
    %416 = vector.broadcast %c0_i32_114 : i32 to vector<1x256xi32>
    %417 = arith.cmpi sge, %415, %416 : vector<1x256xi32>
    %c0_i32_115 = arith.constant 0 : i32
    %418 = vector.broadcast %c0_i32_115 : i32 to vector<1x256xi32>
    %419 = arith.addi %56, %418 : vector<1x256xi32>
    %c16_i32_116 = arith.constant 16 : i32
    %420 = vector.broadcast %c16_i32_116 : i32 to vector<1x256xi32>
    %421 = arith.cmpi slt, %419, %420 : vector<1x256xi32>
    %422 = arith.andi %417, %421 : vector<1x256xi1>
    %cst_117 = arith.constant 0.000000e+00 : f32
    %423 = vector.shape_cast %422 : vector<1x256xi1> to vector<1x1x256xi1>
    %424 = vector.broadcast %423 : vector<1x1x256xi1> to vector<1x2x256xi1>
    %425 = vector.broadcast %cst_117 : f32 to vector<1x2x256xf32>
    %426 = arith.select %424, %413, %425 : vector<1x2x256xi1>, vector<1x2x256xf32>
    %427 = arith.addf %335, %426 : vector<1x2x256xf32>
    %cst_118 = arith.constant 0.000000e+00 : f32
    %428 = vector.broadcast %cst_118 : f32 to vector<1x2x256xf32>
    %c4 = arith.constant 4 : index
    %429 = memref.load %arg5[%c4] : memref<98xf32, #tpu.memory_space<smem>>
    %c53 = arith.constant 53 : index
    %430 = memref.load %arg5[%c53] : memref<98xf32, #tpu.memory_space<smem>>
    %431 = arith.subf %430, %429 : f32
    %432 = vector.broadcast %431 : f32 to vector<1x2x1xf32>
    %433 = arith.mulf %432, %58 : vector<1x2x1xf32>
    %434 = vector.broadcast %429 : f32 to vector<1x2x1xf32>
    %435 = arith.addf %434, %433 : vector<1x2x1xf32>
    %c0_119 = arith.constant 0 : index
    %c0_120 = arith.constant 0 : index
    %c81 = arith.constant 81 : index
    %436 = vector.load %arg7[%c0_119, %c0_120, %c81] : memref<1x2x435xf32, #tpu.memory_space<vmem>>, vector<1x2x256xf32>
    %437 = vector.broadcast %435 : vector<1x2x1xf32> to vector<1x2x256xf32>
    %438 = arith.mulf %437, %436 : vector<1x2x256xf32>
    %439 = arith.addf %428, %438 : vector<1x2x256xf32>
    %c11 = arith.constant 11 : index
    %440 = memref.load %arg5[%c11] : memref<98xf32, #tpu.memory_space<smem>>
    %c60 = arith.constant 60 : index
    %441 = memref.load %arg5[%c60] : memref<98xf32, #tpu.memory_space<smem>>
    %442 = arith.subf %441, %440 : f32
    %443 = vector.broadcast %442 : f32 to vector<1x2x1xf32>
    %444 = arith.mulf %443, %58 : vector<1x2x1xf32>
    %445 = vector.broadcast %440 : f32 to vector<1x2x1xf32>
    %446 = arith.addf %445, %444 : vector<1x2x1xf32>
    %c0_121 = arith.constant 0 : index
    %c0_122 = arith.constant 0 : index
    %c97 = arith.constant 97 : index
    %447 = vector.load %arg7[%c0_121, %c0_122, %c97] : memref<1x2x435xf32, #tpu.memory_space<vmem>>, vector<1x2x256xf32>
    %448 = vector.broadcast %446 : vector<1x2x1xf32> to vector<1x2x256xf32>
    %449 = arith.mulf %448, %447 : vector<1x2x256xf32>
    %450 = arith.addf %439, %449 : vector<1x2x256xf32>
    %c18 = arith.constant 18 : index
    %451 = memref.load %arg5[%c18] : memref<98xf32, #tpu.memory_space<smem>>
    %c67 = arith.constant 67 : index
    %452 = memref.load %arg5[%c67] : memref<98xf32, #tpu.memory_space<smem>>
    %453 = arith.subf %452, %451 : f32
    %454 = vector.broadcast %453 : f32 to vector<1x2x1xf32>
    %455 = arith.mulf %454, %58 : vector<1x2x1xf32>
    %456 = vector.broadcast %451 : f32 to vector<1x2x1xf32>
    %457 = arith.addf %456, %455 : vector<1x2x1xf32>
    %c0_123 = arith.constant 0 : index
    %c0_124 = arith.constant 0 : index
    %c113 = arith.constant 113 : index
    %458 = vector.load %arg7[%c0_123, %c0_124, %c113] : memref<1x2x435xf32, #tpu.memory_space<vmem>>, vector<1x2x256xf32>
    %459 = vector.broadcast %457 : vector<1x2x1xf32> to vector<1x2x256xf32>
    %460 = arith.mulf %459, %458 : vector<1x2x256xf32>
    %461 = arith.addf %450, %460 : vector<1x2x256xf32>
    %c25 = arith.constant 25 : index
    %462 = memref.load %arg5[%c25] : memref<98xf32, #tpu.memory_space<smem>>
    %c74 = arith.constant 74 : index
    %463 = memref.load %arg5[%c74] : memref<98xf32, #tpu.memory_space<smem>>
    %464 = arith.subf %463, %462 : f32
    %465 = vector.broadcast %464 : f32 to vector<1x2x1xf32>
    %466 = arith.mulf %465, %58 : vector<1x2x1xf32>
    %467 = vector.broadcast %462 : f32 to vector<1x2x1xf32>
    %468 = arith.addf %467, %466 : vector<1x2x1xf32>
    %c0_125 = arith.constant 0 : index
    %c0_126 = arith.constant 0 : index
    %c129 = arith.constant 129 : index
    %469 = vector.load %arg7[%c0_125, %c0_126, %c129] : memref<1x2x435xf32, #tpu.memory_space<vmem>>, vector<1x2x256xf32>
    %470 = vector.broadcast %468 : vector<1x2x1xf32> to vector<1x2x256xf32>
    %471 = arith.mulf %470, %469 : vector<1x2x256xf32>
    %472 = arith.addf %461, %471 : vector<1x2x256xf32>
    %c32 = arith.constant 32 : index
    %473 = memref.load %arg5[%c32] : memref<98xf32, #tpu.memory_space<smem>>
    %c81_127 = arith.constant 81 : index
    %474 = memref.load %arg5[%c81_127] : memref<98xf32, #tpu.memory_space<smem>>
    %475 = arith.subf %474, %473 : f32
    %476 = vector.broadcast %475 : f32 to vector<1x2x1xf32>
    %477 = arith.mulf %476, %58 : vector<1x2x1xf32>
    %478 = vector.broadcast %473 : f32 to vector<1x2x1xf32>
    %479 = arith.addf %478, %477 : vector<1x2x1xf32>
    %c0_128 = arith.constant 0 : index
    %c0_129 = arith.constant 0 : index
    %c145 = arith.constant 145 : index
    %480 = vector.load %arg7[%c0_128, %c0_129, %c145] : memref<1x2x435xf32, #tpu.memory_space<vmem>>, vector<1x2x256xf32>
    %481 = vector.broadcast %479 : vector<1x2x1xf32> to vector<1x2x256xf32>
    %482 = arith.mulf %481, %480 : vector<1x2x256xf32>
    %483 = arith.addf %472, %482 : vector<1x2x256xf32>
    %c39 = arith.constant 39 : index
    %484 = memref.load %arg5[%c39] : memref<98xf32, #tpu.memory_space<smem>>
    %c88 = arith.constant 88 : index
    %485 = memref.load %arg5[%c88] : memref<98xf32, #tpu.memory_space<smem>>
    %486 = arith.subf %485, %484 : f32
    %487 = vector.broadcast %486 : f32 to vector<1x2x1xf32>
    %488 = arith.mulf %487, %58 : vector<1x2x1xf32>
    %489 = vector.broadcast %484 : f32 to vector<1x2x1xf32>
    %490 = arith.addf %489, %488 : vector<1x2x1xf32>
    %c0_130 = arith.constant 0 : index
    %c0_131 = arith.constant 0 : index
    %c161 = arith.constant 161 : index
    %491 = vector.load %arg7[%c0_130, %c0_131, %c161] : memref<1x2x435xf32, #tpu.memory_space<vmem>>, vector<1x2x256xf32>
    %492 = vector.broadcast %490 : vector<1x2x1xf32> to vector<1x2x256xf32>
    %493 = arith.mulf %492, %491 : vector<1x2x256xf32>
    %494 = arith.addf %483, %493 : vector<1x2x256xf32>
    %c46 = arith.constant 46 : index
    %495 = memref.load %arg5[%c46] : memref<98xf32, #tpu.memory_space<smem>>
    %c95_132 = arith.constant 95 : index
    %496 = memref.load %arg5[%c95_132] : memref<98xf32, #tpu.memory_space<smem>>
    %497 = arith.subf %496, %495 : f32
    %498 = vector.broadcast %497 : f32 to vector<1x2x1xf32>
    %499 = arith.mulf %498, %58 : vector<1x2x1xf32>
    %500 = vector.broadcast %495 : f32 to vector<1x2x1xf32>
    %501 = arith.addf %500, %499 : vector<1x2x1xf32>
    %c0_133 = arith.constant 0 : index
    %c0_134 = arith.constant 0 : index
    %c177 = arith.constant 177 : index
    %502 = vector.load %arg7[%c0_133, %c0_134, %c177] : memref<1x2x435xf32, #tpu.memory_space<vmem>>, vector<1x2x256xf32>
    %503 = vector.broadcast %501 : vector<1x2x1xf32> to vector<1x2x256xf32>
    %504 = arith.mulf %503, %502 : vector<1x2x256xf32>
    %505 = arith.addf %494, %504 : vector<1x2x256xf32>
    %c1_i32 = arith.constant 1 : i32
    %506 = vector.broadcast %c1_i32 : i32 to vector<1x256xi32>
    %507 = arith.addi %56, %506 : vector<1x256xi32>
    %c0_i32_135 = arith.constant 0 : i32
    %508 = vector.broadcast %c0_i32_135 : i32 to vector<1x256xi32>
    %509 = arith.cmpi sge, %507, %508 : vector<1x256xi32>
    %c1_i32_136 = arith.constant 1 : i32
    %510 = vector.broadcast %c1_i32_136 : i32 to vector<1x256xi32>
    %511 = arith.addi %56, %510 : vector<1x256xi32>
    %c16_i32_137 = arith.constant 16 : i32
    %512 = vector.broadcast %c16_i32_137 : i32 to vector<1x256xi32>
    %513 = arith.cmpi slt, %511, %512 : vector<1x256xi32>
    %514 = arith.andi %509, %513 : vector<1x256xi1>
    %cst_138 = arith.constant 0.000000e+00 : f32
    %515 = vector.shape_cast %514 : vector<1x256xi1> to vector<1x1x256xi1>
    %516 = vector.broadcast %515 : vector<1x1x256xi1> to vector<1x2x256xi1>
    %517 = vector.broadcast %cst_138 : f32 to vector<1x2x256xf32>
    %518 = arith.select %516, %505, %517 : vector<1x2x256xi1>, vector<1x2x256xf32>
    %519 = arith.addf %427, %518 : vector<1x2x256xf32>
    %cst_139 = arith.constant 0.000000e+00 : f32
    %520 = vector.broadcast %cst_139 : f32 to vector<1x2x256xf32>
    %c5 = arith.constant 5 : index
    %521 = memref.load %arg5[%c5] : memref<98xf32, #tpu.memory_space<smem>>
    %c54 = arith.constant 54 : index
    %522 = memref.load %arg5[%c54] : memref<98xf32, #tpu.memory_space<smem>>
    %523 = arith.subf %522, %521 : f32
    %524 = vector.broadcast %523 : f32 to vector<1x2x1xf32>
    %525 = arith.mulf %524, %58 : vector<1x2x1xf32>
    %526 = vector.broadcast %521 : f32 to vector<1x2x1xf32>
    %527 = arith.addf %526, %525 : vector<1x2x1xf32>
    %c0_140 = arith.constant 0 : index
    %c0_141 = arith.constant 0 : index
    %c82 = arith.constant 82 : index
    %528 = vector.load %arg7[%c0_140, %c0_141, %c82] : memref<1x2x435xf32, #tpu.memory_space<vmem>>, vector<1x2x256xf32>
    %529 = vector.broadcast %527 : vector<1x2x1xf32> to vector<1x2x256xf32>
    %530 = arith.mulf %529, %528 : vector<1x2x256xf32>
    %531 = arith.addf %520, %530 : vector<1x2x256xf32>
    %c12 = arith.constant 12 : index
    %532 = memref.load %arg5[%c12] : memref<98xf32, #tpu.memory_space<smem>>
    %c61 = arith.constant 61 : index
    %533 = memref.load %arg5[%c61] : memref<98xf32, #tpu.memory_space<smem>>
    %534 = arith.subf %533, %532 : f32
    %535 = vector.broadcast %534 : f32 to vector<1x2x1xf32>
    %536 = arith.mulf %535, %58 : vector<1x2x1xf32>
    %537 = vector.broadcast %532 : f32 to vector<1x2x1xf32>
    %538 = arith.addf %537, %536 : vector<1x2x1xf32>
    %c0_142 = arith.constant 0 : index
    %c0_143 = arith.constant 0 : index
    %c98 = arith.constant 98 : index
    %539 = vector.load %arg7[%c0_142, %c0_143, %c98] : memref<1x2x435xf32, #tpu.memory_space<vmem>>, vector<1x2x256xf32>
    %540 = vector.broadcast %538 : vector<1x2x1xf32> to vector<1x2x256xf32>
    %541 = arith.mulf %540, %539 : vector<1x2x256xf32>
    %542 = arith.addf %531, %541 : vector<1x2x256xf32>
    %c19 = arith.constant 19 : index
    %543 = memref.load %arg5[%c19] : memref<98xf32, #tpu.memory_space<smem>>
    %c68 = arith.constant 68 : index
    %544 = memref.load %arg5[%c68] : memref<98xf32, #tpu.memory_space<smem>>
    %545 = arith.subf %544, %543 : f32
    %546 = vector.broadcast %545 : f32 to vector<1x2x1xf32>
    %547 = arith.mulf %546, %58 : vector<1x2x1xf32>
    %548 = vector.broadcast %543 : f32 to vector<1x2x1xf32>
    %549 = arith.addf %548, %547 : vector<1x2x1xf32>
    %c0_144 = arith.constant 0 : index
    %c0_145 = arith.constant 0 : index
    %c114 = arith.constant 114 : index
    %550 = vector.load %arg7[%c0_144, %c0_145, %c114] : memref<1x2x435xf32, #tpu.memory_space<vmem>>, vector<1x2x256xf32>
    %551 = vector.broadcast %549 : vector<1x2x1xf32> to vector<1x2x256xf32>
    %552 = arith.mulf %551, %550 : vector<1x2x256xf32>
    %553 = arith.addf %542, %552 : vector<1x2x256xf32>
    %c26 = arith.constant 26 : index
    %554 = memref.load %arg5[%c26] : memref<98xf32, #tpu.memory_space<smem>>
    %c75 = arith.constant 75 : index
    %555 = memref.load %arg5[%c75] : memref<98xf32, #tpu.memory_space<smem>>
    %556 = arith.subf %555, %554 : f32
    %557 = vector.broadcast %556 : f32 to vector<1x2x1xf32>
    %558 = arith.mulf %557, %58 : vector<1x2x1xf32>
    %559 = vector.broadcast %554 : f32 to vector<1x2x1xf32>
    %560 = arith.addf %559, %558 : vector<1x2x1xf32>
    %c0_146 = arith.constant 0 : index
    %c0_147 = arith.constant 0 : index
    %c130 = arith.constant 130 : index
    %561 = vector.load %arg7[%c0_146, %c0_147, %c130] : memref<1x2x435xf32, #tpu.memory_space<vmem>>, vector<1x2x256xf32>
    %562 = vector.broadcast %560 : vector<1x2x1xf32> to vector<1x2x256xf32>
    %563 = arith.mulf %562, %561 : vector<1x2x256xf32>
    %564 = arith.addf %553, %563 : vector<1x2x256xf32>
    %c33 = arith.constant 33 : index
    %565 = memref.load %arg5[%c33] : memref<98xf32, #tpu.memory_space<smem>>
    %c82_148 = arith.constant 82 : index
    %566 = memref.load %arg5[%c82_148] : memref<98xf32, #tpu.memory_space<smem>>
    %567 = arith.subf %566, %565 : f32
    %568 = vector.broadcast %567 : f32 to vector<1x2x1xf32>
    %569 = arith.mulf %568, %58 : vector<1x2x1xf32>
    %570 = vector.broadcast %565 : f32 to vector<1x2x1xf32>
    %571 = arith.addf %570, %569 : vector<1x2x1xf32>
    %c0_149 = arith.constant 0 : index
    %c0_150 = arith.constant 0 : index
    %c146 = arith.constant 146 : index
    %572 = vector.load %arg7[%c0_149, %c0_150, %c146] : memref<1x2x435xf32, #tpu.memory_space<vmem>>, vector<1x2x256xf32>
    %573 = vector.broadcast %571 : vector<1x2x1xf32> to vector<1x2x256xf32>
    %574 = arith.mulf %573, %572 : vector<1x2x256xf32>
    %575 = arith.addf %564, %574 : vector<1x2x256xf32>
    %c40 = arith.constant 40 : index
    %576 = memref.load %arg5[%c40] : memref<98xf32, #tpu.memory_space<smem>>
    %c89 = arith.constant 89 : index
    %577 = memref.load %arg5[%c89] : memref<98xf32, #tpu.memory_space<smem>>
    %578 = arith.subf %577, %576 : f32
    %579 = vector.broadcast %578 : f32 to vector<1x2x1xf32>
    %580 = arith.mulf %579, %58 : vector<1x2x1xf32>
    %581 = vector.broadcast %576 : f32 to vector<1x2x1xf32>
    %582 = arith.addf %581, %580 : vector<1x2x1xf32>
    %c0_151 = arith.constant 0 : index
    %c0_152 = arith.constant 0 : index
    %c162 = arith.constant 162 : index
    %583 = vector.load %arg7[%c0_151, %c0_152, %c162] : memref<1x2x435xf32, #tpu.memory_space<vmem>>, vector<1x2x256xf32>
    %584 = vector.broadcast %582 : vector<1x2x1xf32> to vector<1x2x256xf32>
    %585 = arith.mulf %584, %583 : vector<1x2x256xf32>
    %586 = arith.addf %575, %585 : vector<1x2x256xf32>
    %c47 = arith.constant 47 : index
    %587 = memref.load %arg5[%c47] : memref<98xf32, #tpu.memory_space<smem>>
    %c96_153 = arith.constant 96 : index
    %588 = memref.load %arg5[%c96_153] : memref<98xf32, #tpu.memory_space<smem>>
    %589 = arith.subf %588, %587 : f32
    %590 = vector.broadcast %589 : f32 to vector<1x2x1xf32>
    %591 = arith.mulf %590, %58 : vector<1x2x1xf32>
    %592 = vector.broadcast %587 : f32 to vector<1x2x1xf32>
    %593 = arith.addf %592, %591 : vector<1x2x1xf32>
    %c0_154 = arith.constant 0 : index
    %c0_155 = arith.constant 0 : index
    %c178 = arith.constant 178 : index
    %594 = vector.load %arg7[%c0_154, %c0_155, %c178] : memref<1x2x435xf32, #tpu.memory_space<vmem>>, vector<1x2x256xf32>
    %595 = vector.broadcast %593 : vector<1x2x1xf32> to vector<1x2x256xf32>
    %596 = arith.mulf %595, %594 : vector<1x2x256xf32>
    %597 = arith.addf %586, %596 : vector<1x2x256xf32>
    %c2_i32 = arith.constant 2 : i32
    %598 = vector.broadcast %c2_i32 : i32 to vector<1x256xi32>
    %599 = arith.addi %56, %598 : vector<1x256xi32>
    %c0_i32_156 = arith.constant 0 : i32
    %600 = vector.broadcast %c0_i32_156 : i32 to vector<1x256xi32>
    %601 = arith.cmpi sge, %599, %600 : vector<1x256xi32>
    %c2_i32_157 = arith.constant 2 : i32
    %602 = vector.broadcast %c2_i32_157 : i32 to vector<1x256xi32>
    %603 = arith.addi %56, %602 : vector<1x256xi32>
    %c16_i32_158 = arith.constant 16 : i32
    %604 = vector.broadcast %c16_i32_158 : i32 to vector<1x256xi32>
    %605 = arith.cmpi slt, %603, %604 : vector<1x256xi32>
    %606 = arith.andi %601, %605 : vector<1x256xi1>
    %cst_159 = arith.constant 0.000000e+00 : f32
    %607 = vector.shape_cast %606 : vector<1x256xi1> to vector<1x1x256xi1>
    %608 = vector.broadcast %607 : vector<1x1x256xi1> to vector<1x2x256xi1>
    %609 = vector.broadcast %cst_159 : f32 to vector<1x2x256xf32>
    %610 = arith.select %608, %597, %609 : vector<1x2x256xi1>, vector<1x2x256xf32>
    %611 = arith.addf %519, %610 : vector<1x2x256xf32>
    %cst_160 = arith.constant 0.000000e+00 : f32
    %612 = vector.broadcast %cst_160 : f32 to vector<1x2x256xf32>
    %c6 = arith.constant 6 : index
    %613 = memref.load %arg5[%c6] : memref<98xf32, #tpu.memory_space<smem>>
    %c55 = arith.constant 55 : index
    %614 = memref.load %arg5[%c55] : memref<98xf32, #tpu.memory_space<smem>>
    %615 = arith.subf %614, %613 : f32
    %616 = vector.broadcast %615 : f32 to vector<1x2x1xf32>
    %617 = arith.mulf %616, %58 : vector<1x2x1xf32>
    %618 = vector.broadcast %613 : f32 to vector<1x2x1xf32>
    %619 = arith.addf %618, %617 : vector<1x2x1xf32>
    %c0_161 = arith.constant 0 : index
    %c0_162 = arith.constant 0 : index
    %c83 = arith.constant 83 : index
    %620 = vector.load %arg7[%c0_161, %c0_162, %c83] : memref<1x2x435xf32, #tpu.memory_space<vmem>>, vector<1x2x256xf32>
    %621 = vector.broadcast %619 : vector<1x2x1xf32> to vector<1x2x256xf32>
    %622 = arith.mulf %621, %620 : vector<1x2x256xf32>
    %623 = arith.addf %612, %622 : vector<1x2x256xf32>
    %c13 = arith.constant 13 : index
    %624 = memref.load %arg5[%c13] : memref<98xf32, #tpu.memory_space<smem>>
    %c62 = arith.constant 62 : index
    %625 = memref.load %arg5[%c62] : memref<98xf32, #tpu.memory_space<smem>>
    %626 = arith.subf %625, %624 : f32
    %627 = vector.broadcast %626 : f32 to vector<1x2x1xf32>
    %628 = arith.mulf %627, %58 : vector<1x2x1xf32>
    %629 = vector.broadcast %624 : f32 to vector<1x2x1xf32>
    %630 = arith.addf %629, %628 : vector<1x2x1xf32>
    %c0_163 = arith.constant 0 : index
    %c0_164 = arith.constant 0 : index
    %c99 = arith.constant 99 : index
    %631 = vector.load %arg7[%c0_163, %c0_164, %c99] : memref<1x2x435xf32, #tpu.memory_space<vmem>>, vector<1x2x256xf32>
    %632 = vector.broadcast %630 : vector<1x2x1xf32> to vector<1x2x256xf32>
    %633 = arith.mulf %632, %631 : vector<1x2x256xf32>
    %634 = arith.addf %623, %633 : vector<1x2x256xf32>
    %c20 = arith.constant 20 : index
    %635 = memref.load %arg5[%c20] : memref<98xf32, #tpu.memory_space<smem>>
    %c69 = arith.constant 69 : index
    %636 = memref.load %arg5[%c69] : memref<98xf32, #tpu.memory_space<smem>>
    %637 = arith.subf %636, %635 : f32
    %638 = vector.broadcast %637 : f32 to vector<1x2x1xf32>
    %639 = arith.mulf %638, %58 : vector<1x2x1xf32>
    %640 = vector.broadcast %635 : f32 to vector<1x2x1xf32>
    %641 = arith.addf %640, %639 : vector<1x2x1xf32>
    %c0_165 = arith.constant 0 : index
    %c0_166 = arith.constant 0 : index
    %c115 = arith.constant 115 : index
    %642 = vector.load %arg7[%c0_165, %c0_166, %c115] : memref<1x2x435xf32, #tpu.memory_space<vmem>>, vector<1x2x256xf32>
    %643 = vector.broadcast %641 : vector<1x2x1xf32> to vector<1x2x256xf32>
    %644 = arith.mulf %643, %642 : vector<1x2x256xf32>
    %645 = arith.addf %634, %644 : vector<1x2x256xf32>
    %c27 = arith.constant 27 : index
    %646 = memref.load %arg5[%c27] : memref<98xf32, #tpu.memory_space<smem>>
    %c76 = arith.constant 76 : index
    %647 = memref.load %arg5[%c76] : memref<98xf32, #tpu.memory_space<smem>>
    %648 = arith.subf %647, %646 : f32
    %649 = vector.broadcast %648 : f32 to vector<1x2x1xf32>
    %650 = arith.mulf %649, %58 : vector<1x2x1xf32>
    %651 = vector.broadcast %646 : f32 to vector<1x2x1xf32>
    %652 = arith.addf %651, %650 : vector<1x2x1xf32>
    %c0_167 = arith.constant 0 : index
    %c0_168 = arith.constant 0 : index
    %c131 = arith.constant 131 : index
    %653 = vector.load %arg7[%c0_167, %c0_168, %c131] : memref<1x2x435xf32, #tpu.memory_space<vmem>>, vector<1x2x256xf32>
    %654 = vector.broadcast %652 : vector<1x2x1xf32> to vector<1x2x256xf32>
    %655 = arith.mulf %654, %653 : vector<1x2x256xf32>
    %656 = arith.addf %645, %655 : vector<1x2x256xf32>
    %c34 = arith.constant 34 : index
    %657 = memref.load %arg5[%c34] : memref<98xf32, #tpu.memory_space<smem>>
    %c83_169 = arith.constant 83 : index
    %658 = memref.load %arg5[%c83_169] : memref<98xf32, #tpu.memory_space<smem>>
    %659 = arith.subf %658, %657 : f32
    %660 = vector.broadcast %659 : f32 to vector<1x2x1xf32>
    %661 = arith.mulf %660, %58 : vector<1x2x1xf32>
    %662 = vector.broadcast %657 : f32 to vector<1x2x1xf32>
    %663 = arith.addf %662, %661 : vector<1x2x1xf32>
    %c0_170 = arith.constant 0 : index
    %c0_171 = arith.constant 0 : index
    %c147 = arith.constant 147 : index
    %664 = vector.load %arg7[%c0_170, %c0_171, %c147] : memref<1x2x435xf32, #tpu.memory_space<vmem>>, vector<1x2x256xf32>
    %665 = vector.broadcast %663 : vector<1x2x1xf32> to vector<1x2x256xf32>
    %666 = arith.mulf %665, %664 : vector<1x2x256xf32>
    %667 = arith.addf %656, %666 : vector<1x2x256xf32>
    %c41 = arith.constant 41 : index
    %668 = memref.load %arg5[%c41] : memref<98xf32, #tpu.memory_space<smem>>
    %c90 = arith.constant 90 : index
    %669 = memref.load %arg5[%c90] : memref<98xf32, #tpu.memory_space<smem>>
    %670 = arith.subf %669, %668 : f32
    %671 = vector.broadcast %670 : f32 to vector<1x2x1xf32>
    %672 = arith.mulf %671, %58 : vector<1x2x1xf32>
    %673 = vector.broadcast %668 : f32 to vector<1x2x1xf32>
    %674 = arith.addf %673, %672 : vector<1x2x1xf32>
    %c0_172 = arith.constant 0 : index
    %c0_173 = arith.constant 0 : index
    %c163 = arith.constant 163 : index
    %675 = vector.load %arg7[%c0_172, %c0_173, %c163] : memref<1x2x435xf32, #tpu.memory_space<vmem>>, vector<1x2x256xf32>
    %676 = vector.broadcast %674 : vector<1x2x1xf32> to vector<1x2x256xf32>
    %677 = arith.mulf %676, %675 : vector<1x2x256xf32>
    %678 = arith.addf %667, %677 : vector<1x2x256xf32>
    %c48 = arith.constant 48 : index
    %679 = memref.load %arg5[%c48] : memref<98xf32, #tpu.memory_space<smem>>
    %c97_174 = arith.constant 97 : index
    %680 = memref.load %arg5[%c97_174] : memref<98xf32, #tpu.memory_space<smem>>
    %681 = arith.subf %680, %679 : f32
    %682 = vector.broadcast %681 : f32 to vector<1x2x1xf32>
    %683 = arith.mulf %682, %58 : vector<1x2x1xf32>
    %684 = vector.broadcast %679 : f32 to vector<1x2x1xf32>
    %685 = arith.addf %684, %683 : vector<1x2x1xf32>
    %c0_175 = arith.constant 0 : index
    %c0_176 = arith.constant 0 : index
    %c179 = arith.constant 179 : index
    %686 = vector.load %arg7[%c0_175, %c0_176, %c179] : memref<1x2x435xf32, #tpu.memory_space<vmem>>, vector<1x2x256xf32>
    %687 = vector.broadcast %685 : vector<1x2x1xf32> to vector<1x2x256xf32>
    %688 = arith.mulf %687, %686 : vector<1x2x256xf32>
    %689 = arith.addf %678, %688 : vector<1x2x256xf32>
    %c3_i32 = arith.constant 3 : i32
    %690 = vector.broadcast %c3_i32 : i32 to vector<1x256xi32>
    %691 = arith.addi %56, %690 : vector<1x256xi32>
    %c0_i32_177 = arith.constant 0 : i32
    %692 = vector.broadcast %c0_i32_177 : i32 to vector<1x256xi32>
    %693 = arith.cmpi sge, %691, %692 : vector<1x256xi32>
    %c3_i32_178 = arith.constant 3 : i32
    %694 = vector.broadcast %c3_i32_178 : i32 to vector<1x256xi32>
    %695 = arith.addi %56, %694 : vector<1x256xi32>
    %c16_i32_179 = arith.constant 16 : i32
    %696 = vector.broadcast %c16_i32_179 : i32 to vector<1x256xi32>
    %697 = arith.cmpi slt, %695, %696 : vector<1x256xi32>
    %698 = arith.andi %693, %697 : vector<1x256xi1>
    %cst_180 = arith.constant 0.000000e+00 : f32
    %699 = vector.shape_cast %698 : vector<1x256xi1> to vector<1x1x256xi1>
    %700 = vector.broadcast %699 : vector<1x1x256xi1> to vector<1x2x256xi1>
    %701 = vector.broadcast %cst_180 : f32 to vector<1x2x256xf32>
    %702 = arith.select %700, %689, %701 : vector<1x2x256xi1>, vector<1x2x256xf32>
    %703 = arith.addf %611, %702 : vector<1x2x256xf32>
    %cst_181 = arith.constant dense<0.000000e+00> : vector<1x256xf32>
    %704 = vector.multi_reduction <add>, %703, %cst_181 [1] : vector<1x2x256xf32> to vector<1x256xf32>
    %705 = vector.shape_cast %704 : vector<1x256xf32> to vector<1x1x256xf32>
    %706 = arith.negf %705 : vector<1x1x256xf32>
    %707 = math.exp %706 : vector<1x1x256xf32>
    %cst_182 = arith.constant 1.000000e+00 : f32
    %708 = vector.broadcast %cst_182 : f32 to vector<1x1x256xf32>
    %709 = arith.addf %708, %707 : vector<1x1x256xf32>
    %710 = arith.divf %708, %709 : vector<1x1x256xf32>
    %c0_183 = arith.constant 0 : index
    %c0_184 = arith.constant 0 : index
    %c0_185 = arith.constant 0 : index
    %711 = vector.load %arg1[%c0_183, %c0_184, %c0_185] : memref<1x4x256xf32, #tpu.memory_space<vmem>>, vector<1x4x256xf32>
    %712 = vector.broadcast %36 : vector<1x4x1xf32> to vector<1x4x256xf32>
    %713 = arith.mulf %711, %712 : vector<1x4x256xf32>
    %714 = vector.broadcast %710 : vector<1x1x256xf32> to vector<1x4x256xf32>
    %715 = arith.mulf %713, %714 : vector<1x4x256xf32>
    %c0_186 = arith.constant 0 : index
    %c0_187 = arith.constant 0 : index
    %c0_188 = arith.constant 0 : index
    %716 = vector.load %arg6[%c0_186, %c0_187, %c0_188] : memref<1x4x256xf32, #tpu.memory_space<vmem>>, vector<1x4x256xf32>
    tpu.vector_store %arg6[%c0_186, %c0_187, %c0_188], %715 {strides = array<i32>} : memref<1x4x256xf32, #tpu.memory_space<vmem>>, vector<1x4x256xf32>,
    return
  }
  func.func @transform_0(%arg0: i32) -> (i32, i32, i32) {
    %c0_i32 = arith.constant 0 : i32
    %c0_i32_0 = arith.constant 0 : i32
    %c0_i32_1 = arith.constant 0 : i32
    return %arg0, %c0_i32, %c0_i32_0 : i32, i32, i32
  }
  func.func @transform_1(%arg0: i32) -> (i32, i32) {
    %c0_i32 = arith.constant 0 : i32
    %c0_i32_0 = arith.constant 0 : i32
    %c0_i32_1 = arith.constant 0 : i32
    return %c0_i32, %c0_i32_0 : i32, i32
  }
  func.func @transform_2(%arg0: i32) -> (i32, i32) {
    %c0_i32 = arith.constant 0 : i32
    %c0_i32_0 = arith.constant 0 : i32
    %c0_i32_1 = arith.constant 0 : i32
    return %c0_i32, %c0_i32_0 : i32, i32
  }
  func.func @transform_3(%arg0: i32) -> (i32, i32) {
    %c0_i32 = arith.constant 0 : i32
    %c0_i32_0 = arith.constant 0 : i32
    %c0_i32_1 = arith.constant 0 : i32
    return %c0_i32, %c0_i32_0 : i32, i32
  }
  func.func @transform_4(%arg0: i32) -> i32 {
    %c0_i32 = arith.constant 0 : i32
    %c0_i32_0 = arith.constant 0 : i32
    return %c0_i32 : i32
  }
  func.func @transform_5(%arg0: i32) -> (i32, i32, i32) {
    %c0_i32 = arith.constant 0 : i32
    %c0_i32_0 = arith.constant 0 : i32
    %c0_i32_1 = arith.constant 0 : i32
    return %arg0, %c0_i32, %c0_i32_0 : i32, i32, i32
  }
}

</mosaic_0001>

<llo_original>
// kernel: tpu_custom_call.1
$region0: #{tpu_custom_call.1}
  #allocation0 [shape = 'u32[]', space=smem, size = 0x4, offset = 0x4, fixed_abs, tag = 'smem constant byte address 0x4 - core index']
  #allocation1 [shape = 'u32[72,128]{1,0:T(1,128)}', space=vmem, size = 0x9000, scoped, tag = 'internal scratch']
  #allocation2 [shape = 'f32[1,2,435]{2,1,0:T(2,128)}', space=vmem, size = 0x1000, scoped, tag = 'scratch operand']
  %s0 = inlined_call_operand.hbm [shape: f32[2,4,256], index: 0, kind: input, shape index: {}]
  %s1 = inlined_call_operand.vmem [shape: f32[4,1], index: 1, kind: input, shape index: {}]
  %s2 = inlined_call_operand.vmem [shape: f32[4,1], index: 2, kind: input, shape index: {}]
  %s3 = inlined_call_operand.vmem [shape: s32[1,256], index: 3, kind: input, shape index: {}]
  %s4 = inlined_call_operand.vmem [shape: f32[98], index: 4, kind: input, shape index: {}]
  %s5 = inlined_call_operand.hbm [shape: f32[2,4,256], index: 5, kind: output, shape index: {}]
  %s6 = sld [smem:[#allocation0]]
  $region61: #{tpu_custom_call.1} parent=0
    _
  %s8 = ssub.s32 1, %s6
  %s9 = scalar_select 0, %s8, %s6
  $region1: #{tpu_custom_call.1} parent=0
    #allocation3 [shape = 'u8[8192]{0}', space=vmem, size = 0x2000, scoped, tag = 'input window, operand 0']
    #allocation4 [shape = 's32[2]{0}', space=sflag, size = 0x8, scoped, tag = 'scoped memory for tpu_custom_call.1']
    #allocation5 [shape = 's32[2]{0}', space=sflag, size = 0x8, scoped, tag = 'scoped memory for tpu_custom_call.1']
    #allocation6 [shape = 's32[2]{0}', space=sflag, size = 0x8, scoped, tag = 'scoped memory for tpu_custom_call.1']
    #allocation7 [shape = 'u8[512]{0}', space=smem, size = 0x200, scoped, tag = 'input window, operand 4, single buffered']
    #allocation8 [shape = 'u8[8192]{0}', space=vmem, size = 0x2000, scoped, tag = 'output window, operand 0']
    %10 = vsyncpa [#allocation4], 0
    %s11 = scalar_lea.sflag [#allocation4], 1
    %12 = vsyncpa %s11, 0
    %13 = vsyncpa [#allocation6], 0
    %14 = vsyncpa [#allocation5], 0
    %s15 = scalar_lea.sflag [#allocation5], 1
    %16 = vsyncpa %s15, 0
    loop: start=0, step=1, limit=4
    $region2: #{tpu_custom_call.1} parent=1 // loop_pre_header
      _
    $region3: #{tpu_custom_call.1} parent=1 // loop_header
      %s18 = sphi 0, %s22
      %p19 = scmp.ge.s32.totalorder %s18, 4
      %s28 = sphi 0, %s30
      %s31 = sphi 0, %s28
      %s32 = sphi 0, %s31
      %s48 = sphi 0, %s32
      %s52 = sphi 0, %s52
      %s54 = sphi 0, %s52
      %s55 = sphi 0, %s54
      %s69 = sphi 0, %s55
      %s73 = sphi 0, %s73
      %s75 = sphi 0, %s73
      %s76 = sphi 0, %s75
      %s90 = sphi 0, %s76
      %s94 = sphi 0, %s94
      %s96 = sphi 0, %s94
      %s97 = sphi 0, %s96
      %s111 = sphi 0, %s97
      %s115 = sphi 0, %s115
      %s117 = sphi 0, %s115
      %s118 = sphi 0, %s117
      %s132 = sphi 0, %s118
      %s138 = sphi 0, %s140
      %s141 = sphi 0, %s138
      %s142 = sphi 0, %s141
      %s158 = sphi 0, %s142
    $region4: #{tpu_custom_call.1} parent=1 // loop_header_branch
      %21 = sbr.rel (%p19) target = $region8
    $region5: #{tpu_custom_call.1} parent=1 // loop_body
      %s23 = ssub.s32 %s18, 1
      %s24 = ssub.s32 %s18, 2
      %s25 = sadd.s32 %s18, 1
      %s26 = ssub.s32 %s18, %s25
      %p27 = scmp.eq.s32.totalorder %s26, 0
      %s29 = sadd.s32 %s28, 1
      %s30 = scalar_select %p27, %s28, %s29
      %p33 = pneg %p27
      %p34 = scmp.eq.s32.totalorder %s18, 1
      %p35 = por %p33, %p34
      %p36 = scmp.ne.s32.totalorder %s28, %s31
      %p37 = scmp.eq.s32.totalorder %s18, 0
      %p38 = por %p36, %p37
      %p39 = scmp.ne.s32.totalorder %s28, %s31
      %p40 = scmp.eq.s32.totalorder %s23, 1
      %p41 = por %p39, %p40
      %p42 = scmp.ne.s32.totalorder %s31, %s32
      %p43 = scmp.eq.s32.totalorder %s23, 0
      %p44 = por %p42, %p43
      %p45 = scmp.ne.s32.totalorder %s31, %s32
      %p46 = scmp.eq.s32.totalorder %s24, 1
      %p47 = por %p45, %p46
      %p49 = scmp.ne.s32.totalorder %s32, %s48
      %p50 = scmp.eq.s32.totalorder %s24, 0
      %p51 = por %p49, %p50
      %s53 = sadd.s32 %s52, 1
      %p56 = scmp.eq.s32.totalorder %s18, 1
      %p57 = scmp.ne.s32.totalorder %s52, %s54
      %p58 = scmp.eq.s32.totalorder %s18, 0
      %p59 = por %p57, %p58
      %p60 = scmp.ne.s32.totalorder %s52, %s54
      %p61 = scmp.eq.s32.totalorder %s23, 1
      %p62 = por %p60, %p61
      %p63 = scmp.ne.s32.totalorder %s54, %s55
      %p64 = scmp.eq.s32.totalorder %s23, 0
      %p65 = por %p63, %p64
      %p66 = scmp.ne.s32.totalorder %s54, %s55
      %p67 = scmp.eq.s32.totalorder %s24, 1
      %p68 = por %p66, %p67
      %p70 = scmp.ne.s32.totalorder %s55, %s69
      %p71 = scmp.eq.s32.totalorder %s24, 0
      %p72 = por %p70, %p71
      %s74 = sadd.s32 %s73, 1
      %p77 = scmp.eq.s32.totalorder %s18, 1
      %p78 = scmp.ne.s32.totalorder %s73, %s75
      %p79 = scmp.eq.s32.totalorder %s18, 0
      %p80 = por %p78, %p79
      %p81 = scmp.ne.s32.totalorder %s73, %s75
      %p82 = scmp.eq.s32.totalorder %s23, 1
      %p83 = por %p81, %p82
      %p84 = scmp.ne.s32.totalorder %s75, %s76
      %p85 = scmp.eq.s32.totalorder %s23, 0
      %p86 = por %p84, %p85
      %p87 = scmp.ne.s32.totalorder %s75, %s76
      %p88 = scmp.eq.s32.totalorder %s24, 1
      %p89 = por %p87, %p88
      %p91 = scmp.ne.s32.totalorder %s76, %s90
      %p92 = scmp.eq.s32.totalorder %s24, 0
      %p93 = por %p91, %p92
      %s95 = sadd.s32 %s94, 1
      %p98 = scmp.eq.s32.totalorder %s18, 1
      %p99 = scmp.ne.s32.totalorder %s94, %s96
      %p100 = scmp.eq.s32.totalorder %s18, 0
      %p101 = por %p99, %p100
      %p102 = scmp.ne.s32.totalorder %s94, %s96
      %p103 = scmp.eq.s32.totalorder %s23, 1
      %p104 = por %p102, %p103
      %p105 = scmp.ne.s32.totalorder %s96, %s97
      %p106 = scmp.eq.s32.totalorder %s23, 0
      %p107 = por %p105, %p106
      %p108 = scmp.ne.s32.totalorder %s96, %s97
      %p109 = scmp.eq.s32.totalorder %s24, 1
      %p110 = por %p108, %p109
      %p112 = scmp.ne.s32.totalorder %s97, %s111
      %p113 = scmp.eq.s32.totalorder %s24, 0
      %p114 = por %p112, %p113
      %s116 = sadd.s32 %s115, 1
      %p119 = scmp.eq.s32.totalorder %s18, 1
      %p120 = scmp.ne.s32.totalorder %s115, %s117
      %p121 = scmp.eq.s32.totalorder %s18, 0
      %p122 = por %p120, %p121
      %p123 = scmp.ne.s32.totalorder %s115, %s117
      %p124 = scmp.eq.s32.totalorder %s23, 1
      %p125 = por %p123, %p124
      %p126 = scmp.ne.s32.totalorder %s117, %s118
      %p127 = scmp.eq.s32.totalorder %s23, 0
      %p128 = por %p126, %p127
      %p129 = scmp.ne.s32.totalorder %s117, %s118
      %p130 = scmp.eq.s32.totalorder %s24, 1
      %p131 = por %p129, %p130
      %p133 = scmp.ne.s32.totalorder %s118, %s132
      %p134 = scmp.eq.s32.totalorder %s24, 0
      %p135 = por %p133, %p134
      %s136 = ssub.s32 %s18, %s25
      %p137 = scmp.eq.s32.totalorder %s136, 0
      %s139 = sadd.s32 %s138, 1
      %s140 = scalar_select %p137, %s138, %s139
      %p143 = pneg %p137
      %p144 = scmp.eq.s32.totalorder %s18, 1
      %p145 = por %p143, %p144
      %p146 = scmp.ne.s32.totalorder %s138, %s141
      %p147 = scmp.eq.s32.totalorder %s18, 0
      %p148 = por %p146, %p147
      %p149 = scmp.ne.s32.totalorder %s138, %s141
      %p150 = scmp.eq.s32.totalorder %s23, 1
      %p151 = por %p149, %p150
      %p152 = scmp.ne.s32.totalorder %s141, %s142
      %p153 = scmp.eq.s32.totalorder %s23, 0
      %p154 = por %p152, %p153
      %p155 = scmp.ne.s32.totalorder %s141, %s142
      %p156 = scmp.eq.s32.totalorder %s24, 1
      %p157 = por %p155, %p156
      %p159 = scmp.ne.s32.totalorder %s142, %s158
      %p160 = scmp.eq.s32.totalorder %s24, 0
      %p161 = por %p159, %p160
      %p162 = scmp.le.s32.totalorder 1, %s18
      %p163 = scmp.lt.s32.totalorder %s18, 3
      %p164 = pnand %p162, %p163
      %p165 = pneg %p164
      // Predicated region
      $region9: #{tpu_custom_call.1} parent=5 // pred_check
        _
      $region10: #{tpu_custom_call.1} parent=5 // pred_check_branch
        %167 = sbr.rel (%p164) target = $region12
      $region11: #{tpu_custom_call.1} parent=5 // pred_region
        %s168 = ssub.s32 %s18, 1
        // Predicated region
        $region13: #{tpu_custom_call.1} parent=11 // pred_check
          %p169 = pneg %p65
        $region14: #{tpu_custom_call.1} parent=11 // pred_check_branch
          %171 = sbr.rel (%p169) target = $region16
        $region15: #{tpu_custom_call.1} parent=11 // pred_region
          _
        $region16: #{tpu_custom_call.1} parent=11 // pred_fallthru
          _
        // Predicated region
        $region17: #{tpu_custom_call.1} parent=11 // pred_check
          %p172 = pneg %p86
        $region18: #{tpu_custom_call.1} parent=11 // pred_check_branch
          %174 = sbr.rel (%p172) target = $region20
        $region19: #{tpu_custom_call.1} parent=11 // pred_region
          _
        $region20: #{tpu_custom_call.1} parent=11 // pred_fallthru
          _
        // Predicated region
        $region21: #{tpu_custom_call.1} parent=11 // pred_check
          %p175 = pneg %p107
        $region22: #{tpu_custom_call.1} parent=11 // pred_check_branch
          %177 = sbr.rel (%p175) target = $region24
        $region23: #{tpu_custom_call.1} parent=11 // pred_region
          _
        $region24: #{tpu_custom_call.1} parent=11 // pred_fallthru
          _
        // Predicated region
        $region25: #{tpu_custom_call.1} parent=11 // pred_check
          %p178 = pneg %p128
        $region26: #{tpu_custom_call.1} parent=11 // pred_check_branch
          %180 = sbr.rel (%p178) target = $region28
        $region27: #{tpu_custom_call.1} parent=11 // pred_region
          %182 = vsyncadd [#allocation6], 0
          %s184 = sshll.u32 %s4, 4
          %s185 = int_to_ptr.vmem [resolvable:$true] %s184
          %187 = dma.vmem_to_smem %s185, 16, [#allocation7], [#allocation6]
        $region28: #{tpu_custom_call.1} parent=11 // pred_fallthru
          _
      $region12: #{tpu_custom_call.1} parent=5 // pred_fallthru
        _
      %p188 = scmp.lt.s32.totalorder %s18, 2
      // Predicated region
      $region29: #{tpu_custom_call.1} parent=5 // pred_check
        %p189 = pneg %p188
      $region30: #{tpu_custom_call.1} parent=5 // pred_check_branch
        %191 = sbr.rel (%p189) target = $region32
      $region31: #{tpu_custom_call.1} parent=5 // pred_region
        // Predicated region
        $region33: #{tpu_custom_call.1} parent=31 // pred_check
          %p192 = pneg %p38
        $region34: #{tpu_custom_call.1} parent=31 // pred_check_branch
          %194 = sbr.rel (%p192) target = $region36
        $region35: #{tpu_custom_call.1} parent=31 // pred_region
          %s195 = sand.u32 %s28, 1
          %s196 = scalar_lea.sflag [#allocation4], %s195
          %s197 = sand.u32 %s28, 1
          %s198 = smul.addr %s197, 8
          %s199 = scalar_lea.vmem [#allocation3], %s198
          %201 = vsyncadd %s196, 0
          %s202 = smul.addr %s18, 2
          %s203 = smul.addr %s202, 4
          %s204 = scalar_lea.hbm %s0, %s203
          %s206 = sshll.u32 %s204, 4
          %s207 = int_to_ptr.hbm [resolvable:$true] %s206
          %s208 = sshll.u32 %s199, 4
          %s209 = int_to_ptr.vmem [resolvable:$true] %s208
          %211 = dma.hbm_to_vmem [thread:$0]  %s207, 128, %s209, %s196
        $region36: #{tpu_custom_call.1} parent=31 // pred_fallthru
          _
      $region32: #{tpu_custom_call.1} parent=5 // pred_fallthru
        _
      %p212 = scmp.le.s32.totalorder 1, %s18
      %p213 = scmp.lt.s32.totalorder %s18, 3
      %p214 = pnand %p212, %p213
      %p215 = pneg %p214
      // Predicated region
      $region37: #{tpu_custom_call.1} parent=5 // pred_check
        _
      $region38: #{tpu_custom_call.1} parent=5 // pred_check_branch
        %217 = sbr.rel (%p214) target = $region40
      $region39: #{tpu_custom_call.1} parent=5 // pred_region
        %s218 = ssub.s32 %s18, 1
        %s219 = sand.u32 %s31, 1
        %s220 = scalar_lea.sflag [#allocation4], %s219
        %s221 = sand.u32 %s31, 1
        %s222 = smul.addr %s221, 8
        %s223 = scalar_lea.vmem [#allocation3], %s222
        // Predicated region
        $region41: #{tpu_custom_call.1} parent=39 // pred_check
          %p224 = pneg %p44
        $region42: #{tpu_custom_call.1} parent=39 // pred_check_branch
          %226 = sbr.rel (%p224) target = $region44
        $region43: #{tpu_custom_call.1} parent=39 // pred_region
          %228 = dma.done %s220, 128
        $region44: #{tpu_custom_call.1} parent=39 // pred_fallthru
          _
        // Predicated region
        $region45: #{tpu_custom_call.1} parent=39 // pred_check
          %p229 = pneg %p128
        $region46: #{tpu_custom_call.1} parent=39 // pred_check_branch
          %231 = sbr.rel (%p229) target = $region48
        $region47: #{tpu_custom_call.1} parent=39 // pred_region
          %233 = dma.done [#allocation6], 16
        $region48: #{tpu_custom_call.1} parent=39 // pred_fallthru
          _
        %234 = sfence
        %s235 = sand.u32 %s31, 1
        %s236 = scalar_lea.sflag [#allocation4], %s235
        %s237 = sand.u32 %s31, 1
        %s238 = smul.addr %s237, 8
        %s239 = scalar_lea.vmem [#allocation3], %s238
        %p240 = pneg %p44
        %p241 = pneg %p41
        %p242 = pneg %p65
        %p243 = pneg %p62
        %p244 = pneg %p86
        %p245 = pneg %p83
        %p246 = pneg %p107
        %p247 = pneg %p104
        %p248 = pneg %p128
        %p249 = pneg %p125
        %p250 = pneg %p154
        %p251 = pneg %p151
        %s252 = sand.u32 %s141, 1
        %s253 = scalar_lea.sflag [#allocation5], %s252
        %s254 = sand.u32 %s141, 1
        %s255 = smul.addr %s254, 8
        %s256 = scalar_lea.vmem [#allocation8], %s255
        %v257 = vld [vmem:[%s223] sm:$0xff]
        %259 = vst [vmem:[#allocation1] ss:$2 sm:$0xff] %v257
        %v260 = vld.sshfl [vmem:[#allocation1] sm:$0xff pattern:$0x75316420]
        %v261 = vld.sshfl [vmem:[#allocation1 + $0x8] sm:$0xff pattern:$0x75316420]
        %vm264 = vcmask 1043456
        %v265 = vsel %vm264, %v260, 0.0
        %v266 = vsel %vm264, %v261, 0.0
        %v267 = vadd.f32 %v265, %v266
        %268 = vadd.xlane.f32.xlu0 %v267
        %v269 = vpop.xlane.xlu0 %268
        %v270 = vrcp.pop 256.0
        %v271 = vmul.f32 256.0, %v270
        %v272 = vsub.f32 1.0, %v271
        %v273 = vmul.f32 %v270, %v272
        %v274 = vadd.f32 %v270, %v273
        %vm275 = vweird.f32 %v270
        %v276 = vsel %vm275, %v270, %v274
        %v277 = vmul.f32 %v269, %v276
        %278 = vst [vmem:[#allocation1] ss:$2 sm:$0xff] %v257
        %v279 = vld.sshfl [vmem:[#allocation1] sm:$0xff pattern:$0x75316420]
        %v280 = vld.sshfl [vmem:[#allocation1 + $0x8] sm:$0xff pattern:$0x75316420]
        %v283 = vsel %vm264, %v279, -inf
        %v284 = vsel %vm264, %v280, -inf
        %v285 = vmax.f32 %v283, %v284
        %286 = vmax.xlane.f32.xlu0 %v285
        %v287 = vpop.xlane.xlu0 %286
        %v288 = vld [vmem:[%s1] sm:$0xf]
        %v289 = vld [vmem:[%s2] sm:$0xf]
        %v290 = vmul.f32 %v277, %v288
        %vm291 = vcmask 3072
        %v292 = vsel %vm291, %v290, 0.0
        %v293 = vrot.slane %v292, 4
        %v294 = vadd.f32 %v292, %v293
        %v295 = vrot.slane %v294, 2
        %v296 = vadd.f32 %v294, %v295
        %v297 = vrot.slane %v296, 1
        %v298 = vadd.f32 %v296, %v297
        %v299 = vmax.f32 %v298, 0.0
        %v300 = vmul.f32 %v299, %v289
        %v301 = vadd.f32 %v300, 0.0
        %v302 = vmul.f32 %v287, %v288
        %v303 = vsel %vm291, %v302, 0.0
        %v304 = vrot.slane %v303, 4
        %v305 = vadd.f32 %v303, %v304
        %v306 = vrot.slane %v305, 2
        %v307 = vadd.f32 %v305, %v306
        %v308 = vrot.slane %v307, 1
        %v309 = vadd.f32 %v307, %v308
        %v310 = vmax.f32 %v309, 0.0
        %v311 = vmul.f32 %v310, %v289
        %v312 = vadd.f32 %v311, 0.0
        %v313 = vadd.f32 %v301, %v312
        %v314 = vxor.u32 %v313, 2147483648
        %v315 = vmul.f32 %v314, 1.442695
        %v316 = vpow.pop %v315
        %v317 = vadd.f32 %v316, 1.0
        %v318 = vrcp.pop %v317
        %v319 = vmul.f32 %v317, %v318
        %v320 = vsub.f32 1.0, %v319
        %v321 = vmul.f32 %v318, %v320
        %v322 = vadd.f32 %v318, %v321
        %vm323 = vweird.f32 %v317
        %vm324 = vweird.f32 %v318
        %vm325 = vmor %vm323, %vm324
        %v326 = vsel %vm325, %v318, %v322
        %v327 = vand.u32 2147483647, %v317
        %vm328 = vcmp.eq.f32.partialorder %v327, 8.507059e+37
        %v329 = vand.u32 %v317, 2147483648
        %v330 = vor.u32 1.1754944e-38, %v329
        %v331 = vsel %vm328, %v330, %v326
        %v332 = vmul.f32 1.0, %v331
        %334 = vset.pattern.permute.xlu0 0
        %335 = vperm.xlu0 %334, %v332
        %v336 = vpop.permute.xlu0 %335
        %v338 = vunpack.c.l.s4 839922192
        %v339 = vunpack.c.0.s8 %v338
        %v340 = vperm.slane %v336, %v339
        %v342 = vmul.f32 %v257, %v340
        %344 = vst [vmem:[#allocation1] ss:$2 sm:$0xff] %v342
        %v345 = vld.sshfl [vmem:[#allocation1] sm:$0xff pattern:$0x75316420]
        %v346 = vld.sshfl [vmem:[#allocation1 + $0x8] sm:$0xff pattern:$0x75316420]
        %v349 = vsel %vm264, %v345, 0.0
        %v350 = vrot.slane %v349, 4
        %v351 = vadd.f32 %v349, %v350
        %v352 = vrot.slane %v351, 2
        %v353 = vadd.f32 %v351, %v352
        %v354 = vrot.slane %v353, 1
        %v355 = vadd.f32 %v353, %v354
        %v356 = vsel %vm264, %v346, 0.0
        %v357 = vrot.slane %v356, 4
        %v358 = vadd.f32 %v356, %v357
        %v359 = vrot.slane %v358, 2
        %v360 = vadd.f32 %v358, %v359
        %v361 = vrot.slane %v360, 1
        %v362 = vadd.f32 %v360, %v361
        %v363 = vadd.f32 %v355, 0.0
        %v364 = vadd.f32 %v362, 0.0
        %365 = vst [vmem:[#allocation1] ss:$2 sm:$0xff] %v342
        %v366 = vld.sshfl [vmem:[#allocation1] sm:$0xff pattern:$0x75316420]
        %v367 = vld.sshfl [vmem:[#allocation1 + $0x8] sm:$0xff pattern:$0x75316420]
        %v370 = vsel %vm264, %v366, -inf
        %v371 = vrot.slane %v370, 4
        %v372 = vmax.f32 %v370, %v371
        %v373 = vrot.slane %v372, 2
        %v374 = vmax.f32 %v372, %v373
        %v375 = vrot.slane %v374, 1
        %v376 = vmax.f32 %v374, %v375
        %v377 = vsel %vm264, %v367, -inf
        %v378 = vrot.slane %v377, 4
        %v379 = vmax.f32 %v377, %v378
        %v380 = vrot.slane %v379, 2
        %v381 = vmax.f32 %v379, %v380
        %v382 = vrot.slane %v381, 1
        %v383 = vmax.f32 %v381, %v382
        %v384 = vmul.f32 %v363, 0.25
        %v385 = vmul.f32 %v364, 0.25
        %vm386 = vcmask 1042024
        %387 = vst.msk [vmem:[#allocation2] sm:$0x3] %vm386, 0.0
        %vm388 = vcmask 410624
        %389 = vst.msk [vmem:[#allocation2 + $0x6] sm:$0x3] %vm388, 0.0
        %vm390 = vcmask 1040384
        %v391 = vsel %vm390, %v384, %v376
        %v392 = vsel %vm390, %v385, %v383
        %v395 = vrot.slane %v392, 6
        %vm396 = vcmask 1041408
        %v397 = vsel %vm396, %v391, %v395
        %399 = vst [vmem:[#allocation2 + $0x2] sm:$0xf] %v397
        %v400 = vld [vmem:[%s3] sm:$0x3]
        %v401 = vlaneseq
        %v402 = vshrl.u32 %v401, 7
        %v403 = vcvt.s32.f32 %v402
        %s404 = sld [smem:[#allocation7]]
        %s405 = sld [smem:[#allocation7 + $0x31]]
        %s406 = ssub.f32 %s405, %s404
        %v407 = vstv %s406
        %v408 = vmul.f32 %v407, %v403
        %v409 = vstv %s404
        %v410 = vadd.f32 %v409, %v408
        %v411 = vld [vmem:[#allocation2] sm:$0x3f]
        %413 = vst [vmem:[#allocation1] ss:$4 sm:$0xff] %v411
        %v414 = vld.sshfl [vmem:[#allocation1] sm:$0xff pattern:$0x73625140]
        %v415 = vld.sshfl [vmem:[#allocation1 + $0x8] sm:$0xff pattern:$0x73625140]
        %v416 = vld.sshfl [vmem:[#allocation1 + $0x10] sm:$0xff pattern:$0x73625140]
        %417 = vrot.lane.b32.xlu0 %v414, 51
        %v418 = vpop.permute.xlu0 %417
        %419 = vrot.lane.b32.xlu0 %v415, 51
        %v420 = vpop.permute.xlu0 %419
        %421 = vrot.lane.b32.xlu0 %v416, 51
        %v422 = vpop.permute.xlu0 %421
        %vm423 = vcmask 416768
        %v424 = vsel %vm423, %v418, %v420
        %v425 = vsel %vm423, %v420, %v422
        %v428 = vmul.f32 %v410, %v424
        %v429 = vmul.f32 %v410, %v425
        %v430 = vadd.f32 %v428, 0.0
        %v431 = vadd.f32 %v429, 0.0
        %s432 = sld [smem:[#allocation7 + $0x7]]
        %s433 = sld [smem:[#allocation7 + $0x38]]
        %s434 = ssub.f32 %s433, %s432
        %v435 = vstv %s434
        %v436 = vmul.f32 %v435, %v403
        %v437 = vstv %s432
        %v438 = vadd.f32 %v437, %v436
        %v439 = vld [vmem:[#allocation2] sm:$0x3f]
        %441 = vst [vmem:[#allocation1] ss:$4 sm:$0xff] %v439
        %v442 = vld.sshfl [vmem:[#allocation1] sm:$0xff pattern:$0x73625140]
        %v443 = vld.sshfl [vmem:[#allocation1 + $0x8] sm:$0xff pattern:$0x73625140]
        %v444 = vld.sshfl [vmem:[#allocation1 + $0x10] sm:$0xff pattern:$0x73625140]
        %445 = vrot.lane.b32.xlu0 %v442, 35
        %v446 = vpop.permute.xlu0 %445
        %447 = vrot.lane.b32.xlu0 %v443, 35
        %v448 = vpop.permute.xlu0 %447
        %449 = vrot.lane.b32.xlu0 %v444, 35
        %v450 = vpop.permute.xlu0 %449
        %vm451 = vcmask 285696
        %v452 = vsel %vm451, %v446, %v448
        %v453 = vsel %vm451, %v448, %v450
        %v456 = vmul.f32 %v438, %v452
        %v457 = vmul.f32 %v438, %v453
        %v458 = vadd.f32 %v430, %v456
        %v459 = vadd.f32 %v431, %v457
        %s460 = sld [smem:[#allocation7 + $0xe]]
        %s461 = sld [smem:[#allocation7 + $0x3f]]
        %s462 = ssub.f32 %s461, %s460
        %v463 = vstv %s462
        %v464 = vmul.f32 %v463, %v403
        %v465 = vstv %s460
        %v466 = vadd.f32 %v465, %v464
        %v467 = vld [vmem:[#allocation2] sm:$0x3f]
        %469 = vst [vmem:[#allocation1] ss:$4 sm:$0xff] %v467
        %v470 = vld.sshfl [vmem:[#allocation1] sm:$0xff pattern:$0x73625140]
        %v471 = vld.sshfl [vmem:[#allocation1 + $0x8] sm:$0xff pattern:$0x73625140]
        %v472 = vld.sshfl [vmem:[#allocation1 + $0x10] sm:$0xff pattern:$0x73625140]
        %473 = vrot.lane.b32.xlu0 %v470, 19
        %v474 = vpop.permute.xlu0 %473
        %475 = vrot.lane.b32.xlu0 %v471, 19
        %v476 = vpop.permute.xlu0 %475
        %477 = vrot.lane.b32.xlu0 %v472, 19
        %v478 = vpop.permute.xlu0 %477
        %vm479 = vcmask 154624
        %v480 = vsel %vm479, %v474, %v476
        %v481 = vsel %vm479, %v476, %v478
        %v484 = vmul.f32 %v466, %v480
        %v485 = vmul.f32 %v466, %v481
        %v486 = vadd.f32 %v458, %v484
        %v487 = vadd.f32 %v459, %v485
        %s488 = sld [smem:[#allocation7 + $0x15]]
        %s489 = sld [smem:[#allocation7 + $0x46]]
        %s490 = ssub.f32 %s489, %s488
        %v491 = vstv %s490
        %v492 = vmul.f32 %v491, %v403
        %v493 = vstv %s488
        %v494 = vadd.f32 %v493, %v492
        %v495 = vld [vmem:[#allocation2] sm:$0x3f]
        %497 = vst [vmem:[#allocation1] ss:$4 sm:$0xff] %v495
        %v498 = vld.sshfl [vmem:[#allocation1] sm:$0xff pattern:$0x73625140]
        %v499 = vld.sshfl [vmem:[#allocation1 + $0x8] sm:$0xff pattern:$0x73625140]
        %v500 = vld.sshfl [vmem:[#allocation1 + $0x10] sm:$0xff pattern:$0x73625140]
        %501 = vrot.lane.b32.xlu0 %v498, 3
        %v502 = vpop.permute.xlu0 %501
        %503 = vrot.lane.b32.xlu0 %v499, 3
        %v504 = vpop.permute.xlu0 %503
        %505 = vrot.lane.b32.xlu0 %v500, 3
        %v506 = vpop.permute.xlu0 %505
        %vm507 = vcmask 23552
        %v508 = vsel %vm507, %v502, %v504
        %v509 = vsel %vm507, %v504, %v506
        %v512 = vmul.f32 %v494, %v508
        %v513 = vmul.f32 %v494, %v509
        %v514 = vadd.f32 %v486, %v512
        %v515 = vadd.f32 %v487, %v513
        %s516 = sld [smem:[#allocation7 + $0x1c]]
        %s517 = sld [smem:[#allocation7 + $0x4d]]
        %s518 = ssub.f32 %s517, %s516
        %v519 = vstv %s518
        %v520 = vmul.f32 %v519, %v403
        %v521 = vstv %s516
        %v522 = vadd.f32 %v521, %v520
        %v523 = vld [vmem:[#allocation2 + $0x2] sm:$0x3f]
        %525 = vst [vmem:[#allocation1] ss:$4 sm:$0xff] %v523
        %v526 = vld.sshfl [vmem:[#allocation1] sm:$0xff pattern:$0x73625140]
        %v527 = vld.sshfl [vmem:[#allocation1 + $0x8] sm:$0xff pattern:$0x73625140]
        %v528 = vld.sshfl [vmem:[#allocation1 + $0x10] sm:$0xff pattern:$0x73625140]
        %529 = vrot.lane.b32.xlu0 %v526, 115
        %v530 = vpop.permute.xlu0 %529
        %531 = vrot.lane.b32.xlu0 %v527, 115
        %v532 = vpop.permute.xlu0 %531
        %533 = vrot.lane.b32.xlu0 %v528, 115
        %v534 = vpop.permute.xlu0 %533
        %vm535 = vcmask 941056
        %v536 = vsel %vm535, %v530, %v532
        %v537 = vsel %vm535, %v532, %v534
        %v540 = vmul.f32 %v522, %v536
        %v541 = vmul.f32 %v522, %v537
        %v542 = vadd.f32 %v514, %v540
        %v543 = vadd.f32 %v515, %v541
        %s544 = sld [smem:[#allocation7 + $0x23]]
        %s545 = sld [smem:[#allocation7 + $0x54]]
        %s546 = ssub.f32 %s545, %s544
        %v547 = vstv %s546
        %v548 = vmul.f32 %v547, %v403
        %v549 = vstv %s544
        %v550 = vadd.f32 %v549, %v548
        %v551 = vld [vmem:[#allocation2 + $0x2] sm:$0x3f]
        %553 = vst [vmem:[#allocation1] ss:$4 sm:$0xff] %v551
        %v554 = vld.sshfl [vmem:[#allocation1] sm:$0xff pattern:$0x73625140]
        %v555 = vld.sshfl [vmem:[#allocation1 + $0x8] sm:$0xff pattern:$0x73625140]
        %v556 = vld.sshfl [vmem:[#allocation1 + $0x10] sm:$0xff pattern:$0x73625140]
        %557 = vrot.lane.b32.xlu0 %v554, 99
        %v558 = vpop.permute.xlu0 %557
        %559 = vrot.lane.b32.xlu0 %v555, 99
        %v560 = vpop.permute.xlu0 %559
        %561 = vrot.lane.b32.xlu0 %v556, 99
        %v562 = vpop.permute.xlu0 %561
        %vm563 = vcmask 809984
        %v564 = vsel %vm563, %v558, %v560
        %v565 = vsel %vm563, %v560, %v562
        %v568 = vmul.f32 %v550, %v564
        %v569 = vmul.f32 %v550, %v565
        %v570 = vadd.f32 %v542, %v568
        %v571 = vadd.f32 %v543, %v569
        %s572 = sld [smem:[#allocation7 + $0x2a]]
        %s573 = sld [smem:[#allocation7 + $0x5b]]
        %s574 = ssub.f32 %s573, %s572
        %v575 = vstv %s574
        %v576 = vmul.f32 %v575, %v403
        %v577 = vstv %s572
        %v578 = vadd.f32 %v577, %v576
        %v579 = vld [vmem:[#allocation2 + $0x2] sm:$0x3f]
        %581 = vst [vmem:[#allocation1] ss:$4 sm:$0xff] %v579
        %v582 = vld.sshfl [vmem:[#allocation1] sm:$0xff pattern:$0x73625140]
        %v583 = vld.sshfl [vmem:[#allocation1 + $0x8] sm:$0xff pattern:$0x73625140]
        %v584 = vld.sshfl [vmem:[#allocation1 + $0x10] sm:$0xff pattern:$0x73625140]
        %585 = vrot.lane.b32.xlu0 %v582, 83
        %v586 = vpop.permute.xlu0 %585
        %587 = vrot.lane.b32.xlu0 %v583, 83
        %v588 = vpop.permute.xlu0 %587
        %589 = vrot.lane.b32.xlu0 %v584, 83
        %v590 = vpop.permute.xlu0 %589
        %vm591 = vcmask 678912
        %v592 = vsel %vm591, %v586, %v588
        %v593 = vsel %vm591, %v588, %v590
        %v596 = vmul.f32 %v578, %v592
        %v597 = vmul.f32 %v578, %v593
        %v598 = vadd.f32 %v570, %v596
        %v599 = vadd.f32 %v571, %v597
        %v600 = vadd.s32 %v400, 4294967293
        %vm601 = vcmp.ge.s32.totalorder %v600, 0
        %vm602 = vcmp.lt.s32.totalorder %v600, 16
        %vm603 = vmand %vm601, %vm602
        %v604 = vsel %vm603, 1, 0
        %v605 = vperm.slane %v604, 0
        %v606 = vperm.slane %v604, 1
        %vm607 = vcmp.eq.s32.totalorder %v605, 1
        %vm608 = vcmp.eq.s32.totalorder %v606, 1
        %v609 = vsel %vm607, %v598, 0.0
        %v610 = vsel %vm608, %v599, 0.0
        %v611 = vadd.f32 %v609, 0.0
        %v612 = vadd.f32 %v610, 0.0
        %s613 = sld [smem:[#allocation7 + $0x1]]
        %s614 = sld [smem:[#allocation7 + $0x32]]
        %s615 = ssub.f32 %s614, %s613
        %v616 = vstv %s615
        %v617 = vmul.f32 %v616, %v403
        %v618 = vstv %s613
        %v619 = vadd.f32 %v618, %v617
        %v620 = vld [vmem:[#allocation2] sm:$0x3f]
        %622 = vst [vmem:[#allocation1] ss:$4 sm:$0xff] %v620
        %v623 = vld.sshfl [vmem:[#allocation1] sm:$0xff pattern:$0x73625140]
        %v624 = vld.sshfl [vmem:[#allocation1 + $0x8] sm:$0xff pattern:$0x73625140]
        %v625 = vld.sshfl [vmem:[#allocation1 + $0x10] sm:$0xff pattern:$0x73625140]
        %626 = vrot.lane.b32.xlu0 %v623, 50
        %v627 = vpop.permute.xlu0 %626
        %628 = vrot.lane.b32.xlu0 %v624, 50
        %v629 = vpop.permute.xlu0 %628
        %630 = vrot.lane.b32.xlu0 %v625, 50
        %v631 = vpop.permute.xlu0 %630
        %vm632 = vcmask 408576
        %v633 = vsel %vm632, %v627, %v629
        %v634 = vsel %vm632, %v629, %v631
        %v637 = vmul.f32 %v619, %v633
        %v638 = vmul.f32 %v619, %v634
        %v639 = vadd.f32 %v637, 0.0
        %v640 = vadd.f32 %v638, 0.0
        %s641 = sld [smem:[#allocation7 + $0x8]]
        %s642 = sld [smem:[#allocation7 + $0x39]]
        %s643 = ssub.f32 %s642, %s641
        %v644 = vstv %s643
        %v645 = vmul.f32 %v644, %v403
        %v646 = vstv %s641
        %v647 = vadd.f32 %v646, %v645
        %v648 = vld [vmem:[#allocation2] sm:$0x3f]
        %650 = vst [vmem:[#allocation1] ss:$4 sm:$0xff] %v648
        %v651 = vld.sshfl [vmem:[#allocation1] sm:$0xff pattern:$0x73625140]
        %v652 = vld.sshfl [vmem:[#allocation1 + $0x8] sm:$0xff pattern:$0x73625140]
        %v653 = vld.sshfl [vmem:[#allocation1 + $0x10] sm:$0xff pattern:$0x73625140]
        %654 = vrot.lane.b32.xlu0 %v651, 34
        %v655 = vpop.permute.xlu0 %654
        %656 = vrot.lane.b32.xlu0 %v652, 34
        %v657 = vpop.permute.xlu0 %656
        %658 = vrot.lane.b32.xlu0 %v653, 34
        %v659 = vpop.permute.xlu0 %658
        %vm660 = vcmask 277504
        %v661 = vsel %vm660, %v655, %v657
        %v662 = vsel %vm660, %v657, %v659
        %v665 = vmul.f32 %v647, %v661
        %v666 = vmul.f32 %v647, %v662
        %v667 = vadd.f32 %v639, %v665
        %v668 = vadd.f32 %v640, %v666
        %s669 = sld [smem:[#allocation7 + $0xf]]
        %s670 = sld [smem:[#allocation7 + $0x40]]
        %s671 = ssub.f32 %s670, %s669
        %v672 = vstv %s671
        %v673 = vmul.f32 %v672, %v403
        %v674 = vstv %s669
        %v675 = vadd.f32 %v674, %v673
        %v676 = vld [vmem:[#allocation2] sm:$0x3f]
        %678 = vst [vmem:[#allocation1] ss:$4 sm:$0xff] %v676
        %v679 = vld.sshfl [vmem:[#allocation1] sm:$0xff pattern:$0x73625140]
        %v680 = vld.sshfl [vmem:[#allocation1 + $0x8] sm:$0xff pattern:$0x73625140]
        %v681 = vld.sshfl [vmem:[#allocation1 + $0x10] sm:$0xff pattern:$0x73625140]
        %682 = vrot.lane.b32.xlu0 %v679, 18
        %v683 = vpop.permute.xlu0 %682
        %684 = vrot.lane.b32.xlu0 %v680, 18
        %v685 = vpop.permute.xlu0 %684
        %686 = vrot.lane.b32.xlu0 %v681, 18
        %v687 = vpop.permute.xlu0 %686
        %vm688 = vcmask 146432
        %v689 = vsel %vm688, %v683, %v685
        %v690 = vsel %vm688, %v685, %v687
        %v693 = vmul.f32 %v675, %v689
        %v694 = vmul.f32 %v675, %v690
        %v695 = vadd.f32 %v667, %v693
        %v696 = vadd.f32 %v668, %v694
        %s697 = sld [smem:[#allocation7 + $0x16]]
        %s698 = sld [smem:[#allocation7 + $0x47]]
        %s699 = ssub.f32 %s698, %s697
        %v700 = vstv %s699
        %v701 = vmul.f32 %v700, %v403
        %v702 = vstv %s697
        %v703 = vadd.f32 %v702, %v701
        %v704 = vld [vmem:[#allocation2] sm:$0x3f]
        %706 = vst [vmem:[#allocation1] ss:$4 sm:$0xff] %v704
        %v707 = vld.sshfl [vmem:[#allocation1] sm:$0xff pattern:$0x73625140]
        %v708 = vld.sshfl [vmem:[#allocation1 + $0x8] sm:$0xff pattern:$0x73625140]
        %v709 = vld.sshfl [vmem:[#allocation1 + $0x10] sm:$0xff pattern:$0x73625140]
        %710 = vrot.lane.b32.xlu0 %v707, 2
        %v711 = vpop.permute.xlu0 %710
        %712 = vrot.lane.b32.xlu0 %v708, 2
        %v713 = vpop.permute.xlu0 %712
        %714 = vrot.lane.b32.xlu0 %v709, 2
        %v715 = vpop.permute.xlu0 %714
        %vm716 = vcmask 15360
        %v717 = vsel %vm716, %v711, %v713
        %v718 = vsel %vm716, %v713, %v715
        %v721 = vmul.f32 %v703, %v717
        %v722 = vmul.f32 %v703, %v718
        %v723 = vadd.f32 %v695, %v721
        %v724 = vadd.f32 %v696, %v722
        %s725 = sld [smem:[#allocation7 + $0x1d]]
        %s726 = sld [smem:[#allocation7 + $0x4e]]
        %s727 = ssub.f32 %s726, %s725
        %v728 = vstv %s727
        %v729 = vmul.f32 %v728, %v403
        %v730 = vstv %s725
        %v731 = vadd.f32 %v730, %v729
        %v732 = vld [vmem:[#allocation2 + $0x2] sm:$0x3f]
        %734 = vst [vmem:[#allocation1] ss:$4 sm:$0xff] %v732
        %v735 = vld.sshfl [vmem:[#allocation1] sm:$0xff pattern:$0x73625140]
        %v736 = vld.sshfl [vmem:[#allocation1 + $0x8] sm:$0xff pattern:$0x73625140]
        %v737 = vld.sshfl [vmem:[#allocation1 + $0x10] sm:$0xff pattern:$0x73625140]
        %738 = vrot.lane.b32.xlu0 %v735, 114
        %v739 = vpop.permute.xlu0 %738
        %740 = vrot.lane.b32.xlu0 %v736, 114
        %v741 = vpop.permute.xlu0 %740
        %742 = vrot.lane.b32.xlu0 %v737, 114
        %v743 = vpop.permute.xlu0 %742
        %vm744 = vcmask 932864
        %v745 = vsel %vm744, %v739, %v741
        %v746 = vsel %vm744, %v741, %v743
        %v749 = vmul.f32 %v731, %v745
        %v750 = vmul.f32 %v731, %v746
        %v751 = vadd.f32 %v723, %v749
        %v752 = vadd.f32 %v724, %v750
        %s753 = sld [smem:[#allocation7 + $0x24]]
        %s754 = sld [smem:[#allocation7 + $0x55]]
        %s755 = ssub.f32 %s754, %s753
        %v756 = vstv %s755
        %v757 = vmul.f32 %v756, %v403
        %v758 = vstv %s753
        %v759 = vadd.f32 %v758, %v757
        %v760 = vld [vmem:[#allocation2 + $0x2] sm:$0x3f]
        %762 = vst [vmem:[#allocation1] ss:$4 sm:$0xff] %v760
        %v763 = vld.sshfl [vmem:[#allocation1] sm:$0xff pattern:$0x73625140]
        %v764 = vld.sshfl [vmem:[#allocation1 + $0x8] sm:$0xff pattern:$0x73625140]
        %v765 = vld.sshfl [vmem:[#allocation1 + $0x10] sm:$0xff pattern:$0x73625140]
        %766 = vrot.lane.b32.xlu0 %v763, 98
        %v767 = vpop.permute.xlu0 %766
        %768 = vrot.lane.b32.xlu0 %v764, 98
        %v769 = vpop.permute.xlu0 %768
        %770 = vrot.lane.b32.xlu0 %v765, 98
        %v771 = vpop.permute.xlu0 %770
        %vm772 = vcmask 801792
        %v773 = vsel %vm772, %v767, %v769
        %v774 = vsel %vm772, %v769, %v771
        %v777 = vmul.f32 %v759, %v773
        %v778 = vmul.f32 %v759, %v774
        %v779 = vadd.f32 %v751, %v777
        %v780 = vadd.f32 %v752, %v778
        %s781 = sld [smem:[#allocation7 + $0x2b]]
        %s782 = sld [smem:[#allocation7 + $0x5c]]
        %s783 = ssub.f32 %s782, %s781
        %v784 = vstv %s783
        %v785 = vmul.f32 %v784, %v403
        %v786 = vstv %s781
        %v787 = vadd.f32 %v786, %v785
        %v788 = vld [vmem:[#allocation2 + $0x2] sm:$0x3f]
        %790 = vst [vmem:[#allocation1] ss:$4 sm:$0xff] %v788
        %v791 = vld.sshfl [vmem:[#allocation1] sm:$0xff pattern:$0x73625140]
        %v792 = vld.sshfl [vmem:[#allocation1 + $0x8] sm:$0xff pattern:$0x73625140]
        %v793 = vld.sshfl [vmem:[#allocation1 + $0x10] sm:$0xff pattern:$0x73625140]
        %794 = vrot.lane.b32.xlu0 %v791, 82
        %v795 = vpop.permute.xlu0 %794
        %796 = vrot.lane.b32.xlu0 %v792, 82
        %v797 = vpop.permute.xlu0 %796
        %798 = vrot.lane.b32.xlu0 %v793, 82
        %v799 = vpop.permute.xlu0 %798
        %vm800 = vcmask 670720
        %v801 = vsel %vm800, %v795, %v797
        %v802 = vsel %vm800, %v797, %v799
        %v805 = vmul.f32 %v787, %v801
        %v806 = vmul.f32 %v787, %v802
        %v807 = vadd.f32 %v779, %v805
        %v808 = vadd.f32 %v780, %v806
        %v809 = vadd.s32 %v400, 4294967294
        %vm810 = vcmp.ge.s32.totalorder %v809, 0
        %vm811 = vcmp.lt.s32.totalorder %v809, 16
        %vm812 = vmand %vm810, %vm811
        %v813 = vsel %vm812, 1, 0
        %v814 = vperm.slane %v813, 0
        %v815 = vperm.slane %v813, 1
        %vm816 = vcmp.eq.s32.totalorder %v814, 1
        %vm817 = vcmp.eq.s32.totalorder %v815, 1
        %v818 = vsel %vm816, %v807, 0.0
        %v819 = vsel %vm817, %v808, 0.0
        %v820 = vadd.f32 %v611, %v818
        %v821 = vadd.f32 %v612, %v819
        %s822 = sld [smem:[#allocation7 + $0x2]]
        %s823 = sld [smem:[#allocation7 + $0x33]]
        %s824 = ssub.f32 %s823, %s822
        %v825 = vstv %s824
        %v826 = vmul.f32 %v825, %v403
        %v827 = vstv %s822
        %v828 = vadd.f32 %v827, %v826
        %v829 = vld [vmem:[#allocation2] sm:$0x3f]
        %831 = vst [vmem:[#allocation1] ss:$4 sm:$0xff] %v829
        %v832 = vld.sshfl [vmem:[#allocation1] sm:$0xff pattern:$0x73625140]
        %v833 = vld.sshfl [vmem:[#allocation1 + $0x8] sm:$0xff pattern:$0x73625140]
        %v834 = vld.sshfl [vmem:[#allocation1 + $0x10] sm:$0xff pattern:$0x73625140]
        %835 = vrot.lane.b32.xlu0 %v832, 49
        %v836 = vpop.permute.xlu0 %835
        %837 = vrot.lane.b32.xlu0 %v833, 49
        %v838 = vpop.permute.xlu0 %837
        %839 = vrot.lane.b32.xlu0 %v834, 49
        %v840 = vpop.permute.xlu0 %839
        %vm841 = vcmask 400384
        %v842 = vsel %vm841, %v836, %v838
        %v843 = vsel %vm841, %v838, %v840
        %v846 = vmul.f32 %v828, %v842
        %v847 = vmul.f32 %v828, %v843
        %v848 = vadd.f32 %v846, 0.0
        %v849 = vadd.f32 %v847, 0.0
        %s850 = sld [smem:[#allocation7 + $0x9]]
        %s851 = sld [smem:[#allocation7 + $0x3a]]
        %s852 = ssub.f32 %s851, %s850
        %v853 = vstv %s852
        %v854 = vmul.f32 %v853, %v403
        %v855 = vstv %s850
        %v856 = vadd.f32 %v855, %v854
        %v857 = vld [vmem:[#allocation2] sm:$0x3f]
        %859 = vst [vmem:[#allocation1] ss:$4 sm:$0xff] %v857
        %v860 = vld.sshfl [vmem:[#allocation1] sm:$0xff pattern:$0x73625140]
        %v861 = vld.sshfl [vmem:[#allocation1 + $0x8] sm:$0xff pattern:$0x73625140]
        %v862 = vld.sshfl [vmem:[#allocation1 + $0x10] sm:$0xff pattern:$0x73625140]
        %863 = vrot.lane.b32.xlu0 %v860, 33
        %v864 = vpop.permute.xlu0 %863
        %865 = vrot.lane.b32.xlu0 %v861, 33
        %v866 = vpop.permute.xlu0 %865
        %867 = vrot.lane.b32.xlu0 %v862, 33
        %v868 = vpop.permute.xlu0 %867
        %vm869 = vcmask 269312
        %v870 = vsel %vm869, %v864, %v866
        %v871 = vsel %vm869, %v866, %v868
        %v874 = vmul.f32 %v856, %v870
        %v875 = vmul.f32 %v856, %v871
        %v876 = vadd.f32 %v848, %v874
        %v877 = vadd.f32 %v849, %v875
        %s878 = sld [smem:[#allocation7 + $0x10]]
        %s879 = sld [smem:[#allocation7 + $0x41]]
        %s880 = ssub.f32 %s879, %s878
        %v881 = vstv %s880
        %v882 = vmul.f32 %v881, %v403
        %v883 = vstv %s878
        %v884 = vadd.f32 %v883, %v882
        %v885 = vld [vmem:[#allocation2] sm:$0x3f]
        %887 = vst [vmem:[#allocation1] ss:$4 sm:$0xff] %v885
        %v888 = vld.sshfl [vmem:[#allocation1] sm:$0xff pattern:$0x73625140]
        %v889 = vld.sshfl [vmem:[#allocation1 + $0x8] sm:$0xff pattern:$0x73625140]
        %v890 = vld.sshfl [vmem:[#allocation1 + $0x10] sm:$0xff pattern:$0x73625140]
        %891 = vrot.lane.b32.xlu0 %v888, 17
        %v892 = vpop.permute.xlu0 %891
        %893 = vrot.lane.b32.xlu0 %v889, 17
        %v894 = vpop.permute.xlu0 %893
        %895 = vrot.lane.b32.xlu0 %v890, 17
        %v896 = vpop.permute.xlu0 %895
        %vm897 = vcmask 138240
        %v898 = vsel %vm897, %v892, %v894
        %v899 = vsel %vm897, %v894, %v896
        %v902 = vmul.f32 %v884, %v898
        %v903 = vmul.f32 %v884, %v899
        %v904 = vadd.f32 %v876, %v902
        %v905 = vadd.f32 %v877, %v903
        %s906 = sld [smem:[#allocation7 + $0x17]]
        %s907 = sld [smem:[#allocation7 + $0x48]]
        %s908 = ssub.f32 %s907, %s906
        %v909 = vstv %s908
        %v910 = vmul.f32 %v909, %v403
        %v911 = vstv %s906
        %v912 = vadd.f32 %v911, %v910
        %v913 = vld [vmem:[#allocation2] sm:$0x3f]
        %915 = vst [vmem:[#allocation1] ss:$4 sm:$0xff] %v913
        %v916 = vld.sshfl [vmem:[#allocation1] sm:$0xff pattern:$0x73625140]
        %v917 = vld.sshfl [vmem:[#allocation1 + $0x8] sm:$0xff pattern:$0x73625140]
        %v918 = vld.sshfl [vmem:[#allocation1 + $0x10] sm:$0xff pattern:$0x73625140]
        %919 = vrot.lane.b32.xlu0 %v916, 1
        %v920 = vpop.permute.xlu0 %919
        %921 = vrot.lane.b32.xlu0 %v917, 1
        %v922 = vpop.permute.xlu0 %921
        %923 = vrot.lane.b32.xlu0 %v918, 1
        %v924 = vpop.permute.xlu0 %923
        %vm925 = vcmask 7168
        %v926 = vsel %vm925, %v920, %v922
        %v927 = vsel %vm925, %v922, %v924
        %v930 = vmul.f32 %v912, %v926
        %v931 = vmul.f32 %v912, %v927
        %v932 = vadd.f32 %v904, %v930
        %v933 = vadd.f32 %v905, %v931
        %s934 = sld [smem:[#allocation7 + $0x1e]]
        %s935 = sld [smem:[#allocation7 + $0x4f]]
        %s936 = ssub.f32 %s935, %s934
        %v937 = vstv %s936
        %v938 = vmul.f32 %v937, %v403
        %v939 = vstv %s934
        %v940 = vadd.f32 %v939, %v938
        %v941 = vld [vmem:[#allocation2 + $0x2] sm:$0x3f]
        %943 = vst [vmem:[#allocation1] ss:$4 sm:$0xff] %v941
        %v944 = vld.sshfl [vmem:[#allocation1] sm:$0xff pattern:$0x73625140]
        %v945 = vld.sshfl [vmem:[#allocation1 + $0x8] sm:$0xff pattern:$0x73625140]
        %v946 = vld.sshfl [vmem:[#allocation1 + $0x10] sm:$0xff pattern:$0x73625140]
        %947 = vrot.lane.b32.xlu0 %v944, 113
        %v948 = vpop.permute.xlu0 %947
        %949 = vrot.lane.b32.xlu0 %v945, 113
        %v950 = vpop.permute.xlu0 %949
        %951 = vrot.lane.b32.xlu0 %v946, 113
        %v952 = vpop.permute.xlu0 %951
        %vm953 = vcmask 924672
        %v954 = vsel %vm953, %v948, %v950
        %v955 = vsel %vm953, %v950, %v952
        %v958 = vmul.f32 %v940, %v954
        %v959 = vmul.f32 %v940, %v955
        %v960 = vadd.f32 %v932, %v958
        %v961 = vadd.f32 %v933, %v959
        %s962 = sld [smem:[#allocation7 + $0x25]]
        %s963 = sld [smem:[#allocation7 + $0x56]]
        %s964 = ssub.f32 %s963, %s962
        %v965 = vstv %s964
        %v966 = vmul.f32 %v965, %v403
        %v967 = vstv %s962
        %v968 = vadd.f32 %v967, %v966
        %v969 = vld [vmem:[#allocation2 + $0x2] sm:$0x3f]
        %971 = vst [vmem:[#allocation1] ss:$4 sm:$0xff] %v969
        %v972 = vld.sshfl [vmem:[#allocation1] sm:$0xff pattern:$0x73625140]
        %v973 = vld.sshfl [vmem:[#allocation1 + $0x8] sm:$0xff pattern:$0x73625140]
        %v974 = vld.sshfl [vmem:[#allocation1 + $0x10] sm:$0xff pattern:$0x73625140]
        %975 = vrot.lane.b32.xlu0 %v972, 97
        %v976 = vpop.permute.xlu0 %975
        %977 = vrot.lane.b32.xlu0 %v973, 97
        %v978 = vpop.permute.xlu0 %977
        %979 = vrot.lane.b32.xlu0 %v974, 97
        %v980 = vpop.permute.xlu0 %979
        %vm981 = vcmask 793600
        %v982 = vsel %vm981, %v976, %v978
        %v983 = vsel %vm981, %v978, %v980
        %v986 = vmul.f32 %v968, %v982
        %v987 = vmul.f32 %v968, %v983
        %v988 = vadd.f32 %v960, %v986
        %v989 = vadd.f32 %v961, %v987
        %s990 = sld [smem:[#allocation7 + $0x2c]]
        %s991 = sld [smem:[#allocation7 + $0x5d]]
        %s992 = ssub.f32 %s991, %s990
        %v993 = vstv %s992
        %v994 = vmul.f32 %v993, %v403
        %v995 = vstv %s990
        %v996 = vadd.f32 %v995, %v994
        %v997 = vld [vmem:[#allocation2 + $0x2] sm:$0x3f]
        %999 = vst [vmem:[#allocation1] ss:$4 sm:$0xff] %v997
        %v1000 = vld.sshfl [vmem:[#allocation1] sm:$0xff pattern:$0x73625140]
        %v1001 = vld.sshfl [vmem:[#allocation1 + $0x8] sm:$0xff pattern:$0x73625140]
        %v1002 = vld.sshfl [vmem:[#allocation1 + $0x10] sm:$0xff pattern:$0x73625140]
        %1003 = vrot.lane.b32.xlu0 %v1000, 81
        %v1004 = vpop.permute.xlu0 %1003
        %1005 = vrot.lane.b32.xlu0 %v1001, 81
        %v1006 = vpop.permute.xlu0 %1005
        %1007 = vrot.lane.b32.xlu0 %v1002, 81
        %v1008 = vpop.permute.xlu0 %1007
        %vm1009 = vcmask 662528
        %v1010 = vsel %vm1009, %v1004, %v1006
        %v1011 = vsel %vm1009, %v1006, %v1008
        %v1014 = vmul.f32 %v996, %v1010
        %v1015 = vmul.f32 %v996, %v1011
        %v1016 = vadd.f32 %v988, %v1014
        %v1017 = vadd.f32 %v989, %v1015
        %v1018 = vadd.s32 %v400, 4294967295
        %vm1019 = vcmp.ge.s32.totalorder %v1018, 0
        %vm1020 = vcmp.lt.s32.totalorder %v1018, 16
        %vm1021 = vmand %vm1019, %vm1020
        %v1022 = vsel %vm1021, 1, 0
        %v1023 = vperm.slane %v1022, 0
        %v1024 = vperm.slane %v1022, 1
        %vm1025 = vcmp.eq.s32.totalorder %v1023, 1
        %vm1026 = vcmp.eq.s32.totalorder %v1024, 1
        %v1027 = vsel %vm1025, %v1016, 0.0
        %v1028 = vsel %vm1026, %v1017, 0.0
        %v1029 = vadd.f32 %v820, %v1027
        %v1030 = vadd.f32 %v821, %v1028
        %s1031 = sld [smem:[#allocation7 + $0x3]]
        %s1032 = sld [smem:[#allocation7 + $0x34]]
        %s1033 = ssub.f32 %s1032, %s1031
        %v1034 = vstv %s1033
        %v1035 = vmul.f32 %v1034, %v403
        %v1036 = vstv %s1031
        %v1037 = vadd.f32 %v1036, %v1035
        %v1038 = vld [vmem:[#allocation2] sm:$0x3f]
        %1040 = vst [vmem:[#allocation1] ss:$4 sm:$0xff] %v1038
        %v1041 = vld.sshfl [vmem:[#allocation1] sm:$0xff pattern:$0x73625140]
        %v1042 = vld.sshfl [vmem:[#allocation1 + $0x8] sm:$0xff pattern:$0x73625140]
        %v1043 = vld.sshfl [vmem:[#allocation1 + $0x10] sm:$0xff pattern:$0x73625140]
        %1044 = vrot.lane.b32.xlu0 %v1041, 48
        %v1045 = vpop.permute.xlu0 %1044
        %1046 = vrot.lane.b32.xlu0 %v1042, 48
        %v1047 = vpop.permute.xlu0 %1046
        %1048 = vrot.lane.b32.xlu0 %v1043, 48
        %v1049 = vpop.permute.xlu0 %1048
        %vm1050 = vcmask 392192
        %v1051 = vsel %vm1050, %v1045, %v1047
        %v1052 = vsel %vm1050, %v1047, %v1049
        %v1055 = vmul.f32 %v1037, %v1051
        %v1056 = vmul.f32 %v1037, %v1052
        %v1057 = vadd.f32 %v1055, 0.0
        %v1058 = vadd.f32 %v1056, 0.0
        %s1059 = sld [smem:[#allocation7 + $0xa]]
        %s1060 = sld [smem:[#allocation7 + $0x3b]]
        %s1061 = ssub.f32 %s1060, %s1059
        %v1062 = vstv %s1061
        %v1063 = vmul.f32 %v1062, %v403
        %v1064 = vstv %s1059
        %v1065 = vadd.f32 %v1064, %v1063
        %v1066 = vld [vmem:[#allocation2] sm:$0x3f]
        %1068 = vst [vmem:[#allocation1] ss:$4 sm:$0xff] %v1066
        %v1069 = vld.sshfl [vmem:[#allocation1] sm:$0xff pattern:$0x73625140]
        %v1070 = vld.sshfl [vmem:[#allocation1 + $0x8] sm:$0xff pattern:$0x73625140]
        %v1071 = vld.sshfl [vmem:[#allocation1 + $0x10] sm:$0xff pattern:$0x73625140]
        %1072 = vrot.lane.b32.xlu0 %v1069, 32
        %v1073 = vpop.permute.xlu0 %1072
        %1074 = vrot.lane.b32.xlu0 %v1070, 32
        %v1075 = vpop.permute.xlu0 %1074
        %1076 = vrot.lane.b32.xlu0 %v1071, 32
        %v1077 = vpop.permute.xlu0 %1076
        %vm1078 = vcmask 261120
        %v1079 = vsel %vm1078, %v1073, %v1075
        %v1080 = vsel %vm1078, %v1075, %v1077
        %v1083 = vmul.f32 %v1065, %v1079
        %v1084 = vmul.f32 %v1065, %v1080
        %v1085 = vadd.f32 %v1057, %v1083
        %v1086 = vadd.f32 %v1058, %v1084
        %s1087 = sld [smem:[#allocation7 + $0x11]]
        %s1088 = sld [smem:[#allocation7 + $0x42]]
        %s1089 = ssub.f32 %s1088, %s1087
        %v1090 = vstv %s1089
        %v1091 = vmul.f32 %v1090, %v403
        %v1092 = vstv %s1087
        %v1093 = vadd.f32 %v1092, %v1091
        %v1094 = vld [vmem:[#allocation2] sm:$0x3f]
        %1096 = vst [vmem:[#allocation1] ss:$4 sm:$0xff] %v1094
        %v1097 = vld.sshfl [vmem:[#allocation1] sm:$0xff pattern:$0x73625140]
        %v1098 = vld.sshfl [vmem:[#allocation1 + $0x8] sm:$0xff pattern:$0x73625140]
        %v1099 = vld.sshfl [vmem:[#allocation1 + $0x10] sm:$0xff pattern:$0x73625140]
        %1100 = vrot.lane.b32.xlu0 %v1097, 16
        %v1101 = vpop.permute.xlu0 %1100
        %1102 = vrot.lane.b32.xlu0 %v1098, 16
        %v1103 = vpop.permute.xlu0 %1102
        %1104 = vrot.lane.b32.xlu0 %v1099, 16
        %v1105 = vpop.permute.xlu0 %1104
        %vm1106 = vcmask 130048
        %v1107 = vsel %vm1106, %v1101, %v1103
        %v1108 = vsel %vm1106, %v1103, %v1105
        %v1111 = vmul.f32 %v1093, %v1107
        %v1112 = vmul.f32 %v1093, %v1108
        %v1113 = vadd.f32 %v1085, %v1111
        %v1114 = vadd.f32 %v1086, %v1112
        %s1115 = sld [smem:[#allocation7 + $0x18]]
        %s1116 = sld [smem:[#allocation7 + $0x49]]
        %s1117 = ssub.f32 %s1116, %s1115
        %v1118 = vstv %s1117
        %v1119 = vmul.f32 %v1118, %v403
        %v1120 = vstv %s1115
        %v1121 = vadd.f32 %v1120, %v1119
        %v1122 = vld [vmem:[#allocation2 + $0x2] sm:$0xf]
        %1124 = vst [vmem:[#allocation1] ss:$4 sm:$0xff] %v1122
        %v1125 = vld.sshfl [vmem:[#allocation1] sm:$0xff pattern:$0x73625140]
        %v1126 = vld.sshfl [vmem:[#allocation1 + $0x8] sm:$0xff pattern:$0x73625140]
        %v1129 = vmul.f32 %v1121, %v1125
        %v1130 = vmul.f32 %v1121, %v1126
        %v1131 = vadd.f32 %v1113, %v1129
        %v1132 = vadd.f32 %v1114, %v1130
        %s1133 = sld [smem:[#allocation7 + $0x1f]]
        %s1134 = sld [smem:[#allocation7 + $0x50]]
        %s1135 = ssub.f32 %s1134, %s1133
        %v1136 = vstv %s1135
        %v1137 = vmul.f32 %v1136, %v403
        %v1138 = vstv %s1133
        %v1139 = vadd.f32 %v1138, %v1137
        %v1140 = vld [vmem:[#allocation2 + $0x2] sm:$0x3f]
        %1142 = vst [vmem:[#allocation1] ss:$4 sm:$0xff] %v1140
        %v1143 = vld.sshfl [vmem:[#allocation1] sm:$0xff pattern:$0x73625140]
        %v1144 = vld.sshfl [vmem:[#allocation1 + $0x8] sm:$0xff pattern:$0x73625140]
        %v1145 = vld.sshfl [vmem:[#allocation1 + $0x10] sm:$0xff pattern:$0x73625140]
        %1146 = vrot.lane.b32.xlu0 %v1143, 112
        %v1147 = vpop.permute.xlu0 %1146
        %1148 = vrot.lane.b32.xlu0 %v1144, 112
        %v1149 = vpop.permute.xlu0 %1148
        %1150 = vrot.lane.b32.xlu0 %v1145, 112
        %v1151 = vpop.permute.xlu0 %1150
        %vm1152 = vcmask 916480
        %v1153 = vsel %vm1152, %v1147, %v1149
        %v1154 = vsel %vm1152, %v1149, %v1151
        %v1157 = vmul.f32 %v1139, %v1153
        %v1158 = vmul.f32 %v1139, %v1154
        %v1159 = vadd.f32 %v1131, %v1157
        %v1160 = vadd.f32 %v1132, %v1158
        %s1161 = sld [smem:[#allocation7 + $0x26]]
        %s1162 = sld [smem:[#allocation7 + $0x57]]
        %s1163 = ssub.f32 %s1162, %s1161
        %v1164 = vstv %s1163
        %v1165 = vmul.f32 %v1164, %v403
        %v1166 = vstv %s1161
        %v1167 = vadd.f32 %v1166, %v1165
        %v1168 = vld [vmem:[#allocation2 + $0x2] sm:$0x3f]
        %1170 = vst [vmem:[#allocation1] ss:$4 sm:$0xff] %v1168
        %v1171 = vld.sshfl [vmem:[#allocation1] sm:$0xff pattern:$0x73625140]
        %v1172 = vld.sshfl [vmem:[#allocation1 + $0x8] sm:$0xff pattern:$0x73625140]
        %v1173 = vld.sshfl [vmem:[#allocation1 + $0x10] sm:$0xff pattern:$0x73625140]
        %1174 = vrot.lane.b32.xlu0 %v1171, 96
        %v1175 = vpop.permute.xlu0 %1174
        %1176 = vrot.lane.b32.xlu0 %v1172, 96
        %v1177 = vpop.permute.xlu0 %1176
        %1178 = vrot.lane.b32.xlu0 %v1173, 96
        %v1179 = vpop.permute.xlu0 %1178
        %vm1180 = vcmask 785408
        %v1181 = vsel %vm1180, %v1175, %v1177
        %v1182 = vsel %vm1180, %v1177, %v1179
        %v1185 = vmul.f32 %v1167, %v1181
        %v1186 = vmul.f32 %v1167, %v1182
        %v1187 = vadd.f32 %v1159, %v1185
        %v1188 = vadd.f32 %v1160, %v1186
        %s1189 = sld [smem:[#allocation7 + $0x2d]]
        %s1190 = sld [smem:[#allocation7 + $0x5e]]
        %s1191 = ssub.f32 %s1190, %s1189
        %v1192 = vstv %s1191
        %v1193 = vmul.f32 %v1192, %v403
        %v1194 = vstv %s1189
        %v1195 = vadd.f32 %v1194, %v1193
        %v1196 = vld [vmem:[#allocation2 + $0x2] sm:$0x3f]
        %1198 = vst [vmem:[#allocation1] ss:$4 sm:$0xff] %v1196
        %v1199 = vld.sshfl [vmem:[#allocation1] sm:$0xff pattern:$0x73625140]
        %v1200 = vld.sshfl [vmem:[#allocation1 + $0x8] sm:$0xff pattern:$0x73625140]
        %v1201 = vld.sshfl [vmem:[#allocation1 + $0x10] sm:$0xff pattern:$0x73625140]
        %1202 = vrot.lane.b32.xlu0 %v1199, 80
        %v1203 = vpop.permute.xlu0 %1202
        %1204 = vrot.lane.b32.xlu0 %v1200, 80
        %v1205 = vpop.permute.xlu0 %1204
        %1206 = vrot.lane.b32.xlu0 %v1201, 80
        %v1207 = vpop.permute.xlu0 %1206
        %vm1208 = vcmask 654336
        %v1209 = vsel %vm1208, %v1203, %v1205
        %v1210 = vsel %vm1208, %v1205, %v1207
        %v1213 = vmul.f32 %v1195, %v1209
        %v1214 = vmul.f32 %v1195, %v1210
        %v1215 = vadd.f32 %v1187, %v1213
        %v1216 = vadd.f32 %v1188, %v1214
        %vm1217 = vcmp.ge.s32.totalorder %v400, 0
        %vm1218 = vcmp.lt.s32.totalorder %v400, 16
        %vm1219 = vmand %vm1217, %vm1218
        %v1220 = vsel %vm1219, 1, 0
        %v1221 = vperm.slane %v1220, 0
        %v1222 = vperm.slane %v1220, 1
        %vm1223 = vcmp.eq.s32.totalorder %v1221, 1
        %vm1224 = vcmp.eq.s32.totalorder %v1222, 1
        %v1225 = vsel %vm1223, %v1215, 0.0
        %v1226 = vsel %vm1224, %v1216, 0.0
        %v1227 = vadd.f32 %v1029, %v1225
        %v1228 = vadd.f32 %v1030, %v1226
        %s1229 = sld [smem:[#allocation7 + $0x4]]
        %s1230 = sld [smem:[#allocation7 + $0x35]]
        %s1231 = ssub.f32 %s1230, %s1229
        %v1232 = vstv %s1231
        %v1233 = vmul.f32 %v1232, %v403
        %v1234 = vstv %s1229
        %v1235 = vadd.f32 %v1234, %v1233
        %v1236 = vld [vmem:[#allocation2] sm:$0x3f]
        %1238 = vst [vmem:[#allocation1] ss:$4 sm:$0xff] %v1236
        %v1239 = vld.sshfl [vmem:[#allocation1] sm:$0xff pattern:$0x73625140]
        %v1240 = vld.sshfl [vmem:[#allocation1 + $0x8] sm:$0xff pattern:$0x73625140]
        %v1241 = vld.sshfl [vmem:[#allocation1 + $0x10] sm:$0xff pattern:$0x73625140]
        %1242 = vrot.lane.b32.xlu0 %v1239, 47
        %v1243 = vpop.permute.xlu0 %1242
        %1244 = vrot.lane.b32.xlu0 %v1240, 47
        %v1245 = vpop.permute.xlu0 %1244
        %1246 = vrot.lane.b32.xlu0 %v1241, 47
        %v1247 = vpop.permute.xlu0 %1246
        %vm1248 = vcmask 384000
        %v1249 = vsel %vm1248, %v1243, %v1245
        %v1250 = vsel %vm1248, %v1245, %v1247
        %v1253 = vmul.f32 %v1235, %v1249
        %v1254 = vmul.f32 %v1235, %v1250
        %v1255 = vadd.f32 %v1253, 0.0
        %v1256 = vadd.f32 %v1254, 0.0
        %s1257 = sld [smem:[#allocation7 + $0xb]]
        %s1258 = sld [smem:[#allocation7 + $0x3c]]
        %s1259 = ssub.f32 %s1258, %s1257
        %v1260 = vstv %s1259
        %v1261 = vmul.f32 %v1260, %v403
        %v1262 = vstv %s1257
        %v1263 = vadd.f32 %v1262, %v1261
        %v1264 = vld [vmem:[#allocation2] sm:$0x3f]
        %1266 = vst [vmem:[#allocation1] ss:$4 sm:$0xff] %v1264
        %v1267 = vld.sshfl [vmem:[#allocation1] sm:$0xff pattern:$0x73625140]
        %v1268 = vld.sshfl [vmem:[#allocation1 + $0x8] sm:$0xff pattern:$0x73625140]
        %v1269 = vld.sshfl [vmem:[#allocation1 + $0x10] sm:$0xff pattern:$0x73625140]
        %1270 = vrot.lane.b32.xlu0 %v1267, 31
        %v1271 = vpop.permute.xlu0 %1270
        %1272 = vrot.lane.b32.xlu0 %v1268, 31
        %v1273 = vpop.permute.xlu0 %1272
        %1274 = vrot.lane.b32.xlu0 %v1269, 31
        %v1275 = vpop.permute.xlu0 %1274
        %vm1276 = vcmask 252928
        %v1277 = vsel %vm1276, %v1271, %v1273
        %v1278 = vsel %vm1276, %v1273, %v1275
        %v1281 = vmul.f32 %v1263, %v1277
        %v1282 = vmul.f32 %v1263, %v1278
        %v1283 = vadd.f32 %v1255, %v1281
        %v1284 = vadd.f32 %v1256, %v1282
        %s1285 = sld [smem:[#allocation7 + $0x12]]
        %s1286 = sld [smem:[#allocation7 + $0x43]]
        %s1287 = ssub.f32 %s1286, %s1285
        %v1288 = vstv %s1287
        %v1289 = vmul.f32 %v1288, %v403
        %v1290 = vstv %s1285
        %v1291 = vadd.f32 %v1290, %v1289
        %v1292 = vld [vmem:[#allocation2] sm:$0x3f]
        %1294 = vst [vmem:[#allocation1] ss:$4 sm:$0xff] %v1292
        %v1295 = vld.sshfl [vmem:[#allocation1] sm:$0xff pattern:$0x73625140]
        %v1296 = vld.sshfl [vmem:[#allocation1 + $0x8] sm:$0xff pattern:$0x73625140]
        %v1297 = vld.sshfl [vmem:[#allocation1 + $0x10] sm:$0xff pattern:$0x73625140]
        %1298 = vrot.lane.b32.xlu0 %v1295, 15
        %v1299 = vpop.permute.xlu0 %1298
        %1300 = vrot.lane.b32.xlu0 %v1296, 15
        %v1301 = vpop.permute.xlu0 %1300
        %1302 = vrot.lane.b32.xlu0 %v1297, 15
        %v1303 = vpop.permute.xlu0 %1302
        %vm1304 = vcmask 121856
        %v1305 = vsel %vm1304, %v1299, %v1301
        %v1306 = vsel %vm1304, %v1301, %v1303
        %v1309 = vmul.f32 %v1291, %v1305
        %v1310 = vmul.f32 %v1291, %v1306
        %v1311 = vadd.f32 %v1283, %v1309
        %v1312 = vadd.f32 %v1284, %v1310
        %s1313 = sld [smem:[#allocation7 + $0x19]]
        %s1314 = sld [smem:[#allocation7 + $0x4a]]
        %s1315 = ssub.f32 %s1314, %s1313
        %v1316 = vstv %s1315
        %v1317 = vmul.f32 %v1316, %v403
        %v1318 = vstv %s1313
        %v1319 = vadd.f32 %v1318, %v1317
        %v1320 = vld [vmem:[#allocation2 + $0x2] sm:$0x3f]
        %1322 = vst [vmem:[#allocation1] ss:$4 sm:$0xff] %v1320
        %v1323 = vld.sshfl [vmem:[#allocation1] sm:$0xff pattern:$0x73625140]
        %v1324 = vld.sshfl [vmem:[#allocation1 + $0x8] sm:$0xff pattern:$0x73625140]
        %v1325 = vld.sshfl [vmem:[#allocation1 + $0x10] sm:$0xff pattern:$0x73625140]
        %1326 = vrot.lane.b32.xlu0 %v1323, 127
        %v1327 = vpop.permute.xlu0 %1326
        %1328 = vrot.lane.b32.xlu0 %v1324, 127
        %v1329 = vpop.permute.xlu0 %1328
        %1330 = vrot.lane.b32.xlu0 %v1325, 127
        %v1331 = vpop.permute.xlu0 %1330
        %vm1332 = vcmask 1039360
        %v1333 = vsel %vm1332, %v1327, %v1329
        %v1334 = vsel %vm1332, %v1329, %v1331
        %v1337 = vmul.f32 %v1319, %v1333
        %v1338 = vmul.f32 %v1319, %v1334
        %v1339 = vadd.f32 %v1311, %v1337
        %v1340 = vadd.f32 %v1312, %v1338
        %s1341 = sld [smem:[#allocation7 + $0x20]]
        %s1342 = sld [smem:[#allocation7 + $0x51]]
        %s1343 = ssub.f32 %s1342, %s1341
        %v1344 = vstv %s1343
        %v1345 = vmul.f32 %v1344, %v403
        %v1346 = vstv %s1341
        %v1347 = vadd.f32 %v1346, %v1345
        %v1348 = vld [vmem:[#allocation2 + $0x2] sm:$0x3f]
        %1350 = vst [vmem:[#allocation1] ss:$4 sm:$0xff] %v1348
        %v1351 = vld.sshfl [vmem:[#allocation1] sm:$0xff pattern:$0x73625140]
        %v1352 = vld.sshfl [vmem:[#allocation1 + $0x8] sm:$0xff pattern:$0x73625140]
        %v1353 = vld.sshfl [vmem:[#allocation1 + $0x10] sm:$0xff pattern:$0x73625140]
        %1354 = vrot.lane.b32.xlu0 %v1351, 111
        %v1355 = vpop.permute.xlu0 %1354
        %1356 = vrot.lane.b32.xlu0 %v1352, 111
        %v1357 = vpop.permute.xlu0 %1356
        %1358 = vrot.lane.b32.xlu0 %v1353, 111
        %v1359 = vpop.permute.xlu0 %1358
        %vm1360 = vcmask 908288
        %v1361 = vsel %vm1360, %v1355, %v1357
        %v1362 = vsel %vm1360, %v1357, %v1359
        %v1365 = vmul.f32 %v1347, %v1361
        %v1366 = vmul.f32 %v1347, %v1362
        %v1367 = vadd.f32 %v1339, %v1365
        %v1368 = vadd.f32 %v1340, %v1366
        %s1369 = sld [smem:[#allocation7 + $0x27]]
        %s1370 = sld [smem:[#allocation7 + $0x58]]
        %s1371 = ssub.f32 %s1370, %s1369
        %v1372 = vstv %s1371
        %v1373 = vmul.f32 %v1372, %v403
        %v1374 = vstv %s1369
        %v1375 = vadd.f32 %v1374, %v1373
        %v1376 = vld [vmem:[#allocation2 + $0x2] sm:$0x3f]
        %1378 = vst [vmem:[#allocation1] ss:$4 sm:$0xff] %v1376
        %v1379 = vld.sshfl [vmem:[#allocation1] sm:$0xff pattern:$0x73625140]
        %v1380 = vld.sshfl [vmem:[#allocation1 + $0x8] sm:$0xff pattern:$0x73625140]
        %v1381 = vld.sshfl [vmem:[#allocation1 + $0x10] sm:$0xff pattern:$0x73625140]
        %1382 = vrot.lane.b32.xlu0 %v1379, 95
        %v1383 = vpop.permute.xlu0 %1382
        %1384 = vrot.lane.b32.xlu0 %v1380, 95
        %v1385 = vpop.permute.xlu0 %1384
        %1386 = vrot.lane.b32.xlu0 %v1381, 95
        %v1387 = vpop.permute.xlu0 %1386
        %vm1388 = vcmask 777216
        %v1389 = vsel %vm1388, %v1383, %v1385
        %v1390 = vsel %vm1388, %v1385, %v1387
        %v1393 = vmul.f32 %v1375, %v1389
        %v1394 = vmul.f32 %v1375, %v1390
        %v1395 = vadd.f32 %v1367, %v1393
        %v1396 = vadd.f32 %v1368, %v1394
        %s1397 = sld [smem:[#allocation7 + $0x2e]]
        %s1398 = sld [smem:[#allocation7 + $0x5f]]
        %s1399 = ssub.f32 %s1398, %s1397
        %v1400 = vstv %s1399
        %v1401 = vmul.f32 %v1400, %v403
        %v1402 = vstv %s1397
        %v1403 = vadd.f32 %v1402, %v1401
        %v1404 = vld [vmem:[#allocation2 + $0x2] sm:$0x3f]
        %1406 = vst [vmem:[#allocation1] ss:$4 sm:$0xff] %v1404
        %v1407 = vld.sshfl [vmem:[#allocation1] sm:$0xff pattern:$0x73625140]
        %v1408 = vld.sshfl [vmem:[#allocation1 + $0x8] sm:$0xff pattern:$0x73625140]
        %v1409 = vld.sshfl [vmem:[#allocation1 + $0x10] sm:$0xff pattern:$0x73625140]
        %1410 = vrot.lane.b32.xlu0 %v1407, 79
        %v1411 = vpop.permute.xlu0 %1410
        %1412 = vrot.lane.b32.xlu0 %v1408, 79
        %v1413 = vpop.permute.xlu0 %1412
        %1414 = vrot.lane.b32.xlu0 %v1409, 79
        %v1415 = vpop.permute.xlu0 %1414
        %vm1416 = vcmask 646144
        %v1417 = vsel %vm1416, %v1411, %v1413
        %v1418 = vsel %vm1416, %v1413, %v1415
        %v1421 = vmul.f32 %v1403, %v1417
        %v1422 = vmul.f32 %v1403, %v1418
        %v1423 = vadd.f32 %v1395, %v1421
        %v1424 = vadd.f32 %v1396, %v1422
        %v1425 = vadd.s32 %v400, 1
        %vm1426 = vcmp.ge.s32.totalorder %v1425, 0
        %vm1427 = vcmp.lt.s32.totalorder %v1425, 16
        %vm1428 = vmand %vm1426, %vm1427
        %v1429 = vsel %vm1428, 1, 0
        %v1430 = vperm.slane %v1429, 0
        %v1431 = vperm.slane %v1429, 1
        %vm1432 = vcmp.eq.s32.totalorder %v1430, 1
        %vm1433 = vcmp.eq.s32.totalorder %v1431, 1
        %v1434 = vsel %vm1432, %v1423, 0.0
        %v1435 = vsel %vm1433, %v1424, 0.0
        %v1436 = vadd.f32 %v1227, %v1434
        %v1437 = vadd.f32 %v1228, %v1435
        %s1438 = sld [smem:[#allocation7 + $0x5]]
        %s1439 = sld [smem:[#allocation7 + $0x36]]
        %s1440 = ssub.f32 %s1439, %s1438
        %v1441 = vstv %s1440
        %v1442 = vmul.f32 %v1441, %v403
        %v1443 = vstv %s1438
        %v1444 = vadd.f32 %v1443, %v1442
        %v1445 = vld [vmem:[#allocation2] sm:$0x3f]
        %1447 = vst [vmem:[#allocation1] ss:$4 sm:$0xff] %v1445
        %v1448 = vld.sshfl [vmem:[#allocation1] sm:$0xff pattern:$0x73625140]
        %v1449 = vld.sshfl [vmem:[#allocation1 + $0x8] sm:$0xff pattern:$0x73625140]
        %v1450 = vld.sshfl [vmem:[#allocation1 + $0x10] sm:$0xff pattern:$0x73625140]
        %1451 = vrot.lane.b32.xlu0 %v1448, 46
        %v1452 = vpop.permute.xlu0 %1451
        %1453 = vrot.lane.b32.xlu0 %v1449, 46
        %v1454 = vpop.permute.xlu0 %1453
        %1455 = vrot.lane.b32.xlu0 %v1450, 46
        %v1456 = vpop.permute.xlu0 %1455
        %vm1457 = vcmask 375808
        %v1458 = vsel %vm1457, %v1452, %v1454
        %v1459 = vsel %vm1457, %v1454, %v1456
        %v1462 = vmul.f32 %v1444, %v1458
        %v1463 = vmul.f32 %v1444, %v1459
        %v1464 = vadd.f32 %v1462, 0.0
        %v1465 = vadd.f32 %v1463, 0.0
        %s1466 = sld [smem:[#allocation7 + $0xc]]
        %s1467 = sld [smem:[#allocation7 + $0x3d]]
        %s1468 = ssub.f32 %s1467, %s1466
        %v1469 = vstv %s1468
        %v1470 = vmul.f32 %v1469, %v403
        %v1471 = vstv %s1466
        %v1472 = vadd.f32 %v1471, %v1470
        %v1473 = vld [vmem:[#allocation2] sm:$0x3f]
        %1475 = vst [vmem:[#allocation1] ss:$4 sm:$0xff] %v1473
        %v1476 = vld.sshfl [vmem:[#allocation1] sm:$0xff pattern:$0x73625140]
        %v1477 = vld.sshfl [vmem:[#allocation1 + $0x8] sm:$0xff pattern:$0x73625140]
        %v1478 = vld.sshfl [vmem:[#allocation1 + $0x10] sm:$0xff pattern:$0x73625140]
        %1479 = vrot.lane.b32.xlu0 %v1476, 30
        %v1480 = vpop.permute.xlu0 %1479
        %1481 = vrot.lane.b32.xlu0 %v1477, 30
        %v1482 = vpop.permute.xlu0 %1481
        %1483 = vrot.lane.b32.xlu0 %v1478, 30
        %v1484 = vpop.permute.xlu0 %1483
        %vm1485 = vcmask 244736
        %v1486 = vsel %vm1485, %v1480, %v1482
        %v1487 = vsel %vm1485, %v1482, %v1484
        %v1490 = vmul.f32 %v1472, %v1486
        %v1491 = vmul.f32 %v1472, %v1487
        %v1492 = vadd.f32 %v1464, %v1490
        %v1493 = vadd.f32 %v1465, %v1491
        %s1494 = sld [smem:[#allocation7 + $0x13]]
        %s1495 = sld [smem:[#allocation7 + $0x44]]
        %s1496 = ssub.f32 %s1495, %s1494
        %v1497 = vstv %s1496
        %v1498 = vmul.f32 %v1497, %v403
        %v1499 = vstv %s1494
        %v1500 = vadd.f32 %v1499, %v1498
        %v1501 = vld [vmem:[#allocation2] sm:$0x3f]
        %1503 = vst [vmem:[#allocation1] ss:$4 sm:$0xff] %v1501
        %v1504 = vld.sshfl [vmem:[#allocation1] sm:$0xff pattern:$0x73625140]
        %v1505 = vld.sshfl [vmem:[#allocation1 + $0x8] sm:$0xff pattern:$0x73625140]
        %v1506 = vld.sshfl [vmem:[#allocation1 + $0x10] sm:$0xff pattern:$0x73625140]
        %1507 = vrot.lane.b32.xlu0 %v1504, 14
        %v1508 = vpop.permute.xlu0 %1507
        %1509 = vrot.lane.b32.xlu0 %v1505, 14
        %v1510 = vpop.permute.xlu0 %1509
        %1511 = vrot.lane.b32.xlu0 %v1506, 14
        %v1512 = vpop.permute.xlu0 %1511
        %vm1513 = vcmask 113664
        %v1514 = vsel %vm1513, %v1508, %v1510
        %v1515 = vsel %vm1513, %v1510, %v1512
        %v1518 = vmul.f32 %v1500, %v1514
        %v1519 = vmul.f32 %v1500, %v1515
        %v1520 = vadd.f32 %v1492, %v1518
        %v1521 = vadd.f32 %v1493, %v1519
        %s1522 = sld [smem:[#allocation7 + $0x1a]]
        %s1523 = sld [smem:[#allocation7 + $0x4b]]
        %s1524 = ssub.f32 %s1523, %s1522
        %v1525 = vstv %s1524
        %v1526 = vmul.f32 %v1525, %v403
        %v1527 = vstv %s1522
        %v1528 = vadd.f32 %v1527, %v1526
        %v1529 = vld [vmem:[#allocation2 + $0x2] sm:$0x3f]
        %1531 = vst [vmem:[#allocation1] ss:$4 sm:$0xff] %v1529
        %v1532 = vld.sshfl [vmem:[#allocation1] sm:$0xff pattern:$0x73625140]
        %v1533 = vld.sshfl [vmem:[#allocation1 + $0x8] sm:$0xff pattern:$0x73625140]
        %v1534 = vld.sshfl [vmem:[#allocation1 + $0x10] sm:$0xff pattern:$0x73625140]
        %1535 = vrot.lane.b32.xlu0 %v1532, 126
        %v1536 = vpop.permute.xlu0 %1535
        %1537 = vrot.lane.b32.xlu0 %v1533, 126
        %v1538 = vpop.permute.xlu0 %1537
        %1539 = vrot.lane.b32.xlu0 %v1534, 126
        %v1540 = vpop.permute.xlu0 %1539
        %vm1541 = vcmask 1031168
        %v1542 = vsel %vm1541, %v1536, %v1538
        %v1543 = vsel %vm1541, %v1538, %v1540
        %v1546 = vmul.f32 %v1528, %v1542
        %v1547 = vmul.f32 %v1528, %v1543
        %v1548 = vadd.f32 %v1520, %v1546
        %v1549 = vadd.f32 %v1521, %v1547
        %s1550 = sld [smem:[#allocation7 + $0x21]]
        %s1551 = sld [smem:[#allocation7 + $0x52]]
        %s1552 = ssub.f32 %s1551, %s1550
        %v1553 = vstv %s1552
        %v1554 = vmul.f32 %v1553, %v403
        %v1555 = vstv %s1550
        %v1556 = vadd.f32 %v1555, %v1554
        %v1557 = vld [vmem:[#allocation2 + $0x2] sm:$0x3f]
        %1559 = vst [vmem:[#allocation1] ss:$4 sm:$0xff] %v1557
        %v1560 = vld.sshfl [vmem:[#allocation1] sm:$0xff pattern:$0x73625140]
        %v1561 = vld.sshfl [vmem:[#allocation1 + $0x8] sm:$0xff pattern:$0x73625140]
        %v1562 = vld.sshfl [vmem:[#allocation1 + $0x10] sm:$0xff pattern:$0x73625140]
        %1563 = vrot.lane.b32.xlu0 %v1560, 110
        %v1564 = vpop.permute.xlu0 %1563
        %1565 = vrot.lane.b32.xlu0 %v1561, 110
        %v1566 = vpop.permute.xlu0 %1565
        %1567 = vrot.lane.b32.xlu0 %v1562, 110
        %v1568 = vpop.permute.xlu0 %1567
        %vm1569 = vcmask 900096
        %v1570 = vsel %vm1569, %v1564, %v1566
        %v1571 = vsel %vm1569, %v1566, %v1568
        %v1574 = vmul.f32 %v1556, %v1570
        %v1575 = vmul.f32 %v1556, %v1571
        %v1576 = vadd.f32 %v1548, %v1574
        %v1577 = vadd.f32 %v1549, %v1575
        %s1578 = sld [smem:[#allocation7 + $0x28]]
        %s1579 = sld [smem:[#allocation7 + $0x59]]
        %s1580 = ssub.f32 %s1579, %s1578
        %v1581 = vstv %s1580
        %v1582 = vmul.f32 %v1581, %v403
        %v1583 = vstv %s1578
        %v1584 = vadd.f32 %v1583, %v1582
        %v1585 = vld [vmem:[#allocation2 + $0x2] sm:$0x3f]
        %1587 = vst [vmem:[#allocation1] ss:$4 sm:$0xff] %v1585
        %v1588 = vld.sshfl [vmem:[#allocation1] sm:$0xff pattern:$0x73625140]
        %v1589 = vld.sshfl [vmem:[#allocation1 + $0x8] sm:$0xff pattern:$0x73625140]
        %v1590 = vld.sshfl [vmem:[#allocation1 + $0x10] sm:$0xff pattern:$0x73625140]
        %1591 = vrot.lane.b32.xlu0 %v1588, 94
        %v1592 = vpop.permute.xlu0 %1591
        %1593 = vrot.lane.b32.xlu0 %v1589, 94
        %v1594 = vpop.permute.xlu0 %1593
        %1595 = vrot.lane.b32.xlu0 %v1590, 94
        %v1596 = vpop.permute.xlu0 %1595
        %vm1597 = vcmask 769024
        %v1598 = vsel %vm1597, %v1592, %v1594
        %v1599 = vsel %vm1597, %v1594, %v1596
        %v1602 = vmul.f32 %v1584, %v1598
        %v1603 = vmul.f32 %v1584, %v1599
        %v1604 = vadd.f32 %v1576, %v1602
        %v1605 = vadd.f32 %v1577, %v1603
        %s1606 = sld [smem:[#allocation7 + $0x2f]]
        %s1607 = sld [smem:[#allocation7 + $0x60]]
        %s1608 = ssub.f32 %s1607, %s1606
        %v1609 = vstv %s1608
        %v1610 = vmul.f32 %v1609, %v403
        %v1611 = vstv %s1606
        %v1612 = vadd.f32 %v1611, %v1610
        %v1613 = vld [vmem:[#allocation2 + $0x2] sm:$0x3f]
        %1615 = vst [vmem:[#allocation1] ss:$4 sm:$0xff] %v1613
        %v1616 = vld.sshfl [vmem:[#allocation1] sm:$0xff pattern:$0x73625140]
        %v1617 = vld.sshfl [vmem:[#allocation1 + $0x8] sm:$0xff pattern:$0x73625140]
        %v1618 = vld.sshfl [vmem:[#allocation1 + $0x10] sm:$0xff pattern:$0x73625140]
        %1619 = vrot.lane.b32.xlu0 %v1616, 78
        %v1620 = vpop.permute.xlu0 %1619
        %1621 = vrot.lane.b32.xlu0 %v1617, 78
        %v1622 = vpop.permute.xlu0 %1621
        %1623 = vrot.lane.b32.xlu0 %v1618, 78
        %v1624 = vpop.permute.xlu0 %1623
        %vm1625 = vcmask 637952
        %v1626 = vsel %vm1625, %v1620, %v1622
        %v1627 = vsel %vm1625, %v1622, %v1624
        %v1630 = vmul.f32 %v1612, %v1626
        %v1631 = vmul.f32 %v1612, %v1627
        %v1632 = vadd.f32 %v1604, %v1630
        %v1633 = vadd.f32 %v1605, %v1631
        %v1634 = vadd.s32 %v400, 2
        %vm1635 = vcmp.ge.s32.totalorder %v1634, 0
        %vm1636 = vcmp.lt.s32.totalorder %v1634, 16
        %vm1637 = vmand %vm1635, %vm1636
        %v1638 = vsel %vm1637, 1, 0
        %v1639 = vperm.slane %v1638, 0
        %v1640 = vperm.slane %v1638, 1
        %vm1641 = vcmp.eq.s32.totalorder %v1639, 1
        %vm1642 = vcmp.eq.s32.totalorder %v1640, 1
        %v1643 = vsel %vm1641, %v1632, 0.0
        %v1644 = vsel %vm1642, %v1633, 0.0
        %v1645 = vadd.f32 %v1436, %v1643
        %v1646 = vadd.f32 %v1437, %v1644
        %s1647 = sld [smem:[#allocation7 + $0x6]]
        %s1648 = sld [smem:[#allocation7 + $0x37]]
        %s1649 = ssub.f32 %s1648, %s1647
        %v1650 = vstv %s1649
        %v1651 = vmul.f32 %v1650, %v403
        %v1652 = vstv %s1647
        %v1653 = vadd.f32 %v1652, %v1651
        %v1654 = vld [vmem:[#allocation2] sm:$0x3f]
        %1656 = vst [vmem:[#allocation1] ss:$4 sm:$0xff] %v1654
        %v1657 = vld.sshfl [vmem:[#allocation1] sm:$0xff pattern:$0x73625140]
        %v1658 = vld.sshfl [vmem:[#allocation1 + $0x8] sm:$0xff pattern:$0x73625140]
        %v1659 = vld.sshfl [vmem:[#allocation1 + $0x10] sm:$0xff pattern:$0x73625140]
        %1660 = vrot.lane.b32.xlu0 %v1657, 45
        %v1661 = vpop.permute.xlu0 %1660
        %1662 = vrot.lane.b32.xlu0 %v1658, 45
        %v1663 = vpop.permute.xlu0 %1662
        %1664 = vrot.lane.b32.xlu0 %v1659, 45
        %v1665 = vpop.permute.xlu0 %1664
        %vm1666 = vcmask 367616
        %v1667 = vsel %vm1666, %v1661, %v1663
        %v1668 = vsel %vm1666, %v1663, %v1665
        %v1671 = vmul.f32 %v1653, %v1667
        %v1672 = vmul.f32 %v1653, %v1668
        %v1673 = vadd.f32 %v1671, 0.0
        %v1674 = vadd.f32 %v1672, 0.0
        %s1675 = sld [smem:[#allocation7 + $0xd]]
        %s1676 = sld [smem:[#allocation7 + $0x3e]]
        %s1677 = ssub.f32 %s1676, %s1675
        %v1678 = vstv %s1677
        %v1679 = vmul.f32 %v1678, %v403
        %v1680 = vstv %s1675
        %v1681 = vadd.f32 %v1680, %v1679
        %v1682 = vld [vmem:[#allocation2] sm:$0x3f]
        %1684 = vst [vmem:[#allocation1] ss:$4 sm:$0xff] %v1682
        %v1685 = vld.sshfl [vmem:[#allocation1] sm:$0xff pattern:$0x73625140]
        %v1686 = vld.sshfl [vmem:[#allocation1 + $0x8] sm:$0xff pattern:$0x73625140]
        %v1687 = vld.sshfl [vmem:[#allocation1 + $0x10] sm:$0xff pattern:$0x73625140]
        %1688 = vrot.lane.b32.xlu0 %v1685, 29
        %v1689 = vpop.permute.xlu0 %1688
        %1690 = vrot.lane.b32.xlu0 %v1686, 29
        %v1691 = vpop.permute.xlu0 %1690
        %1692 = vrot.lane.b32.xlu0 %v1687, 29
        %v1693 = vpop.permute.xlu0 %1692
        %vm1694 = vcmask 236544
        %v1695 = vsel %vm1694, %v1689, %v1691
        %v1696 = vsel %vm1694, %v1691, %v1693
        %v1699 = vmul.f32 %v1681, %v1695
        %v1700 = vmul.f32 %v1681, %v1696
        %v1701 = vadd.f32 %v1673, %v1699
        %v1702 = vadd.f32 %v1674, %v1700
        %s1703 = sld [smem:[#allocation7 + $0x14]]
        %s1704 = sld [smem:[#allocation7 + $0x45]]
        %s1705 = ssub.f32 %s1704, %s1703
        %v1706 = vstv %s1705
        %v1707 = vmul.f32 %v1706, %v403
        %v1708 = vstv %s1703
        %v1709 = vadd.f32 %v1708, %v1707
        %v1710 = vld [vmem:[#allocation2] sm:$0x3f]
        %1712 = vst [vmem:[#allocation1] ss:$4 sm:$0xff] %v1710
        %v1713 = vld.sshfl [vmem:[#allocation1] sm:$0xff pattern:$0x73625140]
        %v1714 = vld.sshfl [vmem:[#allocation1 + $0x8] sm:$0xff pattern:$0x73625140]
        %v1715 = vld.sshfl [vmem:[#allocation1 + $0x10] sm:$0xff pattern:$0x73625140]
        %1716 = vrot.lane.b32.xlu0 %v1713, 13
        %v1717 = vpop.permute.xlu0 %1716
        %1718 = vrot.lane.b32.xlu0 %v1714, 13
        %v1719 = vpop.permute.xlu0 %1718
        %1720 = vrot.lane.b32.xlu0 %v1715, 13
        %v1721 = vpop.permute.xlu0 %1720
        %vm1722 = vcmask 105472
        %v1723 = vsel %vm1722, %v1717, %v1719
        %v1724 = vsel %vm1722, %v1719, %v1721
        %v1727 = vmul.f32 %v1709, %v1723
        %v1728 = vmul.f32 %v1709, %v1724
        %v1729 = vadd.f32 %v1701, %v1727
        %v1730 = vadd.f32 %v1702, %v1728
        %s1731 = sld [smem:[#allocation7 + $0x1b]]
        %s1732 = sld [smem:[#allocation7 + $0x4c]]
        %s1733 = ssub.f32 %s1732, %s1731
        %v1734 = vstv %s1733
        %v1735 = vmul.f32 %v1734, %v403
        %v1736 = vstv %s1731
        %v1737 = vadd.f32 %v1736, %v1735
        %v1738 = vld [vmem:[#allocation2 + $0x2] sm:$0x3f]
        %1740 = vst [vmem:[#allocation1] ss:$4 sm:$0xff] %v1738
        %v1741 = vld.sshfl [vmem:[#allocation1] sm:$0xff pattern:$0x73625140]
        %v1742 = vld.sshfl [vmem:[#allocation1 + $0x8] sm:$0xff pattern:$0x73625140]
        %v1743 = vld.sshfl [vmem:[#allocation1 + $0x10] sm:$0xff pattern:$0x73625140]
        %1744 = vrot.lane.b32.xlu0 %v1741, 125
        %v1745 = vpop.permute.xlu0 %1744
        %1746 = vrot.lane.b32.xlu0 %v1742, 125
        %v1747 = vpop.permute.xlu0 %1746
        %1748 = vrot.lane.b32.xlu0 %v1743, 125
        %v1749 = vpop.permute.xlu0 %1748
        %vm1750 = vcmask 1022976
        %v1751 = vsel %vm1750, %v1745, %v1747
        %v1752 = vsel %vm1750, %v1747, %v1749
        %v1755 = vmul.f32 %v1737, %v1751
        %v1756 = vmul.f32 %v1737, %v1752
        %v1757 = vadd.f32 %v1729, %v1755
        %v1758 = vadd.f32 %v1730, %v1756
        %s1759 = sld [smem:[#allocation7 + $0x22]]
        %s1760 = sld [smem:[#allocation7 + $0x53]]
        %s1761 = ssub.f32 %s1760, %s1759
        %v1762 = vstv %s1761
        %v1763 = vmul.f32 %v1762, %v403
        %v1764 = vstv %s1759
        %v1765 = vadd.f32 %v1764, %v1763
        %v1766 = vld [vmem:[#allocation2 + $0x2] sm:$0x3f]
        %1768 = vst [vmem:[#allocation1] ss:$4 sm:$0xff] %v1766
        %v1769 = vld.sshfl [vmem:[#allocation1] sm:$0xff pattern:$0x73625140]
        %v1770 = vld.sshfl [vmem:[#allocation1 + $0x8] sm:$0xff pattern:$0x73625140]
        %v1771 = vld.sshfl [vmem:[#allocation1 + $0x10] sm:$0xff pattern:$0x73625140]
        %1772 = vrot.lane.b32.xlu0 %v1769, 109
        %v1773 = vpop.permute.xlu0 %1772
        %1774 = vrot.lane.b32.xlu0 %v1770, 109
        %v1775 = vpop.permute.xlu0 %1774
        %1776 = vrot.lane.b32.xlu0 %v1771, 109
        %v1777 = vpop.permute.xlu0 %1776
        %vm1778 = vcmask 891904
        %v1779 = vsel %vm1778, %v1773, %v1775
        %v1780 = vsel %vm1778, %v1775, %v1777
        %v1783 = vmul.f32 %v1765, %v1779
        %v1784 = vmul.f32 %v1765, %v1780
        %v1785 = vadd.f32 %v1757, %v1783
        %v1786 = vadd.f32 %v1758, %v1784
        %s1787 = sld [smem:[#allocation7 + $0x29]]
        %s1788 = sld [smem:[#allocation7 + $0x5a]]
        %s1789 = ssub.f32 %s1788, %s1787
        %v1790 = vstv %s1789
        %v1791 = vmul.f32 %v1790, %v403
        %v1792 = vstv %s1787
        %v1793 = vadd.f32 %v1792, %v1791
        %v1794 = vld [vmem:[#allocation2 + $0x2] sm:$0x3f]
        %1796 = vst [vmem:[#allocation1] ss:$4 sm:$0xff] %v1794
        %v1797 = vld.sshfl [vmem:[#allocation1] sm:$0xff pattern:$0x73625140]
        %v1798 = vld.sshfl [vmem:[#allocation1 + $0x8] sm:$0xff pattern:$0x73625140]
        %v1799 = vld.sshfl [vmem:[#allocation1 + $0x10] sm:$0xff pattern:$0x73625140]
        %1800 = vrot.lane.b32.xlu0 %v1797, 93
        %v1801 = vpop.permute.xlu0 %1800
        %1802 = vrot.lane.b32.xlu0 %v1798, 93
        %v1803 = vpop.permute.xlu0 %1802
        %1804 = vrot.lane.b32.xlu0 %v1799, 93
        %v1805 = vpop.permute.xlu0 %1804
        %vm1806 = vcmask 760832
        %v1807 = vsel %vm1806, %v1801, %v1803
        %v1808 = vsel %vm1806, %v1803, %v1805
        %v1811 = vmul.f32 %v1793, %v1807
        %v1812 = vmul.f32 %v1793, %v1808
        %v1813 = vadd.f32 %v1785, %v1811
        %v1814 = vadd.f32 %v1786, %v1812
        %s1815 = sld [smem:[#allocation7 + $0x30]]
        %s1816 = sld [smem:[#allocation7 + $0x61]]
        %s1817 = ssub.f32 %s1816, %s1815
        %v1818 = vstv %s1817
        %v1819 = vmul.f32 %v1818, %v403
        %v1820 = vstv %s1815
        %v1821 = vadd.f32 %v1820, %v1819
        %v1822 = vld [vmem:[#allocation2 + $0x2] sm:$0x3f]
        %1824 = vst [vmem:[#allocation1] ss:$4 sm:$0xff] %v1822
        %v1825 = vld.sshfl [vmem:[#allocation1] sm:$0xff pattern:$0x73625140]
        %v1826 = vld.sshfl [vmem:[#allocation1 + $0x8] sm:$0xff pattern:$0x73625140]
        %v1827 = vld.sshfl [vmem:[#allocation1 + $0x10] sm:$0xff pattern:$0x73625140]
        %1828 = vrot.lane.b32.xlu0 %v1825, 77
        %v1829 = vpop.permute.xlu0 %1828
        %1830 = vrot.lane.b32.xlu0 %v1826, 77
        %v1831 = vpop.permute.xlu0 %1830
        %1832 = vrot.lane.b32.xlu0 %v1827, 77
        %v1833 = vpop.permute.xlu0 %1832
        %vm1834 = vcmask 629760
        %v1835 = vsel %vm1834, %v1829, %v1831
        %v1836 = vsel %vm1834, %v1831, %v1833
        %v1839 = vmul.f32 %v1821, %v1835
        %v1840 = vmul.f32 %v1821, %v1836
        %v1841 = vadd.f32 %v1813, %v1839
        %v1842 = vadd.f32 %v1814, %v1840
        %v1843 = vadd.s32 %v400, 3
        %vm1844 = vcmp.ge.s32.totalorder %v1843, 0
        %vm1845 = vcmp.lt.s32.totalorder %v1843, 16
        %vm1846 = vmand %vm1844, %vm1845
        %v1847 = vsel %vm1846, 1, 0
        %v1848 = vperm.slane %v1847, 0
        %v1849 = vperm.slane %v1847, 1
        %vm1850 = vcmp.eq.s32.totalorder %v1848, 1
        %vm1851 = vcmp.eq.s32.totalorder %v1849, 1
        %v1852 = vsel %vm1850, %v1841, 0.0
        %v1853 = vsel %vm1851, %v1842, 0.0
        %v1854 = vadd.f32 %v1645, %v1852
        %v1855 = vadd.f32 %v1646, %v1853
        %v1856 = vsel %vm396, %v1854, 0.0
        %v1857 = vrot.slane %v1856, 4
        %v1858 = vadd.f32 %v1856, %v1857
        %v1859 = vrot.slane %v1858, 2
        %v1860 = vadd.f32 %v1858, %v1859
        %v1861 = vrot.slane %v1860, 1
        %v1862 = vadd.f32 %v1860, %v1861
        %v1863 = vsel %vm396, %v1855, 0.0
        %v1864 = vrot.slane %v1863, 4
        %v1865 = vadd.f32 %v1863, %v1864
        %v1866 = vrot.slane %v1865, 2
        %v1867 = vadd.f32 %v1865, %v1866
        %v1868 = vrot.slane %v1867, 1
        %v1869 = vadd.f32 %v1867, %v1868
        %v1870 = vxor.u32 %v1862, 2147483648
        %v1871 = vxor.u32 %v1869, 2147483648
        %v1872 = vmul.f32 %v1870, 1.442695
        %v1873 = vpow.pop %v1872
        %v1874 = vmul.f32 %v1871, 1.442695
        %v1875 = vpow.pop %v1874
        %v1876 = vadd.f32 %v1873, 1.0
        %v1877 = vadd.f32 %v1875, 1.0
        %v1878 = vrcp.pop %v1876
        %v1879 = vmul.f32 %v1876, %v1878
        %v1880 = vsub.f32 1.0, %v1879
        %v1881 = vmul.f32 %v1878, %v1880
        %v1882 = vadd.f32 %v1878, %v1881
        %vm1883 = vweird.f32 %v1876
        %vm1884 = vweird.f32 %v1878
        %vm1885 = vmor %vm1883, %vm1884
        %v1886 = vsel %vm1885, %v1878, %v1882
        %v1887 = vand.u32 2147483647, %v1876
        %vm1888 = vcmp.eq.f32.partialorder %v1887, 8.507059e+37
        %v1889 = vand.u32 %v1876, 2147483648
        %v1890 = vor.u32 1.1754944e-38, %v1889
        %v1891 = vsel %vm1888, %v1890, %v1886
        %v1892 = vmul.f32 1.0, %v1891
        %v1893 = vrcp.pop %v1877
        %v1894 = vmul.f32 %v1877, %v1893
        %v1895 = vsub.f32 1.0, %v1894
        %v1896 = vmul.f32 %v1893, %v1895
        %v1897 = vadd.f32 %v1893, %v1896
        %vm1898 = vweird.f32 %v1877
        %vm1899 = vweird.f32 %v1893
        %vm1900 = vmor %vm1898, %vm1899
        %v1901 = vsel %vm1900, %v1893, %v1897
        %v1902 = vand.u32 2147483647, %v1877
        %vm1903 = vcmp.eq.f32.partialorder %v1902, 8.507059e+37
        %v1904 = vand.u32 %v1877, 2147483648
        %v1905 = vor.u32 1.1754944e-38, %v1904
        %v1906 = vsel %vm1903, %v1905, %v1901
        %v1907 = vmul.f32 1.0, %v1906
        %v1908 = vld [vmem:[%s223] sm:$0xff]
        %v1909 = vmul.f32 %v1908, %v340
        %v1912 = vrot.slane %v1907, 4
        %v1913 = vsel %vm264, %v1892, %v1912
        %v1915 = vmul.f32 %v1909, %v1913
        %1916 = vst [vmem:[%s256] sm:$0xff] %v1915
        %s1917 = sand.u32 %s141, 1
        %s1918 = scalar_lea.sflag [#allocation5], %s1917
        %s1919 = sand.u32 %s141, 1
        %s1920 = smul.addr %s1919, 8
        %s1921 = scalar_lea.vmem [#allocation8], %s1920
        // Predicated region
        $region49: #{tpu_custom_call.1} parent=39 // pred_check
          %p1922 = pneg %p151
        $region50: #{tpu_custom_call.1} parent=39 // pred_check_branch
          %1924 = sbr.rel (%p1922) target = $region52
        $region51: #{tpu_custom_call.1} parent=39 // pred_region
          %1926 = vsyncadd %s1918, 0
          %s1927 = smul.addr %s23, 2
          %s1928 = smul.addr %s1927, 4
          %s1929 = scalar_lea.hbm %s5, %s1928
          %s1931 = sshll.u32 %s1921, 4
          %s1932 = int_to_ptr.vmem [resolvable:$true] %s1931
          %s1933 = sshll.u32 %s1929, 4
          %s1934 = int_to_ptr.hbm [resolvable:$true] %s1933
          %1936 = dma.vmem_to_hbm [thread:$0]  %s1932, 128, %s1934, %s1918
        $region52: #{tpu_custom_call.1} parent=39 // pred_fallthru
          _
      $region40: #{tpu_custom_call.1} parent=5 // pred_fallthru
        _
      %p1937 = scmp.le.s32.totalorder 2, %s18
      // Predicated region
      $region53: #{tpu_custom_call.1} parent=5 // pred_check
        %p1938 = pneg %p1937
      $region54: #{tpu_custom_call.1} parent=5 // pred_check_branch
        %1940 = sbr.rel (%p1938) target = $region56
      $region55: #{tpu_custom_call.1} parent=5 // pred_region
        %s1941 = ssub.s32 %s18, 2
        // Predicated region
        $region57: #{tpu_custom_call.1} parent=55 // pred_check
          %p1942 = pneg %p157
        $region58: #{tpu_custom_call.1} parent=55 // pred_check_branch
          %1944 = sbr.rel (%p1942) target = $region60
        $region59: #{tpu_custom_call.1} parent=55 // pred_region
          %s1945 = sand.u32 %s142, 1
          %s1946 = scalar_lea.sflag [#allocation5], %s1945
          %s1947 = sand.u32 %s142, 1
          %s1948 = smul.addr %s1947, 8
          %s1949 = scalar_lea.vmem [#allocation8], %s1948
          %1951 = dma.done %s1946, 128
        $region60: #{tpu_custom_call.1} parent=55 // pred_fallthru
          _
      $region56: #{tpu_custom_call.1} parent=5 // pred_fallthru
        _
    $region6: #{tpu_custom_call.1} parent=1 // loop_footer
      %s22 = sadd.s32 1, %s18
    $region7: #{tpu_custom_call.1} parent=1 // loop_footer_branch
      %17 = sbr.rel target = $region3
    $region8: #{tpu_custom_call.1} parent=1 // loop_exit
      _
    %1952 = vsyncpa [#allocation4], 1
    %s1953 = scalar_lea.sflag [#allocation4], 1
    %1954 = vsyncpa %s1953, 1
    %1955 = vsyncpa [#allocation5], 1
    %s1956 = scalar_lea.sflag [#allocation5], 1
    %1957 = vsyncpa %s1956, 1
    %1958 = vsyncpa [#allocation6], 1
    %s1959 = scalar_lea.sflag [#allocation6], 1
    %1960 = vsyncpa %s1959, 1

</llo_original>
